<compile_context>
chip_gen: v6e
topology: v6e:2x2x1
jax: 0.10.0
libtpu: 0.0.40
codegen_flags: <defaults>
</compile_context>

<pallas_src>
import functools
import math

import jax
import jax.numpy as jnp
from jax.experimental import pallas as pl
from jax.experimental.pallas import tpu as pltpu


# ----------------------------------------------------------------------------
# helpers
# ----------------------------------------------------------------------------
def _round_up(n: int, m: int) -> int:
    return ((n + m - 1) // m) * m


def _pad2(a, rows: int, cols: int):
    return jnp.pad(a, ((0, rows - a.shape[0]), (0, cols - a.shape[1])))


def _dft_cos_sin(n: int):
    """cos/sin DFT matrices with angles reduced mod 2*pi (f32-safe).

    (j*k) mod n is computed in integers before scaling by 2*pi/n, so the
    cos/sin argument magnitude never exceeds 2*pi (exact for n <= 46340).
    """
    idx = jnp.arange(n, dtype=jnp.int32)
    jk = (idx[:, None] * idx[None, :]) % n
    ang = (2.0 * math.pi / n) * jk.astype(jnp.float32)
    return jnp.cos(ang), jnp.sin(ang)


def _masked_layernorm(x, gamma, beta, mask, inv_d, eps=1e-5):
    """LayerNorm over the last (padded) dim, statistics over the true dim only.

    Padded lanes of `x` are guaranteed zero; `gamma`/`beta` are zero-padded, so
    the output is exactly zero on padded lanes.
    """
    mean = jnp.sum(x, axis=-1, keepdims=True) * inv_d
    diff = (x - mean) * mask
    var = jnp.sum(diff * diff, axis=-1, keepdims=True) * inv_d
    return diff * jax.lax.rsqrt(var + eps) * gamma + beta


# ----------------------------------------------------------------------------
# kernel
# ----------------------------------------------------------------------------
def _fvit_block_kernel(
    x_ref,       # (1, N_pad, D_pad)   f32   full (padded) sequence of one batch
    cds_ref,     # (D_pad, 2*D_pad)    bf16  [C_D | S_D]           (invariant)
    cns_ref,     # (N_pad, 2*N_pad)    bf16  [C_N | -S_N]          (invariant)
    g1_ref, b1_ref,   # (1, D_pad)     f32   norm1 weight / bias (zero-padded)
    g2_ref, b2_ref,   # (1, D_pad)     f32   norm2 weight / bias
    w1_ref,      # (D_pad, H_pad)      bf16  mlp fc1 weight (in, out)
    bf1_ref,     # (1, H_pad)          f32   mlp fc1 bias
    w2_ref,      # (H_pad, D_pad)      bf16  mlp fc2 weight (in, out)
    bf2_ref,     # (1, D_pad)          f32   mlp fc2 bias
    o_ref,       # (1, tn, D_pad)      f32   output row tile
    ycs_ref,     # (2*N_pad, D_pad)    bf16  scratch: rows [0:N_pad]=Y@C_D,
                 #                            rows [N_pad:2*N_pad]=Y@S_D
    *,
    d_valid: int,
):
    r = pl.program_id(1)
    tn = o_ref.shape[1]
    n_pad = x_ref.shape[1]
    d_pad = x_ref.shape[2]
    num_tiles = n_pad // tn

    # lane-validity mask over the padded embed dim (compile-time constant bound)
    lane = jax.lax.broadcasted_iota(jnp.int32, (1, d_pad), 1)
    dmask = (lane < d_valid).astype(jnp.float32)
    inv_d = 1.0 / d_valid

    # ---- stage 1 (once per batch element): fused dim-mixing DFT of LN1(x),
    #      tiled over row blocks to bound the live f32 set at (tn, 2*D_pad) ----
    def _stage1_tile(row0):
        xt = x_ref[0, pl.ds(row0, tn), :]                      # (tn, D_pad) f32
        y = _masked_layernorm(xt, g1_ref[...], b1_ref[...], dmask, inv_d)
        ycs = jnp.dot(y.astype(jnp.bfloat16), cds_ref[...],
                      preferred_element_type=jnp.float32)      # (tn, 2*D_pad)
        ycs = ycs.astype(jnp.bfloat16)
        ycs_ref[pl.ds(row0, tn), :] = ycs[:, :d_pad]           # Y @ C_D rows
        ycs_ref[pl.ds(row0 + n_pad, tn), :] = ycs[:, d_pad:]   # Y @ S_D rows

    @pl.when(r == 0)
    def _():
        if num_tiles == 1:
            _stage1_tile(0)
        else:
            def body(t, carry):
                _stage1_tile(pl.multiple_of(t * tn, tn))
                return carry
            jax.lax.fori_loop(0, num_tiles, body, 0)

    # ---- stage 2 (per seq-row tile): fused seq-mix + residual + LN2 + MLP ----
    row0 = pl.multiple_of(r * tn, tn)
    x_rows = x_ref[0, pl.ds(row0, tn), :]                      # (tn, D_pad) f32

    # Real(F_N Y F_D) = [C_N | -S_N] @ [[Y C_D], [Y S_D]]; one MXU dot,
    # contraction 2*N_pad, bf16 operands, f32 accumulation.
    attn = jnp.dot(cns_ref[pl.ds(row0, tn), :], ycs_ref[...],
                   preferred_element_type=jnp.float32)

    # residual 1 (ls1 / drop_path1 are Identity for init_values=None, drop_path=0)
    x1 = x_rows + attn

    # ---- norm2 + MLP (fc1 -> GELU(tanh, EUP) -> fc2) ----
    y2 = _masked_layernorm(x1, g2_ref[...], b2_ref[...], dmask, inv_d)
    h = jnp.dot(y2.astype(jnp.bfloat16), w1_ref[...],
                preferred_element_type=jnp.float32) + bf1_ref[...]
    h = jax.nn.gelu(h, approximate=True)
    m = jnp.dot(h.astype(jnp.bfloat16), w2_ref[...],
                preferred_element_type=jnp.float32) + bf2_ref[...]

    # residual 2
    o_ref[0] = x1 + m


# ----------------------------------------------------------------------------
# wrapper
# ----------------------------------------------------------------------------
def _tpu_vmem_capacity_bytes() -> int:
    """Physical VMEM per core, generation-aware; conservative fallback (v7x)."""
    try:
        info = pltpu.get_tpu_info()
        cap = int(getattr(info, "vmem_capacity_bytes", 0))
        if cap > 0:
            return cap
    except Exception:
        pass
    return 64 << 20


def _default_row_tile() -> int:
    """256-row tiles for 256x256-MXU chips (v6e/v7x), 128 otherwise."""
    try:
        kind = jax.devices()[0].device_kind.lower()
    except Exception:
        return 128
    if ("v6" in kind) or ("v7" in kind) or ("7x" in kind):
        return 256
    return 128


def _estimate_vmem_bytes(n_pad, d_pad, h_pad, tn,
                         single_buffer_invariants, single_buffer_x):
    bf, f4 = 2, 4
    inv = 1 if single_buffer_invariants else 2
    invariants = inv * (
        2 * d_pad * d_pad * bf            # [C_D | S_D]
        + 2 * n_pad * n_pad * bf          # [C_N | -S_N]
        + 2 * d_pad * h_pad * bf          # w1, w2
        + (5 * d_pad + h_pad) * f4        # g1,b1,g2,b2,bf2 + bf1
    )
    xbuf = (1 if single_buffer_x else 2) * n_pad * d_pad * f4
    streamed = xbuf + 2 * tn * d_pad * f4           # x block + output tile
    scratch = 2 * n_pad * d_pad * bf                # YCS
    live = (
        3 * tn * d_pad * f4 + 2 * tn * 2 * d_pad * f4   # stage-1 tile live
        + 4 * tn * d_pad * f4 + 2 * tn * h_pad * f4     # stage-2 tile live
    )
    return int(1.5 * (invariants + streamed + scratch + live)) + (4 << 20)


def make_fvit_block(params, N, D, *, tn=None,
                    single_buffer_invariants=True, single_buffer_x=False):
    """Precompute padded bf16 operands + fused DFT matrices; return jitted fwd."""
    H = params["w1"].shape[1]
    if tn is None:
        tn = _default_row_tile()
    tn = min(tn, _round_up(N, 128))
    n_pad = _round_up(N, tn)
    d_pad = _round_up(D, 128)
    h_pad = _round_up(H, 128)
    num_row_tiles = n_pad // tn

    # DFT matrices at TRUE sizes, then zero-padded (padded rows/cols contribute 0),
    # then fused:  [C_D | S_D] for dim-mix, [C_N | -S_N] for seq-mix.
    cos_n, sin_n = _dft_cos_sin(N)
    cos_d, sin_d = _dft_cos_sin(D)
    cns = jnp.concatenate(
        [_pad2(cos_n, n_pad, n_pad), -_pad2(sin_n, n_pad, n_pad)], axis=1
    ).astype(jnp.bfloat16)                                     # (N_pad, 2*N_pad)
    cds = jnp.concatenate(
        [_pad2(cos_d, d_pad, d_pad), _pad2(sin_d, d_pad, d_pad)], axis=1
    ).astype(jnp.bfloat16)                                     # (D_pad, 2*D_pad)

    # Matmul operands -> bf16; elementwise operands (norm params, biases) -> f32.
    w1 = _pad2(params["w1"].astype(jnp.float32), d_pad, h_pad).astype(jnp.bfloat16)
    w2 = _pad2(params["w2"].astype(jnp.float32), h_pad, d_pad).astype(jnp.bfloat16)
    g1 = _pad2(params["g1"].astype(jnp.float32), 1, d_pad)
    b1 = _pad2(params["b1"].astype(jnp.float32), 1, d_pad)
    g2 = _pad2(params["g2"].astype(jnp.float32), 1, d_pad)
    b2 = _pad2(params["b2"].astype(jnp.float32), 1, d_pad)
    bfc1 = _pad2(params["bf1"].astype(jnp.float32), 1, h_pad)
    bfc2 = _pad2(params["bf2"].astype(jnp.float32), 1, d_pad)

    def _inv_spec(shape):
        # grid-invariant operand: constant index_map; single-buffer if supported.
        index_map = lambda b, r: (0,) * len(shape)
        if single_buffer_invariants:
            return pl.BlockSpec(shape, index_map, pipeline_mode=pl.Buffered(1))
        return pl.BlockSpec(shape, index_map)

    x_index_map = lambda b, r: (b, 0, 0)
    if single_buffer_x and single_buffer_invariants:
        # v7x large-shape escape hatch: x only changes once per num_row_tiles steps.
        x_spec = pl.BlockSpec((1, n_pad, d_pad), x_index_map,
                              pipeline_mode=pl.Buffered(1))
    else:
        x_spec = pl.BlockSpec((1, n_pad, d_pad), x_index_map)

    in_specs = [
        x_spec,                                               # x (per batch)
        _inv_spec((d_pad, 2 * d_pad)),                        # [C_D | S_D]
        _inv_spec((n_pad, 2 * n_pad)),                        # [C_N | -S_N]
        _inv_spec((1, d_pad)), _inv_spec((1, d_pad)),         # g1, b1
        _inv_spec((1, d_pad)), _inv_spec((1, d_pad)),         # g2, b2
        _inv_spec((d_pad, h_pad)), _inv_spec((1, h_pad)),     # w1, bf1
        _inv_spec((h_pad, d_pad)), _inv_spec((1, d_pad)),     # w2, bf2
    ]
    out_spec = pl.BlockSpec((1, tn, d_pad), lambda b, r: (b, r, 0))

    kernel = functools.partial(_fvit_block_kernel, d_valid=D)

    vmem_cap = _tpu_vmem_capacity_bytes()
    vmem_est = _estimate_vmem_bytes(n_pad, d_pad, h_pad, tn,
                                    single_buffer_invariants, single_buffer_x)
    vmem_limit = int(min(max(vmem_est, 16 << 20), vmem_cap - vmem_cap // 8))

    weight_bytes = 2 * (cns.size + cds.size + w1.size + w2.size)
    small_bytes = 4 * (g1.size + b1.size + g2.size + b2.size
                       + bfc1.size + bfc2.size)

    def fwd(x):
        B = x.shape[0]
        x_p = jnp.pad(x.astype(jnp.float32),
                      ((0, 0), (0, n_pad - N), (0, d_pad - D)))

        # dim-mix + seq-mix + fc1/fc2, f32-accumulated bf16 MXU matmuls.
        flops = 4 * B * n_pad * d_pad * (d_pad + n_pad + h_pad)
        bytes_accessed = 2 * B * n_pad * d_pad * 4 + weight_bytes + small_bytes

        out = pl.pallas_call(
            kernel,
            out_shape=jax.ShapeDtypeStruct((B, n_pad, d_pad), jnp.float32),
            grid_spec=pltpu.PrefetchScalarGridSpec(
                num_scalar_prefetch=0,
                grid=(B, num_row_tiles),
                in_specs=in_specs,
                out_specs=out_spec,
                scratch_shapes=[
                    pltpu.VMEM((2 * n_pad, d_pad), jnp.bfloat16),   # [[YC],[YS]]
                ],
            ),
            compiler_params=pltpu.CompilerParams(
                # row-tile axis carries the r==0 scratch dependency -> arbitrary;
                # batch axis is independent -> parallel (pays off on v7x's 2 TCs).
                dimension_semantics=("parallel", "arbitrary"),
                vmem_limit_bytes=vmem_limit,
            ),
            cost_estimate=pl.CostEstimate(
                flops=flops,
                transcendentals=B * n_pad * h_pad,
                bytes_accessed=bytes_accessed,
            ),
        )(x_p, cds, cns, g1, b1, g2, b2, w1, bfc1, w2, bfc2)

        return out[:, :N, :D]

    return jax.jit(fwd)


# ----------------------------------------------------------------------------
# pure-JAX reference (matches the PyTorch module: FFT via jnp.fft, exact GELU)
# ----------------------------------------------------------------------------
def fvit_block_reference(x, params):
    def ln(y, g, b, eps=1e-5):
        mean = jnp.mean(y, axis=-1, keepdims=True)
        var = jnp.mean((y - mean) ** 2, axis=-1, keepdims=True)
        return (y - mean) * jax.lax.rsqrt(var + eps) * g + b

    y = ln(x, params["g1"], params["b1"])
    attn = jnp.real(jnp.fft.fft(jnp.fft.fft(y, axis=-1), axis=-2))
    x1 = x + attn
    y2 = ln(x1, params["g2"], params["b2"])
    h = jax.nn.gelu(y2 @ params["w1"] + params["bf1"], approximate=False)
    m = h @ params["w2"] + params["bf2"]
    return x1 + m


if __name__ == "__main__":
    # Small shapes implied by the module: tokens (B, N, D), hidden = 4 * D.
    B, N, D = 2, 8, 32
    H = int(D * 4.0)

    key = jax.random.PRNGKey(0)
    kx, kw1, kw2, kb1, kb2 = jax.random.split(key, 5)

    x = jax.random.normal(kx, (B, N, D), dtype=jnp.float32)

    # Deterministic parameter init (LayerNorm: ones/zeros; Linear: small normals).
    # Linear weights are stored (in_features, out_features).
    params = {
        "g1": jnp.ones((1, D), jnp.float32),
        "b1": jnp.zeros((1, D), jnp.float32),
        "g2": jnp.ones((1, D), jnp.float32),
        "b2": jnp.zeros((1, D), jnp.float32),
        "w1": 0.02 * jax.random.normal(kw1, (D, H), dtype=jnp.float32),
        "bf1": 0.01 * jax.random.normal(kb1, (1, H), dtype=jnp.float32),
        "w2": 0.02 * jax.random.normal(kw2, (H, D), dtype=jnp.float32),
        "bf2": 0.01 * jax.random.normal(kb2, (1, D), dtype=jnp.float32),
    }

    # Buffered(1) single-buffering is supported on current jax; if this build
    # rejects it at lowering time, fall back to double-buffered invariants.
    # The correctness assert below runs on whichever path executed, so a
    # genuine kernel bug is NOT masked by the fallback (same kernel body).
    try:
        fwd = make_fvit_block(params, N, D, single_buffer_invariants=True)
        out = jax.block_until_ready(fwd(x))
    except Exception:
        fwd = make_fvit_block(params, N, D, single_buffer_invariants=False)
        out = jax.block_until_ready(fwd(x))

    ref = fvit_block_reference(x, params)
    assert out.shape == (B, N, D)

    # bf16 MXU operands + tanh GELU => compare at bf16-level tolerance,
    # relative to the overall output scale.
    scale = max(float(jnp.max(jnp.abs(ref))), 1.0)
    max_err = float(jnp.max(jnp.abs(out - ref)))
    assert max_err <= 5e-2 * scale, f"mismatch vs reference: {max_err} (scale {scale})"

    print("KERNEL_OK")
</pallas_src>

<mosaic_0001>
module attributes {stable_mosaic.version = 11 : i64} {
  func.func @_fvit_block_kernel(%arg0: i32, %arg1: i32, %arg2: memref<1x128x128xf32, #tpu.memory_space<vmem>>, %arg3: memref<128x256xbf16, #tpu.memory_space<vmem>>, %arg4: memref<128x256xbf16, #tpu.memory_space<vmem>>, %arg5: memref<1x128xf32, #tpu.memory_space<vmem>>, %arg6: memref<1x128xf32, #tpu.memory_space<vmem>>, %arg7: memref<1x128xf32, #tpu.memory_space<vmem>>, %arg8: memref<1x128xf32, #tpu.memory_space<vmem>>, %arg9: memref<128x128xbf16, #tpu.memory_space<vmem>>, %arg10: memref<1x128xf32, #tpu.memory_space<vmem>>, %arg11: memref<128x128xbf16, #tpu.memory_space<vmem>>, %arg12: memref<1x128xf32, #tpu.memory_space<vmem>>, %arg13: memref<1x128x128xf32, #tpu.memory_space<vmem>>, %arg14: memref<256x128xbf16, #tpu.memory_space<vmem>>) attributes {dimension_semantics = [#tpu.dimension_semantics<parallel>, #tpu.dimension_semantics<arbitrary>], iteration_bounds = array<i64: 2, 1>, scalar_prefetch = 0 : i64, scratch_operands = 1 : i64, tpu.core_type = #tpu.core_type<tc>, window_params = [{transform_indices = @transform_0, window_bounds = array<i64: 1, 128, 128>}, {pipeline_mode = #tpu.pipeline_mode<synchronous>, transform_indices = @transform_1, window_bounds = array<i64: 128, 256>}, {pipeline_mode = #tpu.pipeline_mode<synchronous>, transform_indices = @transform_2, window_bounds = array<i64: 128, 256>}, {pipeline_mode = #tpu.pipeline_mode<synchronous>, transform_indices = @transform_3, window_bounds = array<i64: 1, 128>}, {pipeline_mode = #tpu.pipeline_mode<synchronous>, transform_indices = @transform_4, window_bounds = array<i64: 1, 128>}, {pipeline_mode = #tpu.pipeline_mode<synchronous>, transform_indices = @transform_5, window_bounds = array<i64: 1, 128>}, {pipeline_mode = #tpu.pipeline_mode<synchronous>, transform_indices = @transform_6, window_bounds = array<i64: 1, 128>}, {pipeline_mode = #tpu.pipeline_mode<synchronous>, transform_indices = @transform_7, window_bounds = array<i64: 128, 128>}, {pipeline_mode = #tpu.pipeline_mode<synchronous>, transform_indices = @transform_8, window_bounds = array<i64: 1, 128>}, {pipeline_mode = #tpu.pipeline_mode<synchronous>, transform_indices = @transform_9, window_bounds = array<i64: 128, 128>}, {pipeline_mode = #tpu.pipeline_mode<synchronous>, transform_indices = @transform_10, window_bounds = array<i64: 1, 128>}, {transform_indices = @transform_11, window_bounds = array<i64: 1, 128, 128>}]} {
    %0 = tpu.iota {dimensions = array<i32: 1>} : vector<1x128xi32>
    %c32_i32 = arith.constant 32 : i32
    %1 = vector.broadcast %c32_i32 : i32 to vector<1x128xi32>
    %2 = arith.cmpi slt, %0, %1 : vector<1x128xi32>
    %3 = arith.extui %2 : vector<1x128xi1> to vector<1x128xi32>
    %4 = arith.sitofp %3 : vector<1x128xi32> to vector<1x128xf32>
    %c0_i32 = arith.constant 0 : i32
    %5 = arith.cmpi eq, %arg1, %c0_i32 : i32
    %6 = arith.extui %5 : i1 to i32
    %c0_i32_0 = arith.constant 0 : i32
    %7 = arith.cmpi ne, %6, %c0_i32_0 : i32
    scf.if %7 {
      %c0_31 = arith.constant 0 : index
      %c0_32 = arith.constant 0 : index
      %c0_33 = arith.constant 0 : index
      %71 = vector.load %arg2[%c0_31, %c0_32, %c0_33] : memref<1x128x128xf32, #tpu.memory_space<vmem>>, vector<1x128x128xf32>
      %72 = vector.shape_cast %71 : vector<1x128x128xf32> to vector<128x128xf32>
      %c0_34 = arith.constant 0 : index
      %c0_35 = arith.constant 0 : index
      %73 = vector.load %arg5[%c0_34, %c0_35] : memref<1x128xf32, #tpu.memory_space<vmem>>, vector<1x128xf32>
      %c0_36 = arith.constant 0 : index
      %c0_37 = arith.constant 0 : index
      %74 = vector.load %arg6[%c0_36, %c0_37] : memref<1x128xf32, #tpu.memory_space<vmem>>, vector<1x128xf32>
      %cst_38 = arith.constant dense<0.000000e+00> : vector<128xf32>
      %75 = vector.multi_reduction <add>, %72, %cst_38 [1] : vector<128x128xf32> to vector<128xf32>
      %76 = vector.shape_cast %75 : vector<128xf32> to vector<128x1xf32>
      %cst_39 = arith.constant 3.125000e-02 : f32
      %77 = vector.broadcast %cst_39 : f32 to vector<128x1xf32>
      %78 = arith.mulf %76, %77 : vector<128x1xf32>
      %79 = vector.broadcast %78 : vector<128x1xf32> to vector<128x128xf32>
      %80 = arith.subf %72, %79 : vector<128x128xf32>
      %81 = vector.broadcast %4 : vector<1x128xf32> to vector<128x128xf32>
      %82 = arith.mulf %80, %81 : vector<128x128xf32>
      %83 = arith.mulf %82, %82 : vector<128x128xf32>
      %cst_40 = arith.constant dense<0.000000e+00> : vector<128xf32>
      %84 = vector.multi_reduction <add>, %83, %cst_40 [1] : vector<128x128xf32> to vector<128xf32>
      %85 = vector.shape_cast %84 : vector<128xf32> to vector<128x1xf32>
      %cst_41 = arith.constant 3.125000e-02 : f32
      %86 = vector.broadcast %cst_41 : f32 to vector<128x1xf32>
      %87 = arith.mulf %85, %86 : vector<128x1xf32>
      %cst_42 = arith.constant 9.99999974E-6 : f32
      %88 = vector.broadcast %cst_42 : f32 to vector<128x1xf32>
      %89 = arith.addf %87, %88 : vector<128x1xf32>
      %90 = math.rsqrt %89 : vector<128x1xf32>
      %91 = vector.broadcast %90 : vector<128x1xf32> to vector<128x128xf32>
      %92 = arith.mulf %82, %91 : vector<128x128xf32>
      %93 = vector.broadcast %73 : vector<1x128xf32> to vector<128x128xf32>
      %94 = arith.mulf %92, %93 : vector<128x128xf32>
      %95 = vector.broadcast %74 : vector<1x128xf32> to vector<128x128xf32>
      %96 = arith.addf %94, %95 : vector<128x128xf32>
      %97 = arith.truncf %96 : vector<128x128xf32> to vector<128x128xbf16>
      %c0_43 = arith.constant 0 : index
      %c0_44 = arith.constant 0 : index
      %98 = vector.load %arg3[%c0_43, %c0_44] : memref<128x256xbf16, #tpu.memory_space<vmem>>, vector<128x256xbf16>
      %cst_45 = arith.constant dense<0.000000e+00> : vector<128x256xf32>
      %99 = tpu.matmul %97, %98, %cst_45 {dimension_numbers = #tpu.dot_dimension_numbers<[1], [0], [0], [1], [0, 0, 1, 1], [], []>} : vector<128x128xbf16>, vector<128x256xbf16>, vector<128x256xf32> -> vector<128x256xf32>
      %100 = arith.truncf %99 : vector<128x256xf32> to vector<128x256xbf16>
      %101 = vector.extract_strided_slice %100 {offsets = [0, 0], sizes = [128, 128], strides = [1, 1]} : vector<128x256xbf16> to vector<128x128xbf16>
      %c0_46 = arith.constant 0 : index
      %c0_47 = arith.constant 0 : index
      %102 = vector.load %arg14[%c0_46, %c0_47] : memref<256x128xbf16, #tpu.memory_space<vmem>>, vector<128x128xbf16>
      tpu.vector_store %arg14[%c0_46, %c0_47], %101 {strides = array<i32>} : memref<256x128xbf16, #tpu.memory_space<vmem>>, vector<128x128xbf16>,
      %103 = vector.extract_strided_slice %100 {offsets = [0, 128], sizes = [128, 128], strides = [1, 1]} : vector<128x256xbf16> to vector<128x128xbf16>
      %c128 = arith.constant 128 : index
      %c0_48 = arith.constant 0 : index
      %104 = vector.load %arg14[%c128, %c0_48] : memref<256x128xbf16, #tpu.memory_space<vmem>>, vector<128x128xbf16>
      tpu.vector_store %arg14[%c128, %c0_48], %103 {strides = array<i32>} : memref<256x128xbf16, #tpu.memory_space<vmem>>, vector<128x128xbf16>,
    } else {
    }
    %c128_i32 = arith.constant 128 : i32
    %8 = arith.muli %arg1, %c128_i32 : i32
    %9 = tpu.assume_multiple %8, 128 : i32
    %c0 = arith.constant 0 : index
    %10 = arith.index_cast %9 : i32 to index
    %c0_1 = arith.constant 0 : index
    %11 = vector.load %arg2[%c0, %10, %c0_1] : memref<1x128x128xf32, #tpu.memory_space<vmem>>, vector<1x128x128xf32>
    %12 = vector.shape_cast %11 : vector<1x128x128xf32> to vector<128x128xf32>
    %13 = arith.index_cast %9 : i32 to index
    %c0_2 = arith.constant 0 : index
    %14 = vector.load %arg4[%13, %c0_2] : memref<128x256xbf16, #tpu.memory_space<vmem>>, vector<128x256xbf16>
    %c0_3 = arith.constant 0 : index
    %c0_4 = arith.constant 0 : index
    %15 = vector.load %arg14[%c0_3, %c0_4] : memref<256x128xbf16, #tpu.memory_space<vmem>>, vector<256x128xbf16>
    %cst = arith.constant dense<0.000000e+00> : vector<128x128xf32>
    %16 = tpu.matmul %14, %15, %cst {dimension_numbers = #tpu.dot_dimension_numbers<[1], [0], [0], [1], [0, 0, 1, 1], [], []>} : vector<128x256xbf16>, vector<256x128xbf16>, vector<128x128xf32> -> vector<128x128xf32>
    %17 = arith.addf %12, %16 : vector<128x128xf32>
    %c0_5 = arith.constant 0 : index
    %c0_6 = arith.constant 0 : index
    %18 = vector.load %arg7[%c0_5, %c0_6] : memref<1x128xf32, #tpu.memory_space<vmem>>, vector<1x128xf32>
    %c0_7 = arith.constant 0 : index
    %c0_8 = arith.constant 0 : index
    %19 = vector.load %arg8[%c0_7, %c0_8] : memref<1x128xf32, #tpu.memory_space<vmem>>, vector<1x128xf32>
    %cst_9 = arith.constant dense<0.000000e+00> : vector<128xf32>
    %20 = vector.multi_reduction <add>, %17, %cst_9 [1] : vector<128x128xf32> to vector<128xf32>
    %21 = vector.shape_cast %20 : vector<128xf32> to vector<128x1xf32>
    %cst_10 = arith.constant 3.125000e-02 : f32
    %22 = vector.broadcast %cst_10 : f32 to vector<128x1xf32>
    %23 = arith.mulf %21, %22 : vector<128x1xf32>
    %24 = vector.broadcast %23 : vector<128x1xf32> to vector<128x128xf32>
    %25 = arith.subf %17, %24 : vector<128x128xf32>
    %26 = vector.broadcast %4 : vector<1x128xf32> to vector<128x128xf32>
    %27 = arith.mulf %25, %26 : vector<128x128xf32>
    %28 = arith.mulf %27, %27 : vector<128x128xf32>
    %cst_11 = arith.constant dense<0.000000e+00> : vector<128xf32>
    %29 = vector.multi_reduction <add>, %28, %cst_11 [1] : vector<128x128xf32> to vector<128xf32>
    %30 = vector.shape_cast %29 : vector<128xf32> to vector<128x1xf32>
    %cst_12 = arith.constant 3.125000e-02 : f32
    %31 = vector.broadcast %cst_12 : f32 to vector<128x1xf32>
    %32 = arith.mulf %30, %31 : vector<128x1xf32>
    %cst_13 = arith.constant 9.99999974E-6 : f32
    %33 = vector.broadcast %cst_13 : f32 to vector<128x1xf32>
    %34 = arith.addf %32, %33 : vector<128x1xf32>
    %35 = math.rsqrt %34 : vector<128x1xf32>
    %36 = vector.broadcast %35 : vector<128x1xf32> to vector<128x128xf32>
    %37 = arith.mulf %27, %36 : vector<128x128xf32>
    %38 = vector.broadcast %18 : vector<1x128xf32> to vector<128x128xf32>
    %39 = arith.mulf %37, %38 : vector<128x128xf32>
    %40 = vector.broadcast %19 : vector<1x128xf32> to vector<128x128xf32>
    %41 = arith.addf %39, %40 : vector<128x128xf32>
    %42 = arith.truncf %41 : vector<128x128xf32> to vector<128x128xbf16>
    %c0_14 = arith.constant 0 : index
    %c0_15 = arith.constant 0 : index
    %43 = vector.load %arg9[%c0_14, %c0_15] : memref<128x128xbf16, #tpu.memory_space<vmem>>, vector<128x128xbf16>
    %cst_16 = arith.constant dense<0.000000e+00> : vector<128x128xf32>
    %44 = tpu.matmul %42, %43, %cst_16 {dimension_numbers = #tpu.dot_dimension_numbers<[1], [0], [0], [1], [0, 0, 1, 1], [], []>} : vector<128x128xbf16>, vector<128x128xbf16>, vector<128x128xf32> -> vector<128x128xf32>
    %c0_17 = arith.constant 0 : index
    %c0_18 = arith.constant 0 : index
    %45 = vector.load %arg10[%c0_17, %c0_18] : memref<1x128xf32, #tpu.memory_space<vmem>>, vector<1x128xf32>
    %46 = vector.broadcast %45 : vector<1x128xf32> to vector<128x128xf32>
    %47 = arith.addf %44, %46 : vector<128x128xf32>
    %48 = arith.mulf %47, %47 : vector<128x128xf32>
    %49 = arith.mulf %47, %48 : vector<128x128xf32>
    %cst_19 = arith.constant 4.471500e-02 : f32
    %50 = vector.broadcast %cst_19 : f32 to vector<128x128xf32>
    %51 = arith.mulf %50, %49 : vector<128x128xf32>
    %52 = arith.addf %47, %51 : vector<128x128xf32>
    %cst_20 = arith.constant 0.797884583 : f32
    %53 = vector.broadcast %cst_20 : f32 to vector<128x128xf32>
    %54 = arith.mulf %53, %52 : vector<128x128xf32>
    %55 = math.tanh %54 : vector<128x128xf32>
    %cst_21 = arith.constant 1.000000e+00 : f32
    %56 = vector.broadcast %cst_21 : f32 to vector<128x128xf32>
    %57 = arith.addf %56, %55 : vector<128x128xf32>
    %cst_22 = arith.constant 5.000000e-01 : f32
    %58 = vector.broadcast %cst_22 : f32 to vector<128x128xf32>
    %59 = arith.mulf %58, %57 : vector<128x128xf32>
    %60 = arith.mulf %47, %59 : vector<128x128xf32>
    %61 = arith.truncf %60 : vector<128x128xf32> to vector<128x128xbf16>
    %c0_23 = arith.constant 0 : index
    %c0_24 = arith.constant 0 : index
    %62 = vector.load %arg11[%c0_23, %c0_24] : memref<128x128xbf16, #tpu.memory_space<vmem>>, vector<128x128xbf16>
    %cst_25 = arith.constant dense<0.000000e+00> : vector<128x128xf32>
    %63 = tpu.matmul %61, %62, %cst_25 {dimension_numbers = #tpu.dot_dimension_numbers<[1], [0], [0], [1], [0, 0, 1, 1], [], []>} : vector<128x128xbf16>, vector<128x128xbf16>, vector<128x128xf32> -> vector<128x128xf32>
    %c0_26 = arith.constant 0 : index
    %c0_27 = arith.constant 0 : index
    %64 = vector.load %arg12[%c0_26, %c0_27] : memref<1x128xf32, #tpu.memory_space<vmem>>, vector<1x128xf32>
    %65 = vector.broadcast %64 : vector<1x128xf32> to vector<128x128xf32>
    %66 = arith.addf %63, %65 : vector<128x128xf32>
    %67 = arith.addf %17, %66 : vector<128x128xf32>
    %c0_28 = arith.constant 0 : index
    %c0_29 = arith.constant 0 : index
    %c0_30 = arith.constant 0 : index
    %68 = vector.load %arg13[%c0_28, %c0_29, %c0_30] : memref<1x128x128xf32, #tpu.memory_space<vmem>>, vector<1x128x128xf32>
    %69 = vector.shape_cast %68 : vector<1x128x128xf32> to vector<128x128xf32>
    %70 = vector.shape_cast %67 : vector<128x128xf32> to vector<1x128x128xf32>
    tpu.vector_store %arg13[%c0_28, %c0_29, %c0_30], %70 {strides = array<i32>} : memref<1x128x128xf32, #tpu.memory_space<vmem>>, vector<1x128x128xf32>,
    return
  }
  func.func @transform_0(%arg0: i32, %arg1: i32) -> (i32, i32, i32) {
    %c0_i32 = arith.constant 0 : i32
    %c0_i32_0 = arith.constant 0 : i32
    %c0_i32_1 = arith.constant 0 : i32
    return %arg0, %c0_i32, %c0_i32_0 : i32, i32, i32
  }
  func.func @transform_1(%arg0: i32, %arg1: i32) -> (i32, i32) {
    %c0_i32 = arith.constant 0 : i32
    %c0_i32_0 = arith.constant 0 : i32
    %c0_i32_1 = arith.constant 0 : i32
    return %c0_i32, %c0_i32_0 : i32, i32
  }
  func.func @transform_2(%arg0: i32, %arg1: i32) -> (i32, i32) {
    %c0_i32 = arith.constant 0 : i32
    %c0_i32_0 = arith.constant 0 : i32
    %c0_i32_1 = arith.constant 0 : i32
    return %c0_i32, %c0_i32_0 : i32, i32
  }
  func.func @transform_3(%arg0: i32, %arg1: i32) -> (i32, i32) {
    %c0_i32 = arith.constant 0 : i32
    %c0_i32_0 = arith.constant 0 : i32
    %c0_i32_1 = arith.constant 0 : i32
    return %c0_i32, %c0_i32_0 : i32, i32
  }
  func.func @transform_4(%arg0: i32, %arg1: i32) -> (i32, i32) {
    %c0_i32 = arith.constant 0 : i32
    %c0_i32_0 = arith.constant 0 : i32
    %c0_i32_1 = arith.constant 0 : i32
    return %c0_i32, %c0_i32_0 : i32, i32
  }
  func.func @transform_5(%arg0: i32, %arg1: i32) -> (i32, i32) {
    %c0_i32 = arith.constant 0 : i32
    %c0_i32_0 = arith.constant 0 : i32
    %c0_i32_1 = arith.constant 0 : i32
    return %c0_i32, %c0_i32_0 : i32, i32
  }
  func.func @transform_6(%arg0: i32, %arg1: i32) -> (i32, i32) {
    %c0_i32 = arith.constant 0 : i32
    %c0_i32_0 = arith.constant 0 : i32
    %c0_i32_1 = arith.constant 0 : i32
    return %c0_i32, %c0_i32_0 : i32, i32
  }
  func.func @transform_7(%arg0: i32, %arg1: i32) -> (i32, i32) {
    %c0_i32 = arith.constant 0 : i32
    %c0_i32_0 = arith.constant 0 : i32
    %c0_i32_1 = arith.constant 0 : i32
    return %c0_i32, %c0_i32_0 : i32, i32
  }
  func.func @transform_8(%arg0: i32, %arg1: i32) -> (i32, i32) {
    %c0_i32 = arith.constant 0 : i32
    %c0_i32_0 = arith.constant 0 : i32
    %c0_i32_1 = arith.constant 0 : i32
    return %c0_i32, %c0_i32_0 : i32, i32
  }
  func.func @transform_9(%arg0: i32, %arg1: i32) -> (i32, i32) {
    %c0_i32 = arith.constant 0 : i32
    %c0_i32_0 = arith.constant 0 : i32
    %c0_i32_1 = arith.constant 0 : i32
    return %c0_i32, %c0_i32_0 : i32, i32
  }
  func.func @transform_10(%arg0: i32, %arg1: i32) -> (i32, i32) {
    %c0_i32 = arith.constant 0 : i32
    %c0_i32_0 = arith.constant 0 : i32
    %c0_i32_1 = arith.constant 0 : i32
    return %c0_i32, %c0_i32_0 : i32, i32
  }
  func.func @transform_11(%arg0: i32, %arg1: i32) -> (i32, i32, i32) {
    %c0_i32 = arith.constant 0 : i32
    %c0_i32_0 = arith.constant 0 : i32
    return %arg0, %arg1, %c0_i32 : i32, i32, i32
  }
}

module attributes {stable_mosaic.version = 11 : i64} {
  func.func @_fvit_block_kernel(%arg0: i32, %arg1: i32, %arg2: memref<1x128x128xf32, #tpu.memory_space<vmem>>, %arg3: memref<128x256xbf16, #tpu.memory_space<vmem>>, %arg4: memref<128x256xbf16, #tpu.memory_space<vmem>>, %arg5: memref<1x128xf32, #tpu.memory_space<vmem>>, %arg6: memref<1x128xf32, #tpu.memory_space<vmem>>, %arg7: memref<1x128xf32, #tpu.memory_space<vmem>>, %arg8: memref<1x128xf32, #tpu.memory_space<vmem>>, %arg9: memref<128x128xbf16, #tpu.memory_space<vmem>>, %arg10: memref<1x128xf32, #tpu.memory_space<vmem>>, %arg11: memref<128x128xbf16, #tpu.memory_space<vmem>>, %arg12: memref<1x128xf32, #tpu.memory_space<vmem>>, %arg13: memref<1x128x128xf32, #tpu.memory_space<vmem>>, %arg14: memref<256x128xbf16, #tpu.memory_space<vmem>>) attributes {dimension_semantics = [#tpu.dimension_semantics<parallel>, #tpu.dimension_semantics<arbitrary>], iteration_bounds = array<i64: 2, 1>, scalar_prefetch = 0 : i64, scratch_operands = 1 : i64, tpu.core_type = #tpu.core_type<tc>, window_params = [{transform_indices = @transform_0, window_bounds = array<i64: 1, 128, 128>}, {pipeline_mode = #tpu.pipeline_mode<synchronous>, transform_indices = @transform_1, window_bounds = array<i64: 128, 256>}, {pipeline_mode = #tpu.pipeline_mode<synchronous>, transform_indices = @transform_2, window_bounds = array<i64: 128, 256>}, {pipeline_mode = #tpu.pipeline_mode<synchronous>, transform_indices = @transform_3, window_bounds = array<i64: 1, 128>}, {pipeline_mode = #tpu.pipeline_mode<synchronous>, transform_indices = @transform_4, window_bounds = array<i64: 1, 128>}, {pipeline_mode = #tpu.pipeline_mode<synchronous>, transform_indices = @transform_5, window_bounds = array<i64: 1, 128>}, {pipeline_mode = #tpu.pipeline_mode<synchronous>, transform_indices = @transform_6, window_bounds = array<i64: 1, 128>}, {pipeline_mode = #tpu.pipeline_mode<synchronous>, transform_indices = @transform_7, window_bounds = array<i64: 128, 128>}, {pipeline_mode = #tpu.pipeline_mode<synchronous>, transform_indices = @transform_8, window_bounds = array<i64: 1, 128>}, {pipeline_mode = #tpu.pipeline_mode<synchronous>, transform_indices = @transform_9, window_bounds = array<i64: 128, 128>}, {pipeline_mode = #tpu.pipeline_mode<synchronous>, transform_indices = @transform_10, window_bounds = array<i64: 1, 128>}, {transform_indices = @transform_11, window_bounds = array<i64: 1, 128, 128>}]} {
    %0 = tpu.iota {dimensions = array<i32: 1>} : vector<1x128xi32>
    %c32_i32 = arith.constant 32 : i32
    %1 = vector.broadcast %c32_i32 : i32 to vector<1x128xi32>
    %2 = arith.cmpi slt, %0, %1 : vector<1x128xi32>
    %3 = arith.extui %2 : vector<1x128xi1> to vector<1x128xi32>
    %4 = arith.sitofp %3 : vector<1x128xi32> to vector<1x128xf32>
    %c0_i32 = arith.constant 0 : i32
    %5 = arith.cmpi eq, %arg1, %c0_i32 : i32
    %6 = arith.extui %5 : i1 to i32
    %c0_i32_0 = arith.constant 0 : i32
    %7 = arith.cmpi ne, %6, %c0_i32_0 : i32
    scf.if %7 {
      %c0_31 = arith.constant 0 : index
      %c0_32 = arith.constant 0 : index
      %c0_33 = arith.constant 0 : index
      %71 = vector.load %arg2[%c0_31, %c0_32, %c0_33] : memref<1x128x128xf32, #tpu.memory_space<vmem>>, vector<1x128x128xf32>
      %72 = vector.shape_cast %71 : vector<1x128x128xf32> to vector<128x128xf32>
      %c0_34 = arith.constant 0 : index
      %c0_35 = arith.constant 0 : index
      %73 = vector.load %arg5[%c0_34, %c0_35] : memref<1x128xf32, #tpu.memory_space<vmem>>, vector<1x128xf32>
      %c0_36 = arith.constant 0 : index
      %c0_37 = arith.constant 0 : index
      %74 = vector.load %arg6[%c0_36, %c0_37] : memref<1x128xf32, #tpu.memory_space<vmem>>, vector<1x128xf32>
      %cst_38 = arith.constant dense<0.000000e+00> : vector<128xf32>
      %75 = vector.multi_reduction <add>, %72, %cst_38 [1] : vector<128x128xf32> to vector<128xf32>
      %76 = vector.shape_cast %75 : vector<128xf32> to vector<128x1xf32>
      %cst_39 = arith.constant 3.125000e-02 : f32
      %77 = vector.broadcast %cst_39 : f32 to vector<128x1xf32>
      %78 = arith.mulf %76, %77 : vector<128x1xf32>
      %79 = vector.broadcast %78 : vector<128x1xf32> to vector<128x128xf32>
      %80 = arith.subf %72, %79 : vector<128x128xf32>
      %81 = vector.broadcast %4 : vector<1x128xf32> to vector<128x128xf32>
      %82 = arith.mulf %80, %81 : vector<128x128xf32>
      %83 = arith.mulf %82, %82 : vector<128x128xf32>
      %cst_40 = arith.constant dense<0.000000e+00> : vector<128xf32>
      %84 = vector.multi_reduction <add>, %83, %cst_40 [1] : vector<128x128xf32> to vector<128xf32>
      %85 = vector.shape_cast %84 : vector<128xf32> to vector<128x1xf32>
      %cst_41 = arith.constant 3.125000e-02 : f32
      %86 = vector.broadcast %cst_41 : f32 to vector<128x1xf32>
      %87 = arith.mulf %85, %86 : vector<128x1xf32>
      %cst_42 = arith.constant 9.99999974E-6 : f32
      %88 = vector.broadcast %cst_42 : f32 to vector<128x1xf32>
      %89 = arith.addf %87, %88 : vector<128x1xf32>
      %90 = math.rsqrt %89 : vector<128x1xf32>
      %91 = vector.broadcast %90 : vector<128x1xf32> to vector<128x128xf32>
      %92 = arith.mulf %82, %91 : vector<128x128xf32>
      %93 = vector.broadcast %73 : vector<1x128xf32> to vector<128x128xf32>
      %94 = arith.mulf %92, %93 : vector<128x128xf32>
      %95 = vector.broadcast %74 : vector<1x128xf32> to vector<128x128xf32>
      %96 = arith.addf %94, %95 : vector<128x128xf32>
      %97 = arith.truncf %96 : vector<128x128xf32> to vector<128x128xbf16>
      %c0_43 = arith.constant 0 : index
      %c0_44 = arith.constant 0 : index
      %98 = vector.load %arg3[%c0_43, %c0_44] : memref<128x256xbf16, #tpu.memory_space<vmem>>, vector<128x256xbf16>
      %cst_45 = arith.constant dense<0.000000e+00> : vector<128x256xf32>
      %99 = tpu.matmul %97, %98, %cst_45 {dimension_numbers = #tpu.dot_dimension_numbers<[1], [0], [0], [1], [0, 0, 1, 1], [], []>} : vector<128x128xbf16>, vector<128x256xbf16>, vector<128x256xf32> -> vector<128x256xf32>
      %100 = arith.truncf %99 : vector<128x256xf32> to vector<128x256xbf16>
      %101 = vector.extract_strided_slice %100 {offsets = [0, 0], sizes = [128, 128], strides = [1, 1]} : vector<128x256xbf16> to vector<128x128xbf16>
      %c0_46 = arith.constant 0 : index
      %c0_47 = arith.constant 0 : index
      %102 = vector.load %arg14[%c0_46, %c0_47] : memref<256x128xbf16, #tpu.memory_space<vmem>>, vector<128x128xbf16>
      tpu.vector_store %arg14[%c0_46, %c0_47], %101 {strides = array<i32>} : memref<256x128xbf16, #tpu.memory_space<vmem>>, vector<128x128xbf16>,
      %103 = vector.extract_strided_slice %100 {offsets = [0, 128], sizes = [128, 128], strides = [1, 1]} : vector<128x256xbf16> to vector<128x128xbf16>
      %c128 = arith.constant 128 : index
      %c0_48 = arith.constant 0 : index
      %104 = vector.load %arg14[%c128, %c0_48] : memref<256x128xbf16, #tpu.memory_space<vmem>>, vector<128x128xbf16>
      tpu.vector_store %arg14[%c128, %c0_48], %103 {strides = array<i32>} : memref<256x128xbf16, #tpu.memory_space<vmem>>, vector<128x128xbf16>,
    } else {
    }
    %c128_i32 = arith.constant 128 : i32
    %8 = arith.muli %arg1, %c128_i32 : i32
    %9 = tpu.assume_multiple %8, 128 : i32
    %c0 = arith.constant 0 : index
    %10 = arith.index_cast %9 : i32 to index
    %c0_1 = arith.constant 0 : index
    %11 = vector.load %arg2[%c0, %10, %c0_1] : memref<1x128x128xf32, #tpu.memory_space<vmem>>, vector<1x128x128xf32>
    %12 = vector.shape_cast %11 : vector<1x128x128xf32> to vector<128x128xf32>
    %13 = arith.index_cast %9 : i32 to index
    %c0_2 = arith.constant 0 : index
    %14 = vector.load %arg4[%13, %c0_2] : memref<128x256xbf16, #tpu.memory_space<vmem>>, vector<128x256xbf16>
    %c0_3 = arith.constant 0 : index
    %c0_4 = arith.constant 0 : index
    %15 = vector.load %arg14[%c0_3, %c0_4] : memref<256x128xbf16, #tpu.memory_space<vmem>>, vector<256x128xbf16>
    %cst = arith.constant dense<0.000000e+00> : vector<128x128xf32>
    %16 = tpu.matmul %14, %15, %cst {dimension_numbers = #tpu.dot_dimension_numbers<[1], [0], [0], [1], [0, 0, 1, 1], [], []>} : vector<128x256xbf16>, vector<256x128xbf16>, vector<128x128xf32> -> vector<128x128xf32>
    %17 = arith.addf %12, %16 : vector<128x128xf32>
    %c0_5 = arith.constant 0 : index
    %c0_6 = arith.constant 0 : index
    %18 = vector.load %arg7[%c0_5, %c0_6] : memref<1x128xf32, #tpu.memory_space<vmem>>, vector<1x128xf32>
    %c0_7 = arith.constant 0 : index
    %c0_8 = arith.constant 0 : index
    %19 = vector.load %arg8[%c0_7, %c0_8] : memref<1x128xf32, #tpu.memory_space<vmem>>, vector<1x128xf32>
    %cst_9 = arith.constant dense<0.000000e+00> : vector<128xf32>
    %20 = vector.multi_reduction <add>, %17, %cst_9 [1] : vector<128x128xf32> to vector<128xf32>
    %21 = vector.shape_cast %20 : vector<128xf32> to vector<128x1xf32>
    %cst_10 = arith.constant 3.125000e-02 : f32
    %22 = vector.broadcast %cst_10 : f32 to vector<128x1xf32>
    %23 = arith.mulf %21, %22 : vector<128x1xf32>
    %24 = vector.broadcast %23 : vector<128x1xf32> to vector<128x128xf32>
    %25 = arith.subf %17, %24 : vector<128x128xf32>
    %26 = vector.broadcast %4 : vector<1x128xf32> to vector<128x128xf32>
    %27 = arith.mulf %25, %26 : vector<128x128xf32>
    %28 = arith.mulf %27, %27 : vector<128x128xf32>
    %cst_11 = arith.constant dense<0.000000e+00> : vector<128xf32>
    %29 = vector.multi_reduction <add>, %28, %cst_11 [1] : vector<128x128xf32> to vector<128xf32>
    %30 = vector.shape_cast %29 : vector<128xf32> to vector<128x1xf32>
    %cst_12 = arith.constant 3.125000e-02 : f32
    %31 = vector.broadcast %cst_12 : f32 to vector<128x1xf32>
    %32 = arith.mulf %30, %31 : vector<128x1xf32>
    %cst_13 = arith.constant 9.99999974E-6 : f32
    %33 = vector.broadcast %cst_13 : f32 to vector<128x1xf32>
    %34 = arith.addf %32, %33 : vector<128x1xf32>
    %35 = math.rsqrt %34 : vector<128x1xf32>
    %36 = vector.broadcast %35 : vector<128x1xf32> to vector<128x128xf32>
    %37 = arith.mulf %27, %36 : vector<128x128xf32>
    %38 = vector.broadcast %18 : vector<1x128xf32> to vector<128x128xf32>
    %39 = arith.mulf %37, %38 : vector<128x128xf32>
    %40 = vector.broadcast %19 : vector<1x128xf32> to vector<128x128xf32>
    %41 = arith.addf %39, %40 : vector<128x128xf32>
    %42 = arith.truncf %41 : vector<128x128xf32> to vector<128x128xbf16>
    %c0_14 = arith.constant 0 : index
    %c0_15 = arith.constant 0 : index
    %43 = vector.load %arg9[%c0_14, %c0_15] : memref<128x128xbf16, #tpu.memory_space<vmem>>, vector<128x128xbf16>
    %cst_16 = arith.constant dense<0.000000e+00> : vector<128x128xf32>
    %44 = tpu.matmul %42, %43, %cst_16 {dimension_numbers = #tpu.dot_dimension_numbers<[1], [0], [0], [1], [0, 0, 1, 1], [], []>} : vector<128x128xbf16>, vector<128x128xbf16>, vector<128x128xf32> -> vector<128x128xf32>
    %c0_17 = arith.constant 0 : index
    %c0_18 = arith.constant 0 : index
    %45 = vector.load %arg10[%c0_17, %c0_18] : memref<1x128xf32, #tpu.memory_space<vmem>>, vector<1x128xf32>
    %46 = vector.broadcast %45 : vector<1x128xf32> to vector<128x128xf32>
    %47 = arith.addf %44, %46 : vector<128x128xf32>
    %48 = arith.mulf %47, %47 : vector<128x128xf32>
    %49 = arith.mulf %47, %48 : vector<128x128xf32>
    %cst_19 = arith.constant 4.471500e-02 : f32
    %50 = vector.broadcast %cst_19 : f32 to vector<128x128xf32>
    %51 = arith.mulf %50, %49 : vector<128x128xf32>
    %52 = arith.addf %47, %51 : vector<128x128xf32>
    %cst_20 = arith.constant 0.797884583 : f32
    %53 = vector.broadcast %cst_20 : f32 to vector<128x128xf32>
    %54 = arith.mulf %53, %52 : vector<128x128xf32>
    %55 = math.tanh %54 : vector<128x128xf32>
    %cst_21 = arith.constant 1.000000e+00 : f32
    %56 = vector.broadcast %cst_21 : f32 to vector<128x128xf32>
    %57 = arith.addf %56, %55 : vector<128x128xf32>
    %cst_22 = arith.constant 5.000000e-01 : f32
    %58 = vector.broadcast %cst_22 : f32 to vector<128x128xf32>
    %59 = arith.mulf %58, %57 : vector<128x128xf32>
    %60 = arith.mulf %47, %59 : vector<128x128xf32>
    %61 = arith.truncf %60 : vector<128x128xf32> to vector<128x128xbf16>
    %c0_23 = arith.constant 0 : index
    %c0_24 = arith.constant 0 : index
    %62 = vector.load %arg11[%c0_23, %c0_24] : memref<128x128xbf16, #tpu.memory_space<vmem>>, vector<128x128xbf16>
    %cst_25 = arith.constant dense<0.000000e+00> : vector<128x128xf32>
    %63 = tpu.matmul %61, %62, %cst_25 {dimension_numbers = #tpu.dot_dimension_numbers<[1], [0], [0], [1], [0, 0, 1, 1], [], []>} : vector<128x128xbf16>, vector<128x128xbf16>, vector<128x128xf32> -> vector<128x128xf32>
    %c0_26 = arith.constant 0 : index
    %c0_27 = arith.constant 0 : index
    %64 = vector.load %arg12[%c0_26, %c0_27] : memref<1x128xf32, #tpu.memory_space<vmem>>, vector<1x128xf32>
    %65 = vector.broadcast %64 : vector<1x128xf32> to vector<128x128xf32>
    %66 = arith.addf %63, %65 : vector<128x128xf32>
    %67 = arith.addf %17, %66 : vector<128x128xf32>
    %c0_28 = arith.constant 0 : index
    %c0_29 = arith.constant 0 : index
    %c0_30 = arith.constant 0 : index
    %68 = vector.load %arg13[%c0_28, %c0_29, %c0_30] : memref<1x128x128xf32, #tpu.memory_space<vmem>>, vector<1x128x128xf32>
    %69 = vector.shape_cast %68 : vector<1x128x128xf32> to vector<128x128xf32>
    %70 = vector.shape_cast %67 : vector<128x128xf32> to vector<1x128x128xf32>
    tpu.vector_store %arg13[%c0_28, %c0_29, %c0_30], %70 {strides = array<i32>} : memref<1x128x128xf32, #tpu.memory_space<vmem>>, vector<1x128x128xf32>,
    return
  }
  func.func @transform_0(%arg0: i32, %arg1: i32) -> (i32, i32, i32) {
    %c0_i32 = arith.constant 0 : i32
    %c0_i32_0 = arith.constant 0 : i32
    %c0_i32_1 = arith.constant 0 : i32
    return %arg0, %c0_i32, %c0_i32_0 : i32, i32, i32
  }
  func.func @transform_1(%arg0: i32, %arg1: i32) -> (i32, i32) {
    %c0_i32 = arith.constant 0 : i32
    %c0_i32_0 = arith.constant 0 : i32
    %c0_i32_1 = arith.constant 0 : i32
    return %c0_i32, %c0_i32_0 : i32, i32
  }
  func.func @transform_2(%arg0: i32, %arg1: i32) -> (i32, i32) {
    %c0_i32 = arith.constant 0 : i32
    %c0_i32_0 = arith.constant 0 : i32
    %c0_i32_1 = arith.constant 0 : i32
    return %c0_i32, %c0_i32_0 : i32, i32
  }
  func.func @transform_3(%arg0: i32, %arg1: i32) -> (i32, i32) {
    %c0_i32 = arith.constant 0 : i32
    %c0_i32_0 = arith.constant 0 : i32
    %c0_i32_1 = arith.constant 0 : i32
    return %c0_i32, %c0_i32_0 : i32, i32
  }
  func.func @transform_4(%arg0: i32, %arg1: i32) -> (i32, i32) {
    %c0_i32 = arith.constant 0 : i32
    %c0_i32_0 = arith.constant 0 : i32
    %c0_i32_1 = arith.constant 0 : i32
    return %c0_i32, %c0_i32_0 : i32, i32
  }
  func.func @transform_5(%arg0: i32, %arg1: i32) -> (i32, i32) {
    %c0_i32 = arith.constant 0 : i32
    %c0_i32_0 = arith.constant 0 : i32
    %c0_i32_1 = arith.constant 0 : i32
    return %c0_i32, %c0_i32_0 : i32, i32
  }
  func.func @transform_6(%arg0: i32, %arg1: i32) -> (i32, i32) {
    %c0_i32 = arith.constant 0 : i32
    %c0_i32_0 = arith.constant 0 : i32
    %c0_i32_1 = arith.constant 0 : i32
    return %c0_i32, %c0_i32_0 : i32, i32
  }
  func.func @transform_7(%arg0: i32, %arg1: i32) -> (i32, i32) {
    %c0_i32 = arith.constant 0 : i32
    %c0_i32_0 = arith.constant 0 : i32
    %c0_i32_1 = arith.constant 0 : i32
    return %c0_i32, %c0_i32_0 : i32, i32
  }
  func.func @transform_8(%arg0: i32, %arg1: i32) -> (i32, i32) {
    %c0_i32 = arith.constant 0 : i32
    %c0_i32_0 = arith.constant 0 : i32
    %c0_i32_1 = arith.constant 0 : i32
    return %c0_i32, %c0_i32_0 : i32, i32
  }
  func.func @transform_9(%arg0: i32, %arg1: i32) -> (i32, i32) {
    %c0_i32 = arith.constant 0 : i32
    %c0_i32_0 = arith.constant 0 : i32
    %c0_i32_1 = arith.constant 0 : i32
    return %c0_i32, %c0_i32_0 : i32, i32
  }
  func.func @transform_10(%arg0: i32, %arg1: i32) -> (i32, i32) {
    %c0_i32 = arith.constant 0 : i32
    %c0_i32_0 = arith.constant 0 : i32
    %c0_i32_1 = arith.constant 0 : i32
    return %c0_i32, %c0_i32_0 : i32, i32
  }
  func.func @transform_11(%arg0: i32, %arg1: i32) -> (i32, i32, i32) {
    %c0_i32 = arith.constant 0 : i32
    %c0_i32_0 = arith.constant 0 : i32
    return %arg0, %arg1, %c0_i32 : i32, i32, i32
  }
}

</mosaic_0001>

<llo_original>
// kernel: fwd.1
$region0: #{fwd.1}
  #allocation0 [shape = 'u32[]', space=smem, size = 0x4, offset = 0x4, fixed_abs, tag = 'smem constant byte address 0x4 - core index']
  #allocation1 [shape = 'u32[144,128]{1,0:T(1,128)}', space=vmem, size = 0x12000, scoped, tag = 'internal scratch']
  #allocation2 [shape = 'bf16[256,128]{1,0:T(8,128)(2,1)}', space=vmem, size = 0x10000, scoped, tag = 'scratch operand']
  %s0 = inlined_call_operand.vmem [shape: f32[2,128,128], index: 0, kind: input, shape index: {}]
  %s1 = inlined_call_operand.vmem [shape: bf16[128,256], index: 1, kind: input, shape index: {}]
  %s2 = inlined_call_operand.vmem [shape: bf16[128,256], index: 2, kind: input, shape index: {}]
  %s3 = inlined_call_operand.vmem [shape: f32[1,128], index: 3, kind: input, shape index: {}, may-alias: {3,5}]
  %s4 = inlined_call_operand.vmem [shape: f32[1,128], index: 4, kind: input, shape index: {}, may-alias: {4,6}]
  %s5 = inlined_call_operand.vmem [shape: f32[1,128], index: 5, kind: input, shape index: {}, may-alias: {3,5}]
  %s6 = inlined_call_operand.vmem [shape: f32[1,128], index: 6, kind: input, shape index: {}, may-alias: {4,6}]
  %s7 = inlined_call_operand.hbm [shape: bf16[128,128], index: 7, kind: input, shape index: {}]
  %s8 = inlined_call_operand.vmem [shape: f32[1,128], index: 8, kind: input, shape index: {}]
  %s9 = inlined_call_operand.hbm [shape: bf16[128,128], index: 9, kind: input, shape index: {}]
  %s10 = inlined_call_operand.vmem [shape: f32[1,128], index: 10, kind: input, shape index: {}]
  %s11 = inlined_call_operand.vmem [shape: f32[2,128,128], index: 11, kind: output, shape index: {}]
  %s12 = sld [smem:[#allocation0]]
  $region89: #{fwd.1} parent=0
    _
  %s14 = ssub.s32 1, %s12
  %s15 = scalar_select 0, %s14, %s12
  $region1: #{fwd.1} parent=0
    #allocation3 [shape = 'u8[32768]{0}', space=vmem, size = 0x8000, scoped, tag = 'input window, operand 7, single buffered']
    #allocation4 [shape = 's32[2]{0}', space=sflag, size = 0x8, scoped, tag = 'scoped memory for fwd.1']
    #allocation5 [shape = 'u8[32768]{0}', space=vmem, size = 0x8000, scoped, tag = 'input window, operand 9, single buffered']
    #allocation6 [shape = 's32[1]{0}', space=sflag, size = 0x4, scoped, tag = 'scoped memory for fwd.1']
    %16 = vsyncpa [#allocation4], 0
    %17 = vsyncpa [#allocation6], 0
    loop: start=0, step=1, limit=4
    $region2: #{fwd.1} parent=1 // loop_pre_header
      _
    $region3: #{fwd.1} parent=1 // loop_header
      %s19 = sphi 0, %s23
      %p20 = scmp.ge.s32.totalorder %s19, 4
      %s26 = sphi 0, %s38
      %s27 = sphi 0, %s34
      %s28 = sphi 0, %s26
      %s29 = sphi 0, %s27
      %s30 = sphi 0, %s28
      %s31 = sphi 0, %s29
      %s41 = sphi 0, %s43
      %s44 = sphi 0, %s41
      %s45 = sphi 0, %s44
      %s61 = sphi 0, %s45
      %s65 = sphi 0, %s65
      %s67 = sphi 0, %s65
      %s68 = sphi 0, %s67
      %s82 = sphi 0, %s68
      %s86 = sphi 0, %s86
      %s88 = sphi 0, %s86
      %s89 = sphi 0, %s88
      %s103 = sphi 0, %s89
      %s107 = sphi 0, %s107
      %s109 = sphi 0, %s107
      %s110 = sphi 0, %s109
      %s124 = sphi 0, %s110
      %s128 = sphi 0, %s128
      %s130 = sphi 0, %s128
      %s131 = sphi 0, %s130
      %s145 = sphi 0, %s131
      %s149 = sphi 0, %s149
      %s151 = sphi 0, %s149
      %s152 = sphi 0, %s151
      %s166 = sphi 0, %s152
      %s170 = sphi 0, %s170
      %s172 = sphi 0, %s170
      %s173 = sphi 0, %s172
      %s187 = sphi 0, %s173
      %s191 = sphi 0, %s191
      %s193 = sphi 0, %s191
      %s194 = sphi 0, %s193
      %s208 = sphi 0, %s194
      %s212 = sphi 0, %s212
      %s214 = sphi 0, %s212
      %s215 = sphi 0, %s214
      %s229 = sphi 0, %s215
      %s233 = sphi 0, %s233
      %s235 = sphi 0, %s233
      %s236 = sphi 0, %s235
      %s250 = sphi 0, %s236
      %s254 = sphi 0, %s254
      %s256 = sphi 0, %s254
      %s257 = sphi 0, %s256
      %s271 = sphi 0, %s257
      %s279 = sphi 0, %s281
      %s282 = sphi 0, %s279
      %s283 = sphi 0, %s282
      %s299 = sphi 0, %s283
    $region4: #{fwd.1} parent=1 // loop_header_branch
      %22 = sbr.rel (%p20) target = $region8
    $region5: #{fwd.1} parent=1 // loop_body
      %s24 = ssub.s32 %s19, 1
      %s25 = ssub.s32 %s19, 2
      %s32 = sadd.s32 1, %s27
      %p33 = scmp.ge.s32.totalorder %s32, 1
      %s34 = scalar_select %p33, 0, %s32
      %s35 = sadd.s32 1, %s26
      %s36 = scalar_select %p33, %s35, %s26
      %p37 = scmp.ge.s32.totalorder %s36, 2
      %s38 = scalar_select %p37, 0, %s36
      %s39 = ssub.s32 %s26, %s38
      %p40 = scmp.eq.s32.totalorder %s39, 0
      %s42 = sadd.s32 %s41, 1
      %s43 = scalar_select %p40, %s41, %s42
      %p46 = pneg %p40
      %p47 = scmp.eq.s32.totalorder %s19, 1
      %p48 = por %p46, %p47
      %p49 = scmp.ne.s32.totalorder %s41, %s44
      %p50 = scmp.eq.s32.totalorder %s19, 0
      %p51 = por %p49, %p50
      %p52 = scmp.ne.s32.totalorder %s41, %s44
      %p53 = scmp.eq.s32.totalorder %s24, 1
      %p54 = por %p52, %p53
      %p55 = scmp.ne.s32.totalorder %s44, %s45
      %p56 = scmp.eq.s32.totalorder %s24, 0
      %p57 = por %p55, %p56
      %p58 = scmp.ne.s32.totalorder %s44, %s45
      %p59 = scmp.eq.s32.totalorder %s25, 1
      %p60 = por %p58, %p59
      %p62 = scmp.ne.s32.totalorder %s45, %s61
      %p63 = scmp.eq.s32.totalorder %s25, 0
      %p64 = por %p62, %p63
      %s66 = sadd.s32 %s65, 1
      %p69 = scmp.eq.s32.totalorder %s19, 1
      %p70 = scmp.ne.s32.totalorder %s65, %s67
      %p71 = scmp.eq.s32.totalorder %s19, 0
      %p72 = por %p70, %p71
      %p73 = scmp.ne.s32.totalorder %s65, %s67
      %p74 = scmp.eq.s32.totalorder %s24, 1
      %p75 = por %p73, %p74
      %p76 = scmp.ne.s32.totalorder %s67, %s68
      %p77 = scmp.eq.s32.totalorder %s24, 0
      %p78 = por %p76, %p77
      %p79 = scmp.ne.s32.totalorder %s67, %s68
      %p80 = scmp.eq.s32.totalorder %s25, 1
      %p81 = por %p79, %p80
      %p83 = scmp.ne.s32.totalorder %s68, %s82
      %p84 = scmp.eq.s32.totalorder %s25, 0
      %p85 = por %p83, %p84
      %s87 = sadd.s32 %s86, 1
      %p90 = scmp.eq.s32.totalorder %s19, 1
      %p91 = scmp.ne.s32.totalorder %s86, %s88
      %p92 = scmp.eq.s32.totalorder %s19, 0
      %p93 = por %p91, %p92
      %p94 = scmp.ne.s32.totalorder %s86, %s88
      %p95 = scmp.eq.s32.totalorder %s24, 1
      %p96 = por %p94, %p95
      %p97 = scmp.ne.s32.totalorder %s88, %s89
      %p98 = scmp.eq.s32.totalorder %s24, 0
      %p99 = por %p97, %p98
      %p100 = scmp.ne.s32.totalorder %s88, %s89
      %p101 = scmp.eq.s32.totalorder %s25, 1
      %p102 = por %p100, %p101
      %p104 = scmp.ne.s32.totalorder %s89, %s103
      %p105 = scmp.eq.s32.totalorder %s25, 0
      %p106 = por %p104, %p105
      %s108 = sadd.s32 %s107, 1
      %p111 = scmp.eq.s32.totalorder %s19, 1
      %p112 = scmp.ne.s32.totalorder %s107, %s109
      %p113 = scmp.eq.s32.totalorder %s19, 0
      %p114 = por %p112, %p113
      %p115 = scmp.ne.s32.totalorder %s107, %s109
      %p116 = scmp.eq.s32.totalorder %s24, 1
      %p117 = por %p115, %p116
      %p118 = scmp.ne.s32.totalorder %s109, %s110
      %p119 = scmp.eq.s32.totalorder %s24, 0
      %p120 = por %p118, %p119
      %p121 = scmp.ne.s32.totalorder %s109, %s110
      %p122 = scmp.eq.s32.totalorder %s25, 1
      %p123 = por %p121, %p122
      %p125 = scmp.ne.s32.totalorder %s110, %s124
      %p126 = scmp.eq.s32.totalorder %s25, 0
      %p127 = por %p125, %p126
      %s129 = sadd.s32 %s128, 1
      %p132 = scmp.eq.s32.totalorder %s19, 1
      %p133 = scmp.ne.s32.totalorder %s128, %s130
      %p134 = scmp.eq.s32.totalorder %s19, 0
      %p135 = por %p133, %p134
      %p136 = scmp.ne.s32.totalorder %s128, %s130
      %p137 = scmp.eq.s32.totalorder %s24, 1
      %p138 = por %p136, %p137
      %p139 = scmp.ne.s32.totalorder %s130, %s131
      %p140 = scmp.eq.s32.totalorder %s24, 0
      %p141 = por %p139, %p140
      %p142 = scmp.ne.s32.totalorder %s130, %s131
      %p143 = scmp.eq.s32.totalorder %s25, 1
      %p144 = por %p142, %p143
      %p146 = scmp.ne.s32.totalorder %s131, %s145
      %p147 = scmp.eq.s32.totalorder %s25, 0
      %p148 = por %p146, %p147
      %s150 = sadd.s32 %s149, 1
      %p153 = scmp.eq.s32.totalorder %s19, 1
      %p154 = scmp.ne.s32.totalorder %s149, %s151
      %p155 = scmp.eq.s32.totalorder %s19, 0
      %p156 = por %p154, %p155
      %p157 = scmp.ne.s32.totalorder %s149, %s151
      %p158 = scmp.eq.s32.totalorder %s24, 1
      %p159 = por %p157, %p158
      %p160 = scmp.ne.s32.totalorder %s151, %s152
      %p161 = scmp.eq.s32.totalorder %s24, 0
      %p162 = por %p160, %p161
      %p163 = scmp.ne.s32.totalorder %s151, %s152
      %p164 = scmp.eq.s32.totalorder %s25, 1
      %p165 = por %p163, %p164
      %p167 = scmp.ne.s32.totalorder %s152, %s166
      %p168 = scmp.eq.s32.totalorder %s25, 0
      %p169 = por %p167, %p168
      %s171 = sadd.s32 %s170, 1
      %p174 = scmp.eq.s32.totalorder %s19, 1
      %p175 = scmp.ne.s32.totalorder %s170, %s172
      %p176 = scmp.eq.s32.totalorder %s19, 0
      %p177 = por %p175, %p176
      %p178 = scmp.ne.s32.totalorder %s170, %s172
      %p179 = scmp.eq.s32.totalorder %s24, 1
      %p180 = por %p178, %p179
      %p181 = scmp.ne.s32.totalorder %s172, %s173
      %p182 = scmp.eq.s32.totalorder %s24, 0
      %p183 = por %p181, %p182
      %p184 = scmp.ne.s32.totalorder %s172, %s173
      %p185 = scmp.eq.s32.totalorder %s25, 1
      %p186 = por %p184, %p185
      %p188 = scmp.ne.s32.totalorder %s173, %s187
      %p189 = scmp.eq.s32.totalorder %s25, 0
      %p190 = por %p188, %p189
      %s192 = sadd.s32 %s191, 1
      %p195 = scmp.eq.s32.totalorder %s19, 1
      %p196 = scmp.ne.s32.totalorder %s191, %s193
      %p197 = scmp.eq.s32.totalorder %s19, 0
      %p198 = por %p196, %p197
      %p199 = scmp.ne.s32.totalorder %s191, %s193
      %p200 = scmp.eq.s32.totalorder %s24, 1
      %p201 = por %p199, %p200
      %p202 = scmp.ne.s32.totalorder %s193, %s194
      %p203 = scmp.eq.s32.totalorder %s24, 0
      %p204 = por %p202, %p203
      %p205 = scmp.ne.s32.totalorder %s193, %s194
      %p206 = scmp.eq.s32.totalorder %s25, 1
      %p207 = por %p205, %p206
      %p209 = scmp.ne.s32.totalorder %s194, %s208
      %p210 = scmp.eq.s32.totalorder %s25, 0
      %p211 = por %p209, %p210
      %s213 = sadd.s32 %s212, 1
      %p216 = scmp.eq.s32.totalorder %s19, 1
      %p217 = scmp.ne.s32.totalorder %s212, %s214
      %p218 = scmp.eq.s32.totalorder %s19, 0
      %p219 = por %p217, %p218
      %p220 = scmp.ne.s32.totalorder %s212, %s214
      %p221 = scmp.eq.s32.totalorder %s24, 1
      %p222 = por %p220, %p221
      %p223 = scmp.ne.s32.totalorder %s214, %s215
      %p224 = scmp.eq.s32.totalorder %s24, 0
      %p225 = por %p223, %p224
      %p226 = scmp.ne.s32.totalorder %s214, %s215
      %p227 = scmp.eq.s32.totalorder %s25, 1
      %p228 = por %p226, %p227
      %p230 = scmp.ne.s32.totalorder %s215, %s229
      %p231 = scmp.eq.s32.totalorder %s25, 0
      %p232 = por %p230, %p231
      %s234 = sadd.s32 %s233, 1
      %p237 = scmp.eq.s32.totalorder %s19, 1
      %p238 = scmp.ne.s32.totalorder %s233, %s235
      %p239 = scmp.eq.s32.totalorder %s19, 0
      %p240 = por %p238, %p239
      %p241 = scmp.ne.s32.totalorder %s233, %s235
      %p242 = scmp.eq.s32.totalorder %s24, 1
      %p243 = por %p241, %p242
      %p244 = scmp.ne.s32.totalorder %s235, %s236
      %p245 = scmp.eq.s32.totalorder %s24, 0
      %p246 = por %p244, %p245
      %p247 = scmp.ne.s32.totalorder %s235, %s236
      %p248 = scmp.eq.s32.totalorder %s25, 1
      %p249 = por %p247, %p248
      %p251 = scmp.ne.s32.totalorder %s236, %s250
      %p252 = scmp.eq.s32.totalorder %s25, 0
      %p253 = por %p251, %p252
      %s255 = sadd.s32 %s254, 1
      %p258 = scmp.eq.s32.totalorder %s19, 1
      %p259 = scmp.ne.s32.totalorder %s254, %s256
      %p260 = scmp.eq.s32.totalorder %s19, 0
      %p261 = por %p259, %p260
      %p262 = scmp.ne.s32.totalorder %s254, %s256
      %p263 = scmp.eq.s32.totalorder %s24, 1
      %p264 = por %p262, %p263
      %p265 = scmp.ne.s32.totalorder %s256, %s257
      %p266 = scmp.eq.s32.totalorder %s24, 0
      %p267 = por %p265, %p266
      %p268 = scmp.ne.s32.totalorder %s256, %s257
      %p269 = scmp.eq.s32.totalorder %s25, 1
      %p270 = por %p268, %p269
      %p272 = scmp.ne.s32.totalorder %s257, %s271
      %p273 = scmp.eq.s32.totalorder %s25, 0
      %p274 = por %p272, %p273
      %s275 = ssub.s32 %s26, %s38
      %s276 = ssub.s32 %s27, %s34
      %s277 = sor.u32 %s275, %s276
      %p278 = scmp.eq.s32.totalorder %s277, 0
      %s280 = sadd.s32 %s279, 1
      %s281 = scalar_select %p278, %s279, %s280
      %p284 = pneg %p278
      %p285 = scmp.eq.s32.totalorder %s19, 1
      %p286 = por %p284, %p285
      %p287 = scmp.ne.s32.totalorder %s279, %s282
      %p288 = scmp.eq.s32.totalorder %s19, 0
      %p289 = por %p287, %p288
      %p290 = scmp.ne.s32.totalorder %s279, %s282
      %p291 = scmp.eq.s32.totalorder %s24, 1
      %p292 = por %p290, %p291
      %p293 = scmp.ne.s32.totalorder %s282, %s283
      %p294 = scmp.eq.s32.totalorder %s24, 0
      %p295 = por %p293, %p294
      %p296 = scmp.ne.s32.totalorder %s282, %s283
      %p297 = scmp.eq.s32.totalorder %s25, 1
      %p298 = por %p296, %p297
      %p300 = scmp.ne.s32.totalorder %s283, %s299
      %p301 = scmp.eq.s32.totalorder %s25, 0
      %p302 = por %p300, %p301
      %p303 = scmp.le.s32.totalorder 1, %s19
      %p304 = scmp.lt.s32.totalorder %s19, 3
      %p305 = pnand %p303, %p304
      %p306 = pneg %p305
      // Predicated region
      $region9: #{fwd.1} parent=5 // pred_check
        _
      $region10: #{fwd.1} parent=5 // pred_check_branch
        %308 = sbr.rel (%p305) target = $region12
      $region11: #{fwd.1} parent=5 // pred_region
        %s309 = ssub.s32 %s19, 1
        // Predicated region
        $region13: #{fwd.1} parent=11 // pred_check
          %p310 = pneg %p78
        $region14: #{fwd.1} parent=11 // pred_check_branch
          %312 = sbr.rel (%p310) target = $region16
        $region15: #{fwd.1} parent=11 // pred_region
          _
        $region16: #{fwd.1} parent=11 // pred_fallthru
          _
        // Predicated region
        $region17: #{fwd.1} parent=11 // pred_check
          %p313 = pneg %p99
        $region18: #{fwd.1} parent=11 // pred_check_branch
          %315 = sbr.rel (%p313) target = $region20
        $region19: #{fwd.1} parent=11 // pred_region
          _
        $region20: #{fwd.1} parent=11 // pred_fallthru
          _
        // Predicated region
        $region21: #{fwd.1} parent=11 // pred_check
          %p316 = pneg %p120
        $region22: #{fwd.1} parent=11 // pred_check_branch
          %318 = sbr.rel (%p316) target = $region24
        $region23: #{fwd.1} parent=11 // pred_region
          _
        $region24: #{fwd.1} parent=11 // pred_fallthru
          _
        // Predicated region
        $region25: #{fwd.1} parent=11 // pred_check
          %p319 = pneg %p141
        $region26: #{fwd.1} parent=11 // pred_check_branch
          %321 = sbr.rel (%p319) target = $region28
        $region27: #{fwd.1} parent=11 // pred_region
          _
        $region28: #{fwd.1} parent=11 // pred_fallthru
          _
        // Predicated region
        $region29: #{fwd.1} parent=11 // pred_check
          %p322 = pneg %p162
        $region30: #{fwd.1} parent=11 // pred_check_branch
          %324 = sbr.rel (%p322) target = $region32
        $region31: #{fwd.1} parent=11 // pred_region
          _
        $region32: #{fwd.1} parent=11 // pred_fallthru
          _
        // Predicated region
        $region33: #{fwd.1} parent=11 // pred_check
          %p325 = pneg %p183
        $region34: #{fwd.1} parent=11 // pred_check_branch
          %327 = sbr.rel (%p325) target = $region36
        $region35: #{fwd.1} parent=11 // pred_region
          _
        $region36: #{fwd.1} parent=11 // pred_fallthru
          _
        // Predicated region
        $region37: #{fwd.1} parent=11 // pred_check
          %p328 = pneg %p204
        $region38: #{fwd.1} parent=11 // pred_check_branch
          %330 = sbr.rel (%p328) target = $region40
        $region39: #{fwd.1} parent=11 // pred_region
          %s332 = ssub.s32 1024, 1024
          %333 = vsyncadd [#allocation4], %s332
          %s334 = sshll.u32 [#allocation3], 4
          %s335 = int_to_ptr.vmem [resolvable:$true] %s334
          %340 = dma.hbm_to_vmem [thread:$0]  %s7, 1024, %s335, [#allocation4], 64, 64, 4
        $region40: #{fwd.1} parent=11 // pred_fallthru
          _
        // Predicated region
        $region41: #{fwd.1} parent=11 // pred_check
          %p341 = pneg %p225
        $region42: #{fwd.1} parent=11 // pred_check_branch
          %343 = sbr.rel (%p341) target = $region44
        $region43: #{fwd.1} parent=11 // pred_region
          _
        $region44: #{fwd.1} parent=11 // pred_fallthru
          _
        // Predicated region
        $region45: #{fwd.1} parent=11 // pred_check
          %p344 = pneg %p246
        $region46: #{fwd.1} parent=11 // pred_check_branch
          %346 = sbr.rel (%p344) target = $region48
        $region47: #{fwd.1} parent=11 // pred_region
          %s348 = ssub.s32 1024, 1024
          %349 = vsyncadd [#allocation6], %s348
          %s350 = sshll.u32 [#allocation5], 4
          %s351 = int_to_ptr.vmem [resolvable:$true] %s350
          %356 = dma.hbm_to_vmem [thread:$0]  %s9, 1024, %s351, [#allocation6], 64, 64, 4
        $region48: #{fwd.1} parent=11 // pred_fallthru
          _
        // Predicated region
        $region49: #{fwd.1} parent=11 // pred_check
          %p357 = pneg %p267
        $region50: #{fwd.1} parent=11 // pred_check_branch
          %359 = sbr.rel (%p357) target = $region52
        $region51: #{fwd.1} parent=11 // pred_region
          _
        $region52: #{fwd.1} parent=11 // pred_fallthru
          _
      $region12: #{fwd.1} parent=5 // pred_fallthru
        _
      %p360 = scmp.lt.s32.totalorder %s19, 2
      // Predicated region
      $region53: #{fwd.1} parent=5 // pred_check
        %p361 = pneg %p360
      $region54: #{fwd.1} parent=5 // pred_check_branch
        %363 = sbr.rel (%p361) target = $region56
      $region55: #{fwd.1} parent=5 // pred_region
        // Predicated region
        $region57: #{fwd.1} parent=55 // pred_check
          %p364 = pneg %p51
        $region58: #{fwd.1} parent=55 // pred_check_branch
          %366 = sbr.rel (%p364) target = $region60
        $region59: #{fwd.1} parent=55 // pred_region
          %p367 = scmp.lt.s32.totalorder %s26, 1
          %s368 = scalar_select %p367, %s26, 1
          %s369 = smul.addr %s368, 16
          %s370 = smul.addr %s369, 8
          %s371 = scalar_lea.vmem %s0, %s370
        $region60: #{fwd.1} parent=55 // pred_fallthru
          _
      $region56: #{fwd.1} parent=5 // pred_fallthru
        _
      %p372 = scmp.le.s32.totalorder 1, %s19
      %p373 = scmp.lt.s32.totalorder %s19, 3
      %p374 = pnand %p372, %p373
      %p375 = pneg %p374
      // Predicated region
      $region61: #{fwd.1} parent=5 // pred_check
        _
      $region62: #{fwd.1} parent=5 // pred_check_branch
        %377 = sbr.rel (%p374) target = $region64
      $region63: #{fwd.1} parent=5 // pred_region
        %s378 = ssub.s32 %s19, 1
        // Predicated region
        $region65: #{fwd.1} parent=63 // pred_check
          %p379 = pneg %p204
        $region66: #{fwd.1} parent=63 // pred_check_branch
          %381 = sbr.rel (%p379) target = $region68
        $region67: #{fwd.1} parent=63 // pred_region
          %382 = dma.done [#allocation4], 1024
        $region68: #{fwd.1} parent=63 // pred_fallthru
          _
        // Predicated region
        $region69: #{fwd.1} parent=63 // pred_check
          %p383 = pneg %p246
        $region70: #{fwd.1} parent=63 // pred_check_branch
          %385 = sbr.rel (%p383) target = $region72
        $region71: #{fwd.1} parent=63 // pred_region
          %386 = dma.done [#allocation6], 1024
        $region72: #{fwd.1} parent=63 // pred_fallthru
          _
        %p387 = scmp.lt.s32.totalorder %s28, 1
        %s388 = scalar_select %p387, %s28, 1
        %s389 = smul.addr %s388, 16
        %s390 = smul.addr %s389, 8
        %s391 = scalar_lea.vmem %s0, %s390
        %p392 = pneg %p57
        %p393 = pneg %p54
        %p394 = pneg %p78
        %p395 = pneg %p75
        %p396 = pneg %p99
        %p397 = pneg %p96
        %p398 = pneg %p120
        %p399 = pneg %p117
        %p400 = pneg %p141
        %p401 = pneg %p138
        %p402 = pneg %p162
        %p403 = pneg %p159
        %p404 = pneg %p183
        %p405 = pneg %p180
        %p406 = pneg %p204
        %p407 = pneg %p201
        %p408 = pneg %p225
        %p409 = pneg %p222
        %p410 = pneg %p246
        %p411 = pneg %p243
        %p412 = pneg %p267
        %p413 = pneg %p264
        %p414 = pneg %p295
        %p415 = pneg %p292
        %s416 = smul.u32 16, %s29
        %p417 = scmp.lt.s32.totalorder %s28, 1
        %s418 = scalar_select %p417, %s28, 1
        %p419 = scmp.lt.s32.totalorder %s416, 15
        %s420 = scalar_select %p419, %s416, 15
        %s421 = smul.addr %s418, 16
        %s422 = sadd.s32 %s420, %s421
        %s423 = smul.addr %s422, 8
        %s424 = scalar_lea.vmem %s11, %s423
        %p425 = scmp.lt.s32.totalorder %s28, 1
        %s426 = scalar_select %p425, %s28, 1
        %s427 = smul.addr %s426, 16
        %s428 = smul.addr %s427, 8
        %s429 = scalar_lea.vmem %s0, %s428
        %s430 = smul.u32 16, %s29
        %p431 = scmp.lt.s32.totalorder %s28, 1
        %s432 = scalar_select %p431, %s28, 1
        %p433 = scmp.lt.s32.totalorder %s430, 15
        %s434 = scalar_select %p433, %s430, 15
        %s435 = smul.addr %s432, 16
        %s436 = sadd.s32 %s434, %s435
        %s437 = smul.addr %s436, 8
        %s438 = scalar_lea.vmem %s11, %s437
        %s439 = smul.u32 16, %s29
        %v441 = vlaneseq
        %v442 = vand.u32 %v441, 127
        %vm443 = vcmp.lt.s32.totalorder %v442, 32
        %v444 = vsel %vm443, 1, 0
        %v445 = vcvt.s32.f32 %v444
        %p446 = scmp.eq.s32.totalorder %s29, 0
        // Predicated region
        $region73: #{fwd.1} parent=63 // pred_check
          %p447 = pneg %p446
        $region74: #{fwd.1} parent=63 // pred_check_branch
          %449 = sbr.rel (%p447) target = $region76
        $region75: #{fwd.1} parent=63 // pred_region
          %v450 = vld [vmem:[%s429] sm:$0xff]
          %v451 = vld [vmem:[%s429 + $0x8] sm:$0xff]
          %v452 = vld [vmem:[%s429 + $0x10] sm:$0xff]
          %v453 = vld [vmem:[%s429 + $0x18] sm:$0xff]
          %v454 = vld [vmem:[%s429 + $0x20] sm:$0xff]
          %v455 = vld [vmem:[%s429 + $0x28] sm:$0xff]
          %v456 = vld [vmem:[%s429 + $0x30] sm:$0xff]
          %v457 = vld [vmem:[%s429 + $0x38] sm:$0xff]
          %v458 = vld [vmem:[%s429 + $0x40] sm:$0xff]
          %v459 = vld [vmem:[%s429 + $0x48] sm:$0xff]
          %v460 = vld [vmem:[%s429 + $0x50] sm:$0xff]
          %v461 = vld [vmem:[%s429 + $0x58] sm:$0xff]
          %v462 = vld [vmem:[%s429 + $0x60] sm:$0xff]
          %v463 = vld [vmem:[%s429 + $0x68] sm:$0xff]
          %v464 = vld [vmem:[%s429 + $0x70] sm:$0xff]
          %v465 = vld [vmem:[%s429 + $0x78] sm:$0xff]
          %v466 = vld [vmem:[%s3] sm:$0x1]
          %v467 = vld [vmem:[%s4] sm:$0x1]
          %468 = vadd.xlane.f32.xlu0 %v450
          %v469 = vpop.xlane.xlu0 %468
          %470 = vadd.xlane.f32.xlu0 %v451
          %v471 = vpop.xlane.xlu0 %470
          %472 = vadd.xlane.f32.xlu0 %v452
          %v473 = vpop.xlane.xlu0 %472
          %474 = vadd.xlane.f32.xlu0 %v453
          %v475 = vpop.xlane.xlu0 %474
          %476 = vadd.xlane.f32.xlu0 %v454
          %v477 = vpop.xlane.xlu0 %476
          %478 = vadd.xlane.f32.xlu0 %v455
          %v479 = vpop.xlane.xlu0 %478
          %480 = vadd.xlane.f32.xlu0 %v456
          %v481 = vpop.xlane.xlu0 %480
          %482 = vadd.xlane.f32.xlu0 %v457
          %v483 = vpop.xlane.xlu0 %482
          %484 = vadd.xlane.f32.xlu0 %v458
          %v485 = vpop.xlane.xlu0 %484
          %486 = vadd.xlane.f32.xlu0 %v459
          %v487 = vpop.xlane.xlu0 %486
          %488 = vadd.xlane.f32.xlu0 %v460
          %v489 = vpop.xlane.xlu0 %488
          %490 = vadd.xlane.f32.xlu0 %v461
          %v491 = vpop.xlane.xlu0 %490
          %492 = vadd.xlane.f32.xlu0 %v462
          %v493 = vpop.xlane.xlu0 %492
          %494 = vadd.xlane.f32.xlu0 %v463
          %v495 = vpop.xlane.xlu0 %494
          %496 = vadd.xlane.f32.xlu0 %v464
          %v497 = vpop.xlane.xlu0 %496
          %498 = vadd.xlane.f32.xlu0 %v465
          %v499 = vpop.xlane.xlu0 %498
          %v500 = vmul.f32 %v469, 0.03125
          %v501 = vmul.f32 %v471, 0.03125
          %v502 = vmul.f32 %v473, 0.03125
          %v503 = vmul.f32 %v475, 0.03125
          %v504 = vmul.f32 %v477, 0.03125
          %v505 = vmul.f32 %v479, 0.03125
          %v506 = vmul.f32 %v481, 0.03125
          %v507 = vmul.f32 %v483, 0.03125
          %v508 = vmul.f32 %v485, 0.03125
          %v509 = vmul.f32 %v487, 0.03125
          %v510 = vmul.f32 %v489, 0.03125
          %v511 = vmul.f32 %v491, 0.03125
          %v512 = vmul.f32 %v493, 0.03125
          %v513 = vmul.f32 %v495, 0.03125
          %v514 = vmul.f32 %v497, 0.03125
          %v515 = vmul.f32 %v499, 0.03125
          %v516 = vsub.f32 %v450, %v500
          %v517 = vsub.f32 %v451, %v501
          %v518 = vsub.f32 %v452, %v502
          %v519 = vsub.f32 %v453, %v503
          %v520 = vsub.f32 %v454, %v504
          %v521 = vsub.f32 %v455, %v505
          %v522 = vsub.f32 %v456, %v506
          %v523 = vsub.f32 %v457, %v507
          %v524 = vsub.f32 %v458, %v508
          %v525 = vsub.f32 %v459, %v509
          %v526 = vsub.f32 %v460, %v510
          %v527 = vsub.f32 %v461, %v511
          %v528 = vsub.f32 %v462, %v512
          %v529 = vsub.f32 %v463, %v513
          %v530 = vsub.f32 %v464, %v514
          %v531 = vsub.f32 %v465, %v515
          %v532 = vmul.f32 %v516, %v445
          %v533 = vmul.f32 %v517, %v445
          %v534 = vmul.f32 %v518, %v445
          %v535 = vmul.f32 %v519, %v445
          %v536 = vmul.f32 %v520, %v445
          %v537 = vmul.f32 %v521, %v445
          %v538 = vmul.f32 %v522, %v445
          %v539 = vmul.f32 %v523, %v445
          %v540 = vmul.f32 %v524, %v445
          %v541 = vmul.f32 %v525, %v445
          %v542 = vmul.f32 %v526, %v445
          %v543 = vmul.f32 %v527, %v445
          %v544 = vmul.f32 %v528, %v445
          %v545 = vmul.f32 %v529, %v445
          %v546 = vmul.f32 %v530, %v445
          %v547 = vmul.f32 %v531, %v445
          %v548 = vmul.f32 %v532, %v532
          %v549 = vmul.f32 %v533, %v533
          %v550 = vmul.f32 %v534, %v534
          %v551 = vmul.f32 %v535, %v535
          %v552 = vmul.f32 %v536, %v536
          %v553 = vmul.f32 %v537, %v537
          %v554 = vmul.f32 %v538, %v538
          %v555 = vmul.f32 %v539, %v539
          %v556 = vmul.f32 %v540, %v540
          %v557 = vmul.f32 %v541, %v541
          %v558 = vmul.f32 %v542, %v542
          %v559 = vmul.f32 %v543, %v543
          %v560 = vmul.f32 %v544, %v544
          %v561 = vmul.f32 %v545, %v545
          %v562 = vmul.f32 %v546, %v546
          %v563 = vmul.f32 %v547, %v547
          %564 = vadd.xlane.f32.xlu0 %v548
          %v565 = vpop.xlane.xlu0 %564
          %566 = vadd.xlane.f32.xlu0 %v549
          %v567 = vpop.xlane.xlu0 %566
          %568 = vadd.xlane.f32.xlu0 %v550
          %v569 = vpop.xlane.xlu0 %568
          %570 = vadd.xlane.f32.xlu0 %v551
          %v571 = vpop.xlane.xlu0 %570
          %572 = vadd.xlane.f32.xlu0 %v552
          %v573 = vpop.xlane.xlu0 %572
          %574 = vadd.xlane.f32.xlu0 %v553
          %v575 = vpop.xlane.xlu0 %574
          %576 = vadd.xlane.f32.xlu0 %v554
          %v577 = vpop.xlane.xlu0 %576
          %578 = vadd.xlane.f32.xlu0 %v555
          %v579 = vpop.xlane.xlu0 %578
          %580 = vadd.xlane.f32.xlu0 %v556
          %v581 = vpop.xlane.xlu0 %580
          %582 = vadd.xlane.f32.xlu0 %v557
          %v583 = vpop.xlane.xlu0 %582
          %584 = vadd.xlane.f32.xlu0 %v558
          %v585 = vpop.xlane.xlu0 %584
          %586 = vadd.xlane.f32.xlu0 %v559
          %v587 = vpop.xlane.xlu0 %586
          %588 = vadd.xlane.f32.xlu0 %v560
          %v589 = vpop.xlane.xlu0 %588
          %590 = vadd.xlane.f32.xlu0 %v561
          %v591 = vpop.xlane.xlu0 %590
          %592 = vadd.xlane.f32.xlu0 %v562
          %v593 = vpop.xlane.xlu0 %592
          %594 = vadd.xlane.f32.xlu0 %v563
          %v595 = vpop.xlane.xlu0 %594
          %v596 = vmul.f32 %v565, 0.03125
          %v597 = vmul.f32 %v567, 0.03125
          %v598 = vmul.f32 %v569, 0.03125
          %v599 = vmul.f32 %v571, 0.03125
          %v600 = vmul.f32 %v573, 0.03125
          %v601 = vmul.f32 %v575, 0.03125
          %v602 = vmul.f32 %v577, 0.03125
          %v603 = vmul.f32 %v579, 0.03125
          %v604 = vmul.f32 %v581, 0.03125
          %v605 = vmul.f32 %v583, 0.03125
          %v606 = vmul.f32 %v585, 0.03125
          %v607 = vmul.f32 %v587, 0.03125
          %v608 = vmul.f32 %v589, 0.03125
          %v609 = vmul.f32 %v591, 0.03125
          %v610 = vmul.f32 %v593, 0.03125
          %v611 = vmul.f32 %v595, 0.03125
          %v612 = vadd.f32 %v596, 1e-05
          %v613 = vadd.f32 %v597, 1e-05
          %v614 = vadd.f32 %v598, 1e-05
          %v615 = vadd.f32 %v599, 1e-05
          %v616 = vadd.f32 %v600, 1e-05
          %v617 = vadd.f32 %v601, 1e-05
          %v618 = vadd.f32 %v602, 1e-05
          %v619 = vadd.f32 %v603, 1e-05
          %v620 = vadd.f32 %v604, 1e-05
          %v621 = vadd.f32 %v605, 1e-05
          %v622 = vadd.f32 %v606, 1e-05
          %v623 = vadd.f32 %v607, 1e-05
          %v624 = vadd.f32 %v608, 1e-05
          %v625 = vadd.f32 %v609, 1e-05
          %v626 = vadd.f32 %v610, 1e-05
          %v627 = vadd.f32 %v611, 1e-05
          %v628 = vrsqrt.pop %v612
          %v629 = vrsqrt.pop %v613
          %v630 = vrsqrt.pop %v614
          %v631 = vrsqrt.pop %v615
          %v632 = vrsqrt.pop %v616
          %v633 = vrsqrt.pop %v617
          %v634 = vrsqrt.pop %v618
          %v635 = vrsqrt.pop %v619
          %v636 = vrsqrt.pop %v620
          %v637 = vrsqrt.pop %v621
          %v638 = vrsqrt.pop %v622
          %v639 = vrsqrt.pop %v623
          %v640 = vrsqrt.pop %v624
          %v641 = vrsqrt.pop %v625
          %v642 = vrsqrt.pop %v626
          %v643 = vrsqrt.pop %v627
          %v644 = vmul.f32 %v532, %v628
          %v645 = vmul.f32 %v533, %v629
          %v646 = vmul.f32 %v534, %v630
          %v647 = vmul.f32 %v535, %v631
          %v648 = vmul.f32 %v536, %v632
          %v649 = vmul.f32 %v537, %v633
          %v650 = vmul.f32 %v538, %v634
          %v651 = vmul.f32 %v539, %v635
          %v652 = vmul.f32 %v540, %v636
          %v653 = vmul.f32 %v541, %v637
          %v654 = vmul.f32 %v542, %v638
          %v655 = vmul.f32 %v543, %v639
          %v656 = vmul.f32 %v544, %v640
          %v657 = vmul.f32 %v545, %v641
          %v658 = vmul.f32 %v546, %v642
          %v659 = vmul.f32 %v547, %v643
          %v661 = vlaneseq
          %v662 = vshrl.u32 %v661, 7
          %v663 = vsub.s32 0, %v662
          %v664 = vrot.slane %v466, %v663
          %v666 = vmul.f32 %v644, %v664
          %v667 = vmul.f32 %v645, %v664
          %v668 = vmul.f32 %v646, %v664
          %v669 = vmul.f32 %v647, %v664
          %v670 = vmul.f32 %v648, %v664
          %v671 = vmul.f32 %v649, %v664
          %v672 = vmul.f32 %v650, %v664
          %v673 = vmul.f32 %v651, %v664
          %v674 = vmul.f32 %v652, %v664
          %v675 = vmul.f32 %v653, %v664
          %v676 = vmul.f32 %v654, %v664
          %v677 = vmul.f32 %v655, %v664
          %v678 = vmul.f32 %v656, %v664
          %v679 = vmul.f32 %v657, %v664
          %v680 = vmul.f32 %v658, %v664
          %v681 = vmul.f32 %v659, %v664
          %v683 = vlaneseq
          %v684 = vshrl.u32 %v683, 7
          %v685 = vsub.s32 0, %v684
          %v686 = vrot.slane %v467, %v685
          %v688 = vadd.f32 %v666, %v686
          %v689 = vadd.f32 %v667, %v686
          %v690 = vadd.f32 %v668, %v686
          %v691 = vadd.f32 %v669, %v686
          %v692 = vadd.f32 %v670, %v686
          %v693 = vadd.f32 %v671, %v686
          %v694 = vadd.f32 %v672, %v686
          %v695 = vadd.f32 %v673, %v686
          %v696 = vadd.f32 %v674, %v686
          %v697 = vadd.f32 %v675, %v686
          %v698 = vadd.f32 %v676, %v686
          %v699 = vadd.f32 %v677, %v686
          %v700 = vadd.f32 %v678, %v686
          %v701 = vadd.f32 %v679, %v686
          %v702 = vadd.f32 %v680, %v686
          %v703 = vadd.f32 %v681, %v686
          %v704 = vpack.c.bf16 %v689, %v688
          %v705 = vpack.c.bf16 %v691, %v690
          %v706 = vpack.c.bf16 %v693, %v692
          %v707 = vpack.c.bf16 %v695, %v694
          %v708 = vpack.c.bf16 %v697, %v696
          %v709 = vpack.c.bf16 %v699, %v698
          %v710 = vpack.c.bf16 %v701, %v700
          %v711 = vpack.c.bf16 %v703, %v702
          %v712 = vld [vmem:[%s1] sm:$0xff]
          %v713 = vld [vmem:[%s1 + $0x8] sm:$0xff]
          %v714 = vld [vmem:[%s1 + $0x10] sm:$0xff]
          %v715 = vld [vmem:[%s1 + $0x18] sm:$0xff]
          %v716 = vld [vmem:[%s1 + $0x20] sm:$0xff]
          %v717 = vld [vmem:[%s1 + $0x28] sm:$0xff]
          %v718 = vld [vmem:[%s1 + $0x30] sm:$0xff]
          %v719 = vld [vmem:[%s1 + $0x38] sm:$0xff]
          %v720 = vld [vmem:[%s1 + $0x40] sm:$0xff]
          %v721 = vld [vmem:[%s1 + $0x48] sm:$0xff]
          %v722 = vld [vmem:[%s1 + $0x50] sm:$0xff]
          %v723 = vld [vmem:[%s1 + $0x58] sm:$0xff]
          %v724 = vld [vmem:[%s1 + $0x60] sm:$0xff]
          %v725 = vld [vmem:[%s1 + $0x68] sm:$0xff]
          %v726 = vld [vmem:[%s1 + $0x70] sm:$0xff]
          %v727 = vld [vmem:[%s1 + $0x78] sm:$0xff]
          %v744 = vunpack.c.l.b16 %v712
          %v745 = vunpack.c.h.b16 %v712
          %v746 = vunpack.c.l.b16 %v713
          %v747 = vunpack.c.h.b16 %v713
          %v748 = vunpack.c.l.b16 %v714
          %v749 = vunpack.c.h.b16 %v714
          %v750 = vunpack.c.l.b16 %v715
          %v751 = vunpack.c.h.b16 %v715
          %v752 = vunpack.c.l.b16 %v716
          %v753 = vunpack.c.h.b16 %v716
          %v754 = vunpack.c.l.b16 %v717
          %v755 = vunpack.c.h.b16 %v717
          %v756 = vunpack.c.l.b16 %v718
          %v757 = vunpack.c.h.b16 %v718
          %v758 = vunpack.c.l.b16 %v719
          %v759 = vunpack.c.h.b16 %v719
          %v760 = vunpack.c.l.b16 %v720
          %v761 = vunpack.c.h.b16 %v720
          %v762 = vunpack.c.l.b16 %v721
          %v763 = vunpack.c.h.b16 %v721
          %v764 = vunpack.c.l.b16 %v722
          %v765 = vunpack.c.h.b16 %v722
          %v766 = vunpack.c.l.b16 %v723
          %v767 = vunpack.c.h.b16 %v723
          %v768 = vunpack.c.l.b16 %v724
          %v769 = vunpack.c.h.b16 %v724
          %v770 = vunpack.c.l.b16 %v725
          %v771 = vunpack.c.h.b16 %v725
          %v772 = vunpack.c.l.b16 %v726
          %v773 = vunpack.c.h.b16 %v726
          %v774 = vunpack.c.l.b16 %v727
          %v775 = vunpack.c.h.b16 %v727
          %v776 = vpack.c.b16 %v746, %v744
          %v777 = vpack.c.b16 %v747, %v745
          %v778 = vpack.c.b16 %v750, %v748
          %v779 = vpack.c.b16 %v751, %v749
          %v780 = vpack.c.b16 %v754, %v752
          %v781 = vpack.c.b16 %v755, %v753
          %v782 = vpack.c.b16 %v758, %v756
          %v783 = vpack.c.b16 %v759, %v757
          %v784 = vpack.c.b16 %v762, %v760
          %v785 = vpack.c.b16 %v763, %v761
          %v786 = vpack.c.b16 %v766, %v764
          %v787 = vpack.c.b16 %v767, %v765
          %v788 = vpack.c.b16 %v770, %v768
          %v789 = vpack.c.b16 %v771, %v769
          %v790 = vpack.c.b16 %v774, %v772
          %v791 = vpack.c.b16 %v775, %v773
          %808 = vmatprep.subr.bf16.mxu0 %v791
          %809 = vmatpush1.bf16.msra.mxu0 %v790
          %810 = vmatprep.subr.bf16.mxu0 %v789
          %811 = vmatpush1.bf16.msra.mxu0 %v788
          %812 = vmatprep.subr.bf16.mxu0 %v787
          %813 = vmatpush1.bf16.msra.mxu0 %v786
          %814 = vmatprep.subr.bf16.mxu0 %v785
          %815 = vmatpush1.bf16.msra.mxu0 %v784
          %816 = vmatprep.subr.bf16.mxu0 %v783
          %817 = vmatpush1.bf16.msra.mxu0 %v782
          %818 = vmatprep.subr.bf16.mxu0 %v781
          %819 = vmatpush1.bf16.msra.mxu0 %v780
          %820 = vmatprep.subr.bf16.mxu0 %v779
          %821 = vmatpush1.bf16.msra.mxu0 %v778
          %822 = vmatprep.subr.bf16.mxu0 %v777
          %823 = vmatpush1.bf16.msra.mxu0 %v776
          %824 = vmatprep.subr.bf16.mxu0 0
          %825 = vmatpush2.bf16.msra.mxu0 0
          %826 = vmatprep.subr.bf16.mxu0 0
          %827 = vmatpush2.bf16.msra.mxu0 0
          %828 = vmatprep.subr.bf16.mxu0 0
          %829 = vmatpush2.bf16.msra.mxu0 0
          %830 = vmatprep.subr.bf16.mxu0 0
          %831 = vmatpush2.bf16.msra.mxu0 0
          %832 = vmatprep.subr.bf16.mxu0 0
          %833 = vmatpush2.bf16.msra.mxu0 0
          %834 = vmatprep.subr.bf16.mxu0 0
          %835 = vmatpush2.bf16.msra.mxu0 0
          %836 = vmatprep.subr.bf16.mxu0 0
          %837 = vmatpush2.bf16.msra.mxu0 0
          %838 = vmatprep.subr.bf16.mxu0 0
          %839 = vmatpush2.bf16.msra.mxu0 0
          %840 = vmatprep.mubr.bf16.mxu0 0
          %841 = vmatmul.mubr.bf16.gmra.mxu0 %v704
          %v842 = vpop.f32.mrf.mxu0
          %v843 = vadd.f32 0.0, %v842
          %v844 = vpop.f32.mrf.mxu0
          %v845 = vadd.f32 0.0, %v844
          %v846 = vpop.f32.mrf.mxu0
          %v847 = vadd.f32 0.0, %v846
          %v848 = vpop.f32.mrf.mxu0
          %v849 = vadd.f32 0.0, %v848
          %850 = vmatprep.mubr.bf16.mxu0 0
          %851 = vmatmul.mubr.bf16.gmra.mxu0 %v705
          %v852 = vpop.f32.mrf.mxu0
          %v853 = vadd.f32 0.0, %v852
          %v854 = vpop.f32.mrf.mxu0
          %v855 = vadd.f32 0.0, %v854
          %v856 = vpop.f32.mrf.mxu0
          %v857 = vadd.f32 0.0, %v856
          %v858 = vpop.f32.mrf.mxu0
          %v859 = vadd.f32 0.0, %v858
          %860 = vmatprep.mubr.bf16.mxu0 0
          %861 = vmatmul.mubr.bf16.gmra.mxu0 %v706
          %v862 = vpop.f32.mrf.mxu0
          %v863 = vadd.f32 0.0, %v862
          %v864 = vpop.f32.mrf.mxu0
          %v865 = vadd.f32 0.0, %v864
          %v866 = vpop.f32.mrf.mxu0
          %v867 = vadd.f32 0.0, %v866
          %v868 = vpop.f32.mrf.mxu0
          %v869 = vadd.f32 0.0, %v868
          %870 = vmatprep.mubr.bf16.mxu0 0
          %871 = vmatmul.mubr.bf16.gmra.mxu0 %v707
          %v872 = vpop.f32.mrf.mxu0
          %v873 = vadd.f32 0.0, %v872
          %v874 = vpop.f32.mrf.mxu0
          %v875 = vadd.f32 0.0, %v874
          %v876 = vpop.f32.mrf.mxu0
          %v877 = vadd.f32 0.0, %v876
          %v878 = vpop.f32.mrf.mxu0
          %v879 = vadd.f32 0.0, %v878
          %880 = vmatprep.mubr.bf16.mxu0 0
          %881 = vmatmul.mubr.bf16.gmra.mxu0 %v708
          %v882 = vpop.f32.mrf.mxu0
          %v883 = vadd.f32 0.0, %v882
          %v884 = vpop.f32.mrf.mxu0
          %v885 = vadd.f32 0.0, %v884
          %v886 = vpop.f32.mrf.mxu0
          %v887 = vadd.f32 0.0, %v886
          %v888 = vpop.f32.mrf.mxu0
          %v889 = vadd.f32 0.0, %v888
          %890 = vmatprep.mubr.bf16.mxu0 0
          %891 = vmatmul.mubr.bf16.gmra.mxu0 %v709
          %v892 = vpop.f32.mrf.mxu0
          %v893 = vadd.f32 0.0, %v892
          %v894 = vpop.f32.mrf.mxu0
          %v895 = vadd.f32 0.0, %v894
          %v896 = vpop.f32.mrf.mxu0
          %v897 = vadd.f32 0.0, %v896
          %v898 = vpop.f32.mrf.mxu0
          %v899 = vadd.f32 0.0, %v898
          %900 = vmatprep.mubr.bf16.mxu0 0
          %901 = vmatmul.mubr.bf16.gmra.mxu0 %v710
          %v902 = vpop.f32.mrf.mxu0
          %v903 = vadd.f32 0.0, %v902
          %v904 = vpop.f32.mrf.mxu0
          %v905 = vadd.f32 0.0, %v904
          %v906 = vpop.f32.mrf.mxu0
          %v907 = vadd.f32 0.0, %v906
          %v908 = vpop.f32.mrf.mxu0
          %v909 = vadd.f32 0.0, %v908
          %910 = vmatprep.mubr.bf16.mxu0 0
          %911 = vmatmul.mubr.bf16.gmra.mxu0 %v711
          %v912 = vpop.f32.mrf.mxu0
          %v913 = vadd.f32 0.0, %v912
          %v914 = vpop.f32.mrf.mxu0
          %v915 = vadd.f32 0.0, %v914
          %v916 = vpop.f32.mrf.mxu0
          %v917 = vadd.f32 0.0, %v916
          %v918 = vpop.f32.mrf.mxu0
          %v919 = vadd.f32 0.0, %v918
          %920 = vdwg.mxu0
          %v921 = vpack.c.bf16 %v847, %v843
          %v922 = vpack.c.bf16 %v849, %v845
          %v923 = vpack.c.bf16 %v857, %v853
          %v924 = vpack.c.bf16 %v859, %v855
          %v925 = vpack.c.bf16 %v867, %v863
          %v926 = vpack.c.bf16 %v869, %v865
          %v927 = vpack.c.bf16 %v877, %v873
          %v928 = vpack.c.bf16 %v879, %v875
          %v929 = vpack.c.bf16 %v887, %v883
          %v930 = vpack.c.bf16 %v889, %v885
          %v931 = vpack.c.bf16 %v897, %v893
          %v932 = vpack.c.bf16 %v899, %v895
          %v933 = vpack.c.bf16 %v907, %v903
          %v934 = vpack.c.bf16 %v909, %v905
          %v935 = vpack.c.bf16 %v917, %v913
          %v936 = vpack.c.bf16 %v919, %v915
          %v945 = vunpack.c.l.b16 %v921
          %v946 = vunpack.c.h.b16 %v921
          %v947 = vunpack.c.l.b16 %v923
          %v948 = vunpack.c.h.b16 %v923
          %v949 = vunpack.c.l.b16 %v925
          %v950 = vunpack.c.h.b16 %v925
          %v951 = vunpack.c.l.b16 %v927
          %v952 = vunpack.c.h.b16 %v927
          %v953 = vunpack.c.l.b16 %v929
          %v954 = vunpack.c.h.b16 %v929
          %v955 = vunpack.c.l.b16 %v931
          %v956 = vunpack.c.h.b16 %v931
          %v957 = vunpack.c.l.b16 %v933
          %v958 = vunpack.c.h.b16 %v933
          %v959 = vunpack.c.l.b16 %v935
          %v960 = vunpack.c.h.b16 %v935
          %v961 = vpack.c.b16 %v945, %v945
          %v962 = vpack.c.b16 %v946, %v946
          %v963 = vpack.c.b16 %v947, %v947
          %v964 = vpack.c.b16 %v948, %v948
          %v965 = vpack.c.b16 %v949, %v949
          %v966 = vpack.c.b16 %v950, %v950
          %v967 = vpack.c.b16 %v951, %v951
          %v968 = vpack.c.b16 %v952, %v952
          %v969 = vpack.c.b16 %v953, %v953
          %v970 = vpack.c.b16 %v954, %v954
          %v971 = vpack.c.b16 %v955, %v955
          %v972 = vpack.c.b16 %v956, %v956
          %v973 = vpack.c.b16 %v957, %v957
          %v974 = vpack.c.b16 %v958, %v958
          %v975 = vpack.c.b16 %v959, %v959
          %v976 = vpack.c.b16 %v960, %v960
          %993 = vst [vmem:[#allocation2] sm:$0xf] %v961
          %994 = vst [vmem:[#allocation2 + $0x4] sm:$0xf] %v962
          %995 = vst [vmem:[#allocation2 + $0x8] sm:$0xf] %v963
          %996 = vst [vmem:[#allocation2 + $0xc] sm:$0xf] %v964
          %997 = vst [vmem:[#allocation2 + $0x10] sm:$0xf] %v965
          %998 = vst [vmem:[#allocation2 + $0x14] sm:$0xf] %v966
          %999 = vst [vmem:[#allocation2 + $0x18] sm:$0xf] %v967
          %1000 = vst [vmem:[#allocation2 + $0x1c] sm:$0xf] %v968
          %1001 = vst [vmem:[#allocation2 + $0x20] sm:$0xf] %v969
          %1002 = vst [vmem:[#allocation2 + $0x24] sm:$0xf] %v970
          %1003 = vst [vmem:[#allocation2 + $0x28] sm:$0xf] %v971
          %1004 = vst [vmem:[#allocation2 + $0x2c] sm:$0xf] %v972
          %1005 = vst [vmem:[#allocation2 + $0x30] sm:$0xf] %v973
          %1006 = vst [vmem:[#allocation2 + $0x34] sm:$0xf] %v974
          %1007 = vst [vmem:[#allocation2 + $0x38] sm:$0xf] %v975
          %1008 = vst [vmem:[#allocation2 + $0x3c] sm:$0xf] %v976
          %v1017 = vunpack.c.l.b16 %v922
          %v1018 = vunpack.c.h.b16 %v922
          %v1019 = vunpack.c.l.b16 %v924
          %v1020 = vunpack.c.h.b16 %v924
          %v1021 = vunpack.c.l.b16 %v926
          %v1022 = vunpack.c.h.b16 %v926
          %v1023 = vunpack.c.l.b16 %v928
          %v1024 = vunpack.c.h.b16 %v928
          %v1025 = vunpack.c.l.b16 %v930
          %v1026 = vunpack.c.h.b16 %v930
          %v1027 = vunpack.c.l.b16 %v932
          %v1028 = vunpack.c.h.b16 %v932
          %v1029 = vunpack.c.l.b16 %v934
          %v1030 = vunpack.c.h.b16 %v934
          %v1031 = vunpack.c.l.b16 %v936
          %v1032 = vunpack.c.h.b16 %v936
          %v1033 = vpack.c.b16 %v1017, %v1017
          %v1034 = vpack.c.b16 %v1018, %v1018
          %v1035 = vpack.c.b16 %v1019, %v1019
          %v1036 = vpack.c.b16 %v1020, %v1020
          %v1037 = vpack.c.b16 %v1021, %v1021
          %v1038 = vpack.c.b16 %v1022, %v1022
          %v1039 = vpack.c.b16 %v1023, %v1023
          %v1040 = vpack.c.b16 %v1024, %v1024
          %v1041 = vpack.c.b16 %v1025, %v1025
          %v1042 = vpack.c.b16 %v1026, %v1026
          %v1043 = vpack.c.b16 %v1027, %v1027
          %v1044 = vpack.c.b16 %v1028, %v1028
          %v1045 = vpack.c.b16 %v1029, %v1029
          %v1046 = vpack.c.b16 %v1030, %v1030
          %v1047 = vpack.c.b16 %v1031, %v1031
          %v1048 = vpack.c.b16 %v1032, %v1032
          %1065 = vst [vmem:[#allocation2 + $0x40] sm:$0xf] %v1033
          %1066 = vst [vmem:[#allocation2 + $0x44] sm:$0xf] %v1034
          %1067 = vst [vmem:[#allocation2 + $0x48] sm:$0xf] %v1035
          %1068 = vst [vmem:[#allocation2 + $0x4c] sm:$0xf] %v1036
          %1069 = vst [vmem:[#allocation2 + $0x50] sm:$0xf] %v1037
          %1070 = vst [vmem:[#allocation2 + $0x54] sm:$0xf] %v1038
          %1071 = vst [vmem:[#allocation2 + $0x58] sm:$0xf] %v1039
          %1072 = vst [vmem:[#allocation2 + $0x5c] sm:$0xf] %v1040
          %1073 = vst [vmem:[#allocation2 + $0x60] sm:$0xf] %v1041
          %1074 = vst [vmem:[#allocation2 + $0x64] sm:$0xf] %v1042
          %1075 = vst [vmem:[#allocation2 + $0x68] sm:$0xf] %v1043
          %1076 = vst [vmem:[#allocation2 + $0x6c] sm:$0xf] %v1044
          %1077 = vst [vmem:[#allocation2 + $0x70] sm:$0xf] %v1045
          %1078 = vst [vmem:[#allocation2 + $0x74] sm:$0xf] %v1046
          %1079 = vst [vmem:[#allocation2 + $0x78] sm:$0xf] %v1047
          %1080 = vst [vmem:[#allocation2 + $0x7c] sm:$0xf] %v1048
        $region76: #{fwd.1} parent=63 // pred_fallthru
          _
        %s1081 = smul.u32 %s29, 128
        %s1082 = scalar_lea.vmem %s429, %s1081
        %v1083 = vld [vmem:[%s1082] sm:$0xff]
        %v1084 = vld [vmem:[%s1082 + $0x8] sm:$0xff]
        %v1085 = vld [vmem:[%s1082 + $0x10] sm:$0xff]
        %v1086 = vld [vmem:[%s1082 + $0x18] sm:$0xff]
        %v1087 = vld [vmem:[%s1082 + $0x20] sm:$0xff]
        %v1088 = vld [vmem:[%s1082 + $0x28] sm:$0xff]
        %v1089 = vld [vmem:[%s1082 + $0x30] sm:$0xff]
        %v1090 = vld [vmem:[%s1082 + $0x38] sm:$0xff]
        %v1091 = vld [vmem:[%s1082 + $0x40] sm:$0xff]
        %v1092 = vld [vmem:[%s1082 + $0x48] sm:$0xff]
        %v1093 = vld [vmem:[%s1082 + $0x50] sm:$0xff]
        %v1094 = vld [vmem:[%s1082 + $0x58] sm:$0xff]
        %v1095 = vld [vmem:[%s1082 + $0x60] sm:$0xff]
        %v1096 = vld [vmem:[%s1082 + $0x68] sm:$0xff]
        %v1097 = vld [vmem:[%s1082 + $0x70] sm:$0xff]
        %v1098 = vld [vmem:[%s1082 + $0x78] sm:$0xff]
        %s1099 = sshra.s32 %s1081, 3
        %s1100 = sand.u32 %s1081, 7
        %s1101 = smul.u32 %s1099, 2
        %s1102 = smul.addr %s1101, 4
        %s1103 = scalar_lea.vmem %s2, %s1102
        %v1104 = vld [vmem:[%s1103] sm:$0xff]
        %v1105 = vld [vmem:[%s1103 + $0x8] sm:$0xff]
        %v1106 = vld [vmem:[%s1103 + $0x10] sm:$0xff]
        %v1107 = vld [vmem:[%s1103 + $0x18] sm:$0xff]
        %v1108 = vld [vmem:[%s1103 + $0x20] sm:$0xff]
        %v1109 = vld [vmem:[%s1103 + $0x28] sm:$0xff]
        %v1110 = vld [vmem:[%s1103 + $0x30] sm:$0xff]
        %v1111 = vld [vmem:[%s1103 + $0x38] sm:$0xff]
        %v1112 = vld [vmem:[%s1103 + $0x40] sm:$0xff]
        %v1113 = vld [vmem:[%s1103 + $0x48] sm:$0xff]
        %v1114 = vld [vmem:[%s1103 + $0x50] sm:$0xff]
        %v1115 = vld [vmem:[%s1103 + $0x58] sm:$0xff]
        %v1116 = vld [vmem:[%s1103 + $0x60] sm:$0xff]
        %v1117 = vld [vmem:[%s1103 + $0x68] sm:$0xff]
        %v1118 = vld [vmem:[%s1103 + $0x70] sm:$0xff]
        %v1119 = vld [vmem:[%s1103 + $0x78] sm:$0xff]
        %v1120 = vld [vmem:[#allocation2] sm:$0xf]
        %v1121 = vld [vmem:[#allocation2 + $0x4] sm:$0xf]
        %v1122 = vld [vmem:[#allocation2 + $0x8] sm:$0xf]
        %v1123 = vld [vmem:[#allocation2 + $0xc] sm:$0xf]
        %v1124 = vld [vmem:[#allocation2 + $0x10] sm:$0xf]
        %v1125 = vld [vmem:[#allocation2 + $0x14] sm:$0xf]
        %v1126 = vld [vmem:[#allocation2 + $0x18] sm:$0xf]
        %v1127 = vld [vmem:[#allocation2 + $0x1c] sm:$0xf]
        %v1128 = vld [vmem:[#allocation2 + $0x20] sm:$0xf]
        %v1129 = vld [vmem:[#allocation2 + $0x24] sm:$0xf]
        %v1130 = vld [vmem:[#allocation2 + $0x28] sm:$0xf]
        %v1131 = vld [vmem:[#allocation2 + $0x2c] sm:$0xf]
        %v1132 = vld [vmem:[#allocation2 + $0x30] sm:$0xf]
        %v1133 = vld [vmem:[#allocation2 + $0x34] sm:$0xf]
        %v1134 = vld [vmem:[#allocation2 + $0x38] sm:$0xf]
        %v1135 = vld [vmem:[#allocation2 + $0x3c] sm:$0xf]
        %v1136 = vld [vmem:[#allocation2 + $0x40] sm:$0xf]
        %v1137 = vld [vmem:[#allocation2 + $0x44] sm:$0xf]
        %v1138 = vld [vmem:[#allocation2 + $0x48] sm:$0xf]
        %v1139 = vld [vmem:[#allocation2 + $0x4c] sm:$0xf]
        %v1140 = vld [vmem:[#allocation2 + $0x50] sm:$0xf]
        %v1141 = vld [vmem:[#allocation2 + $0x54] sm:$0xf]
        %v1142 = vld [vmem:[#allocation2 + $0x58] sm:$0xf]
        %v1143 = vld [vmem:[#allocation2 + $0x5c] sm:$0xf]
        %v1144 = vld [vmem:[#allocation2 + $0x60] sm:$0xf]
        %v1145 = vld [vmem:[#allocation2 + $0x64] sm:$0xf]
        %v1146 = vld [vmem:[#allocation2 + $0x68] sm:$0xf]
        %v1147 = vld [vmem:[#allocation2 + $0x6c] sm:$0xf]
        %v1148 = vld [vmem:[#allocation2 + $0x70] sm:$0xf]
        %v1149 = vld [vmem:[#allocation2 + $0x74] sm:$0xf]
        %v1150 = vld [vmem:[#allocation2 + $0x78] sm:$0xf]
        %v1151 = vld [vmem:[#allocation2 + $0x7c] sm:$0xf]
        %v1168 = vunpack.c.l.b16 %v1104
        %v1169 = vunpack.c.h.b16 %v1104
        %v1170 = vunpack.c.l.b16 %v1105
        %v1171 = vunpack.c.h.b16 %v1105
        %v1172 = vunpack.c.l.b16 %v1106
        %v1173 = vunpack.c.h.b16 %v1106
        %v1174 = vunpack.c.l.b16 %v1107
        %v1175 = vunpack.c.h.b16 %v1107
        %v1176 = vunpack.c.l.b16 %v1108
        %v1177 = vunpack.c.h.b16 %v1108
        %v1178 = vunpack.c.l.b16 %v1109
        %v1179 = vunpack.c.h.b16 %v1109
        %v1180 = vunpack.c.l.b16 %v1110
        %v1181 = vunpack.c.h.b16 %v1110
        %v1182 = vunpack.c.l.b16 %v1111
        %v1183 = vunpack.c.h.b16 %v1111
        %v1184 = vunpack.c.l.b16 %v1112
        %v1185 = vunpack.c.h.b16 %v1112
        %v1186 = vunpack.c.l.b16 %v1113
        %v1187 = vunpack.c.h.b16 %v1113
        %v1188 = vunpack.c.l.b16 %v1114
        %v1189 = vunpack.c.h.b16 %v1114
        %v1190 = vunpack.c.l.b16 %v1115
        %v1191 = vunpack.c.h.b16 %v1115
        %v1192 = vunpack.c.l.b16 %v1116
        %v1193 = vunpack.c.h.b16 %v1116
        %v1194 = vunpack.c.l.b16 %v1117
        %v1195 = vunpack.c.h.b16 %v1117
        %v1196 = vunpack.c.l.b16 %v1118
        %v1197 = vunpack.c.h.b16 %v1118
        %v1198 = vunpack.c.l.b16 %v1119
        %v1199 = vunpack.c.h.b16 %v1119
        %v1200 = vpack.c.b16 %v1170, %v1168
        %v1201 = vpack.c.b16 %v1171, %v1169
        %v1202 = vpack.c.b16 %v1174, %v1172
        %v1203 = vpack.c.b16 %v1175, %v1173
        %v1204 = vpack.c.b16 %v1178, %v1176
        %v1205 = vpack.c.b16 %v1179, %v1177
        %v1206 = vpack.c.b16 %v1182, %v1180
        %v1207 = vpack.c.b16 %v1183, %v1181
        %v1208 = vpack.c.b16 %v1186, %v1184
        %v1209 = vpack.c.b16 %v1187, %v1185
        %v1210 = vpack.c.b16 %v1190, %v1188
        %v1211 = vpack.c.b16 %v1191, %v1189
        %v1212 = vpack.c.b16 %v1194, %v1192
        %v1213 = vpack.c.b16 %v1195, %v1193
        %v1214 = vpack.c.b16 %v1198, %v1196
        %v1215 = vpack.c.b16 %v1199, %v1197
        %v1264 = vunpack.c.l.b16 %v1120
        %v1265 = vunpack.c.l.b16 %v1121
        %v1266 = vunpack.c.l.b16 %v1122
        %v1267 = vunpack.c.l.b16 %v1123
        %v1268 = vunpack.c.l.b16 %v1124
        %v1269 = vunpack.c.l.b16 %v1125
        %v1270 = vunpack.c.l.b16 %v1126
        %v1271 = vunpack.c.l.b16 %v1127
        %v1272 = vunpack.c.l.b16 %v1128
        %v1273 = vunpack.c.l.b16 %v1129
        %v1274 = vunpack.c.l.b16 %v1130
        %v1275 = vunpack.c.l.b16 %v1131
        %v1276 = vunpack.c.l.b16 %v1132
        %v1277 = vunpack.c.l.b16 %v1133
        %v1278 = vunpack.c.l.b16 %v1134
        %v1279 = vunpack.c.l.b16 %v1135
        %v1280 = vunpack.c.l.b16 %v1136
        %v1281 = vunpack.c.l.b16 %v1137
        %v1282 = vunpack.c.l.b16 %v1138
        %v1283 = vunpack.c.l.b16 %v1139
        %v1284 = vunpack.c.l.b16 %v1140
        %v1285 = vunpack.c.l.b16 %v1141
        %v1286 = vunpack.c.l.b16 %v1142
        %v1287 = vunpack.c.l.b16 %v1143
        %v1288 = vunpack.c.l.b16 %v1144
        %v1289 = vunpack.c.l.b16 %v1145
        %v1290 = vunpack.c.l.b16 %v1146
        %v1291 = vunpack.c.l.b16 %v1147
        %v1292 = vunpack.c.l.b16 %v1148
        %v1293 = vunpack.c.l.b16 %v1149
        %v1294 = vunpack.c.l.b16 %v1150
        %v1295 = vunpack.c.l.b16 %v1151
        %v1296 = vpack.c.b16 %v1265, %v1264
        %v1297 = vpack.c.b16 %v1267, %v1266
        %v1298 = vpack.c.b16 %v1269, %v1268
        %v1299 = vpack.c.b16 %v1271, %v1270
        %v1300 = vpack.c.b16 %v1273, %v1272
        %v1301 = vpack.c.b16 %v1275, %v1274
        %v1302 = vpack.c.b16 %v1277, %v1276
        %v1303 = vpack.c.b16 %v1279, %v1278
        %v1304 = vpack.c.b16 %v1281, %v1280
        %v1305 = vpack.c.b16 %v1283, %v1282
        %v1306 = vpack.c.b16 %v1285, %v1284
        %v1307 = vpack.c.b16 %v1287, %v1286
        %v1308 = vpack.c.b16 %v1289, %v1288
        %v1309 = vpack.c.b16 %v1291, %v1290
        %v1310 = vpack.c.b16 %v1293, %v1292
        %v1311 = vpack.c.b16 %v1295, %v1294
        %1328 = vmatprep.subr.bf16.mxu0 0
        %1329 = vmatpush1.bf16.msra.mxu0 %v1303
        %1330 = vmatprep.subr.bf16.mxu0 0
        %1331 = vmatpush1.bf16.msra.mxu0 %v1302
        %1332 = vmatprep.subr.bf16.mxu0 0
        %1333 = vmatpush1.bf16.msra.mxu0 %v1301
        %1334 = vmatprep.subr.bf16.mxu0 0
        %1335 = vmatpush1.bf16.msra.mxu0 %v1300
        %1336 = vmatprep.subr.bf16.mxu0 0
        %1337 = vmatpush1.bf16.msra.mxu0 %v1299
        %1338 = vmatprep.subr.bf16.mxu0 0
        %1339 = vmatpush1.bf16.msra.mxu0 %v1298
        %1340 = vmatprep.subr.bf16.mxu0 0
        %1341 = vmatpush1.bf16.msra.mxu0 %v1297
        %1342 = vmatprep.subr.bf16.mxu0 0
        %1343 = vmatpush1.bf16.msra.mxu0 %v1296
        %1344 = vmatprep.subr.bf16.mxu0 0
        %1345 = vmatpush2.bf16.msra.mxu0 %v1311
        %1346 = vmatprep.subr.bf16.mxu0 0
        %1347 = vmatpush2.bf16.msra.mxu0 %v1310
        %1348 = vmatprep.subr.bf16.mxu0 0
        %1349 = vmatpush2.bf16.msra.mxu0 %v1309
        %1350 = vmatprep.subr.bf16.mxu0 0
        %1351 = vmatpush2.bf16.msra.mxu0 %v1308
        %1352 = vmatprep.subr.bf16.mxu0 0
        %1353 = vmatpush2.bf16.msra.mxu0 %v1307
        %1354 = vmatprep.subr.bf16.mxu0 0
        %1355 = vmatpush2.bf16.msra.mxu0 %v1306
        %1356 = vmatprep.subr.bf16.mxu0 0
        %1357 = vmatpush2.bf16.msra.mxu0 %v1305
        %1358 = vmatprep.subr.bf16.mxu0 0
        %1359 = vmatpush2.bf16.msra.mxu0 %v1304
        %1360 = vmatprep.mubr.bf16.mxu0 %v1201
        %1361 = vmatmul.mubr.bf16.gmra.mxu0 %v1200
        %v1362 = vpop.f32.mrf.mxu0
        %v1363 = vadd.f32 0.0, %v1362
        %v1364 = vpop.f32.mrf.mxu0
        %v1365 = vpop.f32.mrf.mxu0
        %v1366 = vadd.f32 0.0, %v1365
        %v1367 = vpop.f32.mrf.mxu0
        %1368 = vmatprep.mubr.bf16.mxu0 %v1203
        %1369 = vmatmul.mubr.bf16.gmra.mxu0 %v1202
        %v1370 = vpop.f32.mrf.mxu0
        %v1371 = vadd.f32 0.0, %v1370
        %v1372 = vpop.f32.mrf.mxu0
        %v1373 = vpop.f32.mrf.mxu0
        %v1374 = vadd.f32 0.0, %v1373
        %v1375 = vpop.f32.mrf.mxu0
        %1376 = vmatprep.mubr.bf16.mxu0 %v1205
        %1377 = vmatmul.mubr.bf16.gmra.mxu0 %v1204
        %v1378 = vpop.f32.mrf.mxu0
        %v1379 = vadd.f32 0.0, %v1378
        %v1380 = vpop.f32.mrf.mxu0
        %v1381 = vpop.f32.mrf.mxu0
        %v1382 = vadd.f32 0.0, %v1381
        %v1383 = vpop.f32.mrf.mxu0
        %1384 = vmatprep.mubr.bf16.mxu0 %v1207
        %1385 = vmatmul.mubr.bf16.gmra.mxu0 %v1206
        %v1386 = vpop.f32.mrf.mxu0
        %v1387 = vadd.f32 0.0, %v1386
        %v1388 = vpop.f32.mrf.mxu0
        %v1389 = vpop.f32.mrf.mxu0
        %v1390 = vadd.f32 0.0, %v1389
        %v1391 = vpop.f32.mrf.mxu0
        %1392 = vmatprep.mubr.bf16.mxu0 %v1209
        %1393 = vmatmul.mubr.bf16.gmra.mxu0 %v1208
        %v1394 = vpop.f32.mrf.mxu0
        %v1395 = vadd.f32 0.0, %v1394
        %v1396 = vpop.f32.mrf.mxu0
        %v1397 = vpop.f32.mrf.mxu0
        %v1398 = vadd.f32 0.0, %v1397
        %v1399 = vpop.f32.mrf.mxu0
        %1400 = vmatprep.mubr.bf16.mxu0 %v1211
        %1401 = vmatmul.mubr.bf16.gmra.mxu0 %v1210
        %v1402 = vpop.f32.mrf.mxu0
        %v1403 = vadd.f32 0.0, %v1402
        %v1404 = vpop.f32.mrf.mxu0
        %v1405 = vpop.f32.mrf.mxu0
        %v1406 = vadd.f32 0.0, %v1405
        %v1407 = vpop.f32.mrf.mxu0
        %1408 = vmatprep.mubr.bf16.mxu0 %v1213
        %1409 = vmatmul.mubr.bf16.gmra.mxu0 %v1212
        %v1410 = vpop.f32.mrf.mxu0
        %v1411 = vadd.f32 0.0, %v1410
        %v1412 = vpop.f32.mrf.mxu0
        %v1413 = vpop.f32.mrf.mxu0
        %v1414 = vadd.f32 0.0, %v1413
        %v1415 = vpop.f32.mrf.mxu0
        %1416 = vmatprep.mubr.bf16.mxu0 %v1215
        %1417 = vmatmul.mubr.bf16.gmra.mxu0 %v1214
        %v1418 = vpop.f32.mrf.mxu0
        %v1419 = vadd.f32 0.0, %v1418
        %v1420 = vpop.f32.mrf.mxu0
        %v1421 = vpop.f32.mrf.mxu0
        %v1422 = vadd.f32 0.0, %v1421
        %v1423 = vpop.f32.mrf.mxu0
        %1424 = vdwg.mxu0
        %v1425 = vadd.f32 %v1083, %v1363
        %v1426 = vadd.f32 %v1084, %v1366
        %v1427 = vadd.f32 %v1085, %v1371
        %v1428 = vadd.f32 %v1086, %v1374
        %v1429 = vadd.f32 %v1087, %v1379
        %v1430 = vadd.f32 %v1088, %v1382
        %v1431 = vadd.f32 %v1089, %v1387
        %v1432 = vadd.f32 %v1090, %v1390
        %v1433 = vadd.f32 %v1091, %v1395
        %v1434 = vadd.f32 %v1092, %v1398
        %v1435 = vadd.f32 %v1093, %v1403
        %v1436 = vadd.f32 %v1094, %v1406
        %v1437 = vadd.f32 %v1095, %v1411
        %v1438 = vadd.f32 %v1096, %v1414
        %v1439 = vadd.f32 %v1097, %v1419
        %v1440 = vadd.f32 %v1098, %v1422
        %v1441 = vld [vmem:[%s5] sm:$0x1]
        %v1442 = vld [vmem:[%s6] sm:$0x1]
        %1443 = vadd.xlane.f32.xlu0 %v1425
        %v1444 = vpop.xlane.xlu0 %1443
        %1445 = vadd.xlane.f32.xlu0 %v1426
        %v1446 = vpop.xlane.xlu0 %1445
        %1447 = vadd.xlane.f32.xlu0 %v1427
        %v1448 = vpop.xlane.xlu0 %1447
        %1449 = vadd.xlane.f32.xlu0 %v1428
        %v1450 = vpop.xlane.xlu0 %1449
        %1451 = vadd.xlane.f32.xlu0 %v1429
        %v1452 = vpop.xlane.xlu0 %1451
        %1453 = vadd.xlane.f32.xlu0 %v1430
        %v1454 = vpop.xlane.xlu0 %1453
        %1455 = vadd.xlane.f32.xlu0 %v1431
        %v1456 = vpop.xlane.xlu0 %1455
        %1457 = vadd.xlane.f32.xlu0 %v1432
        %v1458 = vpop.xlane.xlu0 %1457
        %1459 = vadd.xlane.f32.xlu0 %v1433
        %v1460 = vpop.xlane.xlu0 %1459
        %1461 = vadd.xlane.f32.xlu0 %v1434
        %v1462 = vpop.xlane.xlu0 %1461
        %1463 = vadd.xlane.f32.xlu0 %v1435
        %v1464 = vpop.xlane.xlu0 %1463
        %1465 = vadd.xlane.f32.xlu0 %v1436
        %v1466 = vpop.xlane.xlu0 %1465
        %1467 = vadd.xlane.f32.xlu0 %v1437
        %v1468 = vpop.xlane.xlu0 %1467
        %1469 = vadd.xlane.f32.xlu0 %v1438
        %v1470 = vpop.xlane.xlu0 %1469
        %1471 = vadd.xlane.f32.xlu0 %v1439
        %v1472 = vpop.xlane.xlu0 %1471
        %1473 = vadd.xlane.f32.xlu0 %v1440
        %v1474 = vpop.xlane.xlu0 %1473
        %v1475 = vmul.f32 %v1444, 0.03125
        %v1476 = vmul.f32 %v1446, 0.03125
        %v1477 = vmul.f32 %v1448, 0.03125
        %v1478 = vmul.f32 %v1450, 0.03125
        %v1479 = vmul.f32 %v1452, 0.03125
        %v1480 = vmul.f32 %v1454, 0.03125
        %v1481 = vmul.f32 %v1456, 0.03125
        %v1482 = vmul.f32 %v1458, 0.03125
        %v1483 = vmul.f32 %v1460, 0.03125
        %v1484 = vmul.f32 %v1462, 0.03125
        %v1485 = vmul.f32 %v1464, 0.03125
        %v1486 = vmul.f32 %v1466, 0.03125
        %v1487 = vmul.f32 %v1468, 0.03125
        %v1488 = vmul.f32 %v1470, 0.03125
        %v1489 = vmul.f32 %v1472, 0.03125
        %v1490 = vmul.f32 %v1474, 0.03125
        %v1491 = vsub.f32 %v1425, %v1475
        %v1492 = vsub.f32 %v1426, %v1476
        %v1493 = vsub.f32 %v1427, %v1477
        %v1494 = vsub.f32 %v1428, %v1478
        %v1495 = vsub.f32 %v1429, %v1479
        %v1496 = vsub.f32 %v1430, %v1480
        %v1497 = vsub.f32 %v1431, %v1481
        %v1498 = vsub.f32 %v1432, %v1482
        %v1499 = vsub.f32 %v1433, %v1483
        %v1500 = vsub.f32 %v1434, %v1484
        %v1501 = vsub.f32 %v1435, %v1485
        %v1502 = vsub.f32 %v1436, %v1486
        %v1503 = vsub.f32 %v1437, %v1487
        %v1504 = vsub.f32 %v1438, %v1488
        %v1505 = vsub.f32 %v1439, %v1489
        %v1506 = vsub.f32 %v1440, %v1490
        %v1507 = vmul.f32 %v1491, %v445
        %v1508 = vmul.f32 %v1492, %v445
        %v1509 = vmul.f32 %v1493, %v445
        %v1510 = vmul.f32 %v1494, %v445
        %v1511 = vmul.f32 %v1495, %v445
        %v1512 = vmul.f32 %v1496, %v445
        %v1513 = vmul.f32 %v1497, %v445
        %v1514 = vmul.f32 %v1498, %v445
        %v1515 = vmul.f32 %v1499, %v445
        %v1516 = vmul.f32 %v1500, %v445
        %v1517 = vmul.f32 %v1501, %v445
        %v1518 = vmul.f32 %v1502, %v445
        %v1519 = vmul.f32 %v1503, %v445
        %v1520 = vmul.f32 %v1504, %v445
        %v1521 = vmul.f32 %v1505, %v445
        %v1522 = vmul.f32 %v1506, %v445
        %v1523 = vmul.f32 %v1507, %v1507
        %v1524 = vmul.f32 %v1508, %v1508
        %v1525 = vmul.f32 %v1509, %v1509
        %v1526 = vmul.f32 %v1510, %v1510
        %v1527 = vmul.f32 %v1511, %v1511
        %v1528 = vmul.f32 %v1512, %v1512
        %v1529 = vmul.f32 %v1513, %v1513
        %v1530 = vmul.f32 %v1514, %v1514
        %v1531 = vmul.f32 %v1515, %v1515
        %v1532 = vmul.f32 %v1516, %v1516
        %v1533 = vmul.f32 %v1517, %v1517
        %v1534 = vmul.f32 %v1518, %v1518
        %v1535 = vmul.f32 %v1519, %v1519
        %v1536 = vmul.f32 %v1520, %v1520
        %v1537 = vmul.f32 %v1521, %v1521
        %v1538 = vmul.f32 %v1522, %v1522
        %1539 = vadd.xlane.f32.xlu0 %v1523
        %v1540 = vpop.xlane.xlu0 %1539
        %1541 = vadd.xlane.f32.xlu0 %v1524
        %v1542 = vpop.xlane.xlu0 %1541
        %1543 = vadd.xlane.f32.xlu0 %v1525
        %v1544 = vpop.xlane.xlu0 %1543
        %1545 = vadd.xlane.f32.xlu0 %v1526
        %v1546 = vpop.xlane.xlu0 %1545
        %1547 = vadd.xlane.f32.xlu0 %v1527
        %v1548 = vpop.xlane.xlu0 %1547
        %1549 = vadd.xlane.f32.xlu0 %v1528
        %v1550 = vpop.xlane.xlu0 %1549
        %1551 = vadd.xlane.f32.xlu0 %v1529
        %v1552 = vpop.xlane.xlu0 %1551
        %1553 = vadd.xlane.f32.xlu0 %v1530
        %v1554 = vpop.xlane.xlu0 %1553
        %1555 = vadd.xlane.f32.xlu0 %v1531
        %v1556 = vpop.xlane.xlu0 %1555
        %1557 = vadd.xlane.f32.xlu0 %v1532
        %v1558 = vpop.xlane.xlu0 %1557
        %1559 = vadd.xlane.f32.xlu0 %v1533
        %v1560 = vpop.xlane.xlu0 %1559
        %1561 = vadd.xlane.f32.xlu0 %v1534
        %v1562 = vpop.xlane.xlu0 %1561
        %1563 = vadd.xlane.f32.xlu0 %v1535
        %v1564 = vpop.xlane.xlu0 %1563
        %1565 = vadd.xlane.f32.xlu0 %v1536
        %v1566 = vpop.xlane.xlu0 %1565
        %1567 = vadd.xlane.f32.xlu0 %v1537
        %v1568 = vpop.xlane.xlu0 %1567
        %1569 = vadd.xlane.f32.xlu0 %v1538
        %v1570 = vpop.xlane.xlu0 %1569
        %v1571 = vmul.f32 %v1540, 0.03125
        %v1572 = vmul.f32 %v1542, 0.03125
        %v1573 = vmul.f32 %v1544, 0.03125
        %v1574 = vmul.f32 %v1546, 0.03125
        %v1575 = vmul.f32 %v1548, 0.03125
        %v1576 = vmul.f32 %v1550, 0.03125
        %v1577 = vmul.f32 %v1552, 0.03125
        %v1578 = vmul.f32 %v1554, 0.03125
        %v1579 = vmul.f32 %v1556, 0.03125
        %v1580 = vmul.f32 %v1558, 0.03125
        %v1581 = vmul.f32 %v1560, 0.03125
        %v1582 = vmul.f32 %v1562, 0.03125
        %v1583 = vmul.f32 %v1564, 0.03125
        %v1584 = vmul.f32 %v1566, 0.03125
        %v1585 = vmul.f32 %v1568, 0.03125
        %v1586 = vmul.f32 %v1570, 0.03125
        %v1587 = vadd.f32 %v1571, 1e-05
        %v1588 = vadd.f32 %v1572, 1e-05
        %v1589 = vadd.f32 %v1573, 1e-05
        %v1590 = vadd.f32 %v1574, 1e-05
        %v1591 = vadd.f32 %v1575, 1e-05
        %v1592 = vadd.f32 %v1576, 1e-05
        %v1593 = vadd.f32 %v1577, 1e-05
        %v1594 = vadd.f32 %v1578, 1e-05
        %v1595 = vadd.f32 %v1579, 1e-05
        %v1596 = vadd.f32 %v1580, 1e-05
        %v1597 = vadd.f32 %v1581, 1e-05
        %v1598 = vadd.f32 %v1582, 1e-05
        %v1599 = vadd.f32 %v1583, 1e-05
        %v1600 = vadd.f32 %v1584, 1e-05
        %v1601 = vadd.f32 %v1585, 1e-05
        %v1602 = vadd.f32 %v1586, 1e-05
        %v1603 = vrsqrt.pop %v1587
        %v1604 = vrsqrt.pop %v1588
        %v1605 = vrsqrt.pop %v1589
        %v1606 = vrsqrt.pop %v1590
        %v1607 = vrsqrt.pop %v1591
        %v1608 = vrsqrt.pop %v1592
        %v1609 = vrsqrt.pop %v1593
        %v1610 = vrsqrt.pop %v1594
        %v1611 = vrsqrt.pop %v1595
        %v1612 = vrsqrt.pop %v1596
        %v1613 = vrsqrt.pop %v1597
        %v1614 = vrsqrt.pop %v1598
        %v1615 = vrsqrt.pop %v1599
        %v1616 = vrsqrt.pop %v1600
        %v1617 = vrsqrt.pop %v1601
        %v1618 = vrsqrt.pop %v1602
        %v1619 = vmul.f32 %v1507, %v1603
        %v1620 = vmul.f32 %v1508, %v1604
        %v1621 = vmul.f32 %v1509, %v1605
        %v1622 = vmul.f32 %v1510, %v1606
        %v1623 = vmul.f32 %v1511, %v1607
        %v1624 = vmul.f32 %v1512, %v1608
        %v1625 = vmul.f32 %v1513, %v1609
        %v1626 = vmul.f32 %v1514, %v1610
        %v1627 = vmul.f32 %v1515, %v1611
        %v1628 = vmul.f32 %v1516, %v1612
        %v1629 = vmul.f32 %v1517, %v1613
        %v1630 = vmul.f32 %v1518, %v1614
        %v1631 = vmul.f32 %v1519, %v1615
        %v1632 = vmul.f32 %v1520, %v1616
        %v1633 = vmul.f32 %v1521, %v1617
        %v1634 = vmul.f32 %v1522, %v1618
        %v1636 = vlaneseq
        %v1637 = vshrl.u32 %v1636, 7
        %v1638 = vsub.s32 0, %v1637
        %v1639 = vrot.slane %v1441, %v1638
        %v1641 = vmul.f32 %v1619, %v1639
        %v1642 = vmul.f32 %v1620, %v1639
        %v1643 = vmul.f32 %v1621, %v1639
        %v1644 = vmul.f32 %v1622, %v1639
        %v1645 = vmul.f32 %v1623, %v1639
        %v1646 = vmul.f32 %v1624, %v1639
        %v1647 = vmul.f32 %v1625, %v1639
        %v1648 = vmul.f32 %v1626, %v1639
        %v1649 = vmul.f32 %v1627, %v1639
        %v1650 = vmul.f32 %v1628, %v1639
        %v1651 = vmul.f32 %v1629, %v1639
        %v1652 = vmul.f32 %v1630, %v1639
        %v1653 = vmul.f32 %v1631, %v1639
        %v1654 = vmul.f32 %v1632, %v1639
        %v1655 = vmul.f32 %v1633, %v1639
        %v1656 = vmul.f32 %v1634, %v1639
        %v1658 = vlaneseq
        %v1659 = vshrl.u32 %v1658, 7
        %v1660 = vsub.s32 0, %v1659
        %v1661 = vrot.slane %v1442, %v1660
        %v1663 = vadd.f32 %v1641, %v1661
        %v1664 = vadd.f32 %v1642, %v1661
        %v1665 = vadd.f32 %v1643, %v1661
        %v1666 = vadd.f32 %v1644, %v1661
        %v1667 = vadd.f32 %v1645, %v1661
        %v1668 = vadd.f32 %v1646, %v1661
        %v1669 = vadd.f32 %v1647, %v1661
        %v1670 = vadd.f32 %v1648, %v1661
        %v1671 = vadd.f32 %v1649, %v1661
        %v1672 = vadd.f32 %v1650, %v1661
        %v1673 = vadd.f32 %v1651, %v1661
        %v1674 = vadd.f32 %v1652, %v1661
        %v1675 = vadd.f32 %v1653, %v1661
        %v1676 = vadd.f32 %v1654, %v1661
        %v1677 = vadd.f32 %v1655, %v1661
        %v1678 = vadd.f32 %v1656, %v1661
        %v1679 = vpack.c.bf16 %v1664, %v1663
        %v1680 = vpack.c.bf16 %v1666, %v1665
        %v1681 = vpack.c.bf16 %v1668, %v1667
        %v1682 = vpack.c.bf16 %v1670, %v1669
        %v1683 = vpack.c.bf16 %v1672, %v1671
        %v1684 = vpack.c.bf16 %v1674, %v1673
        %v1685 = vpack.c.bf16 %v1676, %v1675
        %v1686 = vpack.c.bf16 %v1678, %v1677
        %v1687 = vld [vmem:[#allocation3] sm:$0xf]
        %v1688 = vld [vmem:[#allocation3 + $0x4] sm:$0xf]
        %v1689 = vld [vmem:[#allocation3 + $0x8] sm:$0xf]
        %v1690 = vld [vmem:[#allocation3 + $0xc] sm:$0xf]
        %v1691 = vld [vmem:[#allocation3 + $0x10] sm:$0xf]
        %v1692 = vld [vmem:[#allocation3 + $0x14] sm:$0xf]
        %v1693 = vld [vmem:[#allocation3 + $0x18] sm:$0xf]
        %v1694 = vld [vmem:[#allocation3 + $0x1c] sm:$0xf]
        %v1695 = vld [vmem:[#allocation3 + $0x20] sm:$0xf]
        %v1696 = vld [vmem:[#allocation3 + $0x24] sm:$0xf]
        %v1697 = vld [vmem:[#allocation3 + $0x28] sm:$0xf]
        %v1698 = vld [vmem:[#allocation3 + $0x2c] sm:$0xf]
        %v1699 = vld [vmem:[#allocation3 + $0x30] sm:$0xf]
        %v1700 = vld [vmem:[#allocation3 + $0x34] sm:$0xf]
        %v1701 = vld [vmem:[#allocation3 + $0x38] sm:$0xf]
        %v1702 = vld [vmem:[#allocation3 + $0x3c] sm:$0xf]
        %v1703 = vld [vmem:[%s8] sm:$0x1]
        %v1705 = vlaneseq
        %v1706 = vshrl.u32 %v1705, 7
        %v1707 = vsub.s32 0, %v1706
        %v1708 = vrot.slane %v1703, %v1707
        %v1726 = vunpack.c.l.b16 %v1687
        %v1727 = vunpack.c.l.b16 %v1688
        %v1728 = vunpack.c.l.b16 %v1689
        %v1729 = vunpack.c.l.b16 %v1690
        %v1730 = vunpack.c.l.b16 %v1691
        %v1731 = vunpack.c.l.b16 %v1692
        %v1732 = vunpack.c.l.b16 %v1693
        %v1733 = vunpack.c.l.b16 %v1694
        %v1734 = vunpack.c.l.b16 %v1695
        %v1735 = vunpack.c.l.b16 %v1696
        %v1736 = vunpack.c.l.b16 %v1697
        %v1737 = vunpack.c.l.b16 %v1698
        %v1738 = vunpack.c.l.b16 %v1699
        %v1739 = vunpack.c.l.b16 %v1700
        %v1740 = vunpack.c.l.b16 %v1701
        %v1741 = vunpack.c.l.b16 %v1702
        %v1742 = vpack.c.b16 %v1727, %v1726
        %v1743 = vpack.c.b16 %v1729, %v1728
        %v1744 = vpack.c.b16 %v1731, %v1730
        %v1745 = vpack.c.b16 %v1733, %v1732
        %v1746 = vpack.c.b16 %v1735, %v1734
        %v1747 = vpack.c.b16 %v1737, %v1736
        %v1748 = vpack.c.b16 %v1739, %v1738
        %v1749 = vpack.c.b16 %v1741, %v1740
        %1758 = vmatprep.subr.bf16.mxu0 0
        %1759 = vmatpush1.bf16.msra.mxu0 %v1749
        %1760 = vmatprep.subr.bf16.mxu0 0
        %1761 = vmatpush1.bf16.msra.mxu0 %v1748
        %1762 = vmatprep.subr.bf16.mxu0 0
        %1763 = vmatpush1.bf16.msra.mxu0 %v1747
        %1764 = vmatprep.subr.bf16.mxu0 0
        %1765 = vmatpush1.bf16.msra.mxu0 %v1746
        %1766 = vmatprep.subr.bf16.mxu0 0
        %1767 = vmatpush1.bf16.msra.mxu0 %v1745
        %1768 = vmatprep.subr.bf16.mxu0 0
        %1769 = vmatpush1.bf16.msra.mxu0 %v1744
        %1770 = vmatprep.subr.bf16.mxu0 0
        %1771 = vmatpush1.bf16.msra.mxu0 %v1743
        %1772 = vmatprep.subr.bf16.mxu0 0
        %1773 = vmatpush1.bf16.msra.mxu0 %v1742
        %1774 = vmatprep.subr.bf16.mxu0 0
        %1775 = vmatpush2.bf16.msra.mxu0 0
        %1776 = vmatprep.subr.bf16.mxu0 0
        %1777 = vmatpush2.bf16.msra.mxu0 0
        %1778 = vmatprep.subr.bf16.mxu0 0
        %1779 = vmatpush2.bf16.msra.mxu0 0
        %1780 = vmatprep.subr.bf16.mxu0 0
        %1781 = vmatpush2.bf16.msra.mxu0 0
        %1782 = vmatprep.subr.bf16.mxu0 0
        %1783 = vmatpush2.bf16.msra.mxu0 0
        %1784 = vmatprep.subr.bf16.mxu0 0
        %1785 = vmatpush2.bf16.msra.mxu0 0
        %1786 = vmatprep.subr.bf16.mxu0 0
        %1787 = vmatpush2.bf16.msra.mxu0 0
        %1788 = vmatprep.subr.bf16.mxu0 0
        %1789 = vmatpush2.bf16.msra.mxu0 0
        %1790 = vmatprep.mubr.bf16.mxu0 0
        %1791 = vmatmul.mubr.bf16.gmra.mxu0 %v1679
        %v1792 = vpop.f32.mrf.mxu0
        %v1793 = vadd.f32 %v1708, %v1792
        %v1794 = vpop.f32.mrf.mxu0
        %v1795 = vpop.f32.mrf.mxu0
        %v1796 = vadd.f32 %v1708, %v1795
        %v1797 = vpop.f32.mrf.mxu0
        %1798 = vmatprep.mubr.bf16.mxu0 0
        %1799 = vmatmul.mubr.bf16.gmra.mxu0 %v1680
        %v1800 = vpop.f32.mrf.mxu0
        %v1801 = vadd.f32 %v1708, %v1800
        %v1802 = vpop.f32.mrf.mxu0
        %v1803 = vpop.f32.mrf.mxu0
        %v1804 = vadd.f32 %v1708, %v1803
        %v1805 = vpop.f32.mrf.mxu0
        %1806 = vmatprep.mubr.bf16.mxu0 0
        %1807 = vmatmul.mubr.bf16.gmra.mxu0 %v1681
        %v1808 = vpop.f32.mrf.mxu0
        %v1809 = vadd.f32 %v1708, %v1808
        %v1810 = vpop.f32.mrf.mxu0
        %v1811 = vpop.f32.mrf.mxu0
        %v1812 = vadd.f32 %v1708, %v1811
        %v1813 = vpop.f32.mrf.mxu0
        %1814 = vmatprep.mubr.bf16.mxu0 0
        %1815 = vmatmul.mubr.bf16.gmra.mxu0 %v1682
        %v1816 = vpop.f32.mrf.mxu0
        %v1817 = vadd.f32 %v1708, %v1816
        %v1818 = vpop.f32.mrf.mxu0
        %v1819 = vpop.f32.mrf.mxu0
        %v1820 = vadd.f32 %v1708, %v1819
        %v1821 = vpop.f32.mrf.mxu0
        %1822 = vmatprep.mubr.bf16.mxu0 0
        %1823 = vmatmul.mubr.bf16.gmra.mxu0 %v1683
        %v1824 = vpop.f32.mrf.mxu0
        %v1825 = vadd.f32 %v1708, %v1824
        %v1826 = vpop.f32.mrf.mxu0
        %v1827 = vpop.f32.mrf.mxu0
        %v1828 = vadd.f32 %v1708, %v1827
        %v1829 = vpop.f32.mrf.mxu0
        %1830 = vmatprep.mubr.bf16.mxu0 0
        %1831 = vmatmul.mubr.bf16.gmra.mxu0 %v1684
        %v1832 = vpop.f32.mrf.mxu0
        %v1833 = vadd.f32 %v1708, %v1832
        %v1834 = vpop.f32.mrf.mxu0
        %v1835 = vpop.f32.mrf.mxu0
        %v1836 = vadd.f32 %v1708, %v1835
        %v1837 = vpop.f32.mrf.mxu0
        %1838 = vmatprep.mubr.bf16.mxu0 0
        %1839 = vmatmul.mubr.bf16.gmra.mxu0 %v1685
        %v1840 = vpop.f32.mrf.mxu0
        %v1841 = vadd.f32 %v1708, %v1840
        %v1842 = vpop.f32.mrf.mxu0
        %v1843 = vpop.f32.mrf.mxu0
        %v1844 = vadd.f32 %v1708, %v1843
        %v1845 = vpop.f32.mrf.mxu0
        %1846 = vmatprep.mubr.bf16.mxu0 0
        %1847 = vmatmul.mubr.bf16.gmra.mxu0 %v1686
        %v1848 = vpop.f32.mrf.mxu0
        %v1849 = vadd.f32 %v1708, %v1848
        %v1850 = vpop.f32.mrf.mxu0
        %v1851 = vpop.f32.mrf.mxu0
        %v1852 = vadd.f32 %v1708, %v1851
        %v1853 = vpop.f32.mrf.mxu0
        %1854 = vdwg.mxu0
        %v1855 = vmul.f32 %v1793, %v1793
        %v1856 = vmul.f32 %v1796, %v1796
        %v1857 = vmul.f32 %v1801, %v1801
        %v1858 = vmul.f32 %v1804, %v1804
        %v1859 = vmul.f32 %v1809, %v1809
        %v1860 = vmul.f32 %v1812, %v1812
        %v1861 = vmul.f32 %v1817, %v1817
        %v1862 = vmul.f32 %v1820, %v1820
        %v1863 = vmul.f32 %v1825, %v1825
        %v1864 = vmul.f32 %v1828, %v1828
        %v1865 = vmul.f32 %v1833, %v1833
        %v1866 = vmul.f32 %v1836, %v1836
        %v1867 = vmul.f32 %v1841, %v1841
        %v1868 = vmul.f32 %v1844, %v1844
        %v1869 = vmul.f32 %v1849, %v1849
        %v1870 = vmul.f32 %v1852, %v1852
        %v1871 = vmul.f32 %v1793, %v1855
        %v1872 = vmul.f32 %v1796, %v1856
        %v1873 = vmul.f32 %v1801, %v1857
        %v1874 = vmul.f32 %v1804, %v1858
        %v1875 = vmul.f32 %v1809, %v1859
        %v1876 = vmul.f32 %v1812, %v1860
        %v1877 = vmul.f32 %v1817, %v1861
        %v1878 = vmul.f32 %v1820, %v1862
        %v1879 = vmul.f32 %v1825, %v1863
        %v1880 = vmul.f32 %v1828, %v1864
        %v1881 = vmul.f32 %v1833, %v1865
        %v1882 = vmul.f32 %v1836, %v1866
        %v1883 = vmul.f32 %v1841, %v1867
        %v1884 = vmul.f32 %v1844, %v1868
        %v1885 = vmul.f32 %v1849, %v1869
        %v1886 = vmul.f32 %v1852, %v1870
        %v1887 = vmul.f32 %v1871, 0.044715
        %v1888 = vmul.f32 %v1872, 0.044715
        %v1889 = vmul.f32 %v1873, 0.044715
        %v1890 = vmul.f32 %v1874, 0.044715
        %v1891 = vmul.f32 %v1875, 0.044715
        %v1892 = vmul.f32 %v1876, 0.044715
        %v1893 = vmul.f32 %v1877, 0.044715
        %v1894 = vmul.f32 %v1878, 0.044715
        %v1895 = vmul.f32 %v1879, 0.044715
        %v1896 = vmul.f32 %v1880, 0.044715
        %v1897 = vmul.f32 %v1881, 0.044715
        %v1898 = vmul.f32 %v1882, 0.044715
        %v1899 = vmul.f32 %v1883, 0.044715
        %v1900 = vmul.f32 %v1884, 0.044715
        %v1901 = vmul.f32 %v1885, 0.044715
        %v1902 = vmul.f32 %v1886, 0.044715
        %v1903 = vadd.f32 %v1793, %v1887
        %v1904 = vadd.f32 %v1796, %v1888
        %v1905 = vadd.f32 %v1801, %v1889
        %v1906 = vadd.f32 %v1804, %v1890
        %v1907 = vadd.f32 %v1809, %v1891
        %v1908 = vadd.f32 %v1812, %v1892
        %v1909 = vadd.f32 %v1817, %v1893
        %v1910 = vadd.f32 %v1820, %v1894
        %v1911 = vadd.f32 %v1825, %v1895
        %v1912 = vadd.f32 %v1828, %v1896
        %v1913 = vadd.f32 %v1833, %v1897
        %v1914 = vadd.f32 %v1836, %v1898
        %v1915 = vadd.f32 %v1841, %v1899
        %v1916 = vadd.f32 %v1844, %v1900
        %v1917 = vadd.f32 %v1849, %v1901
        %v1918 = vadd.f32 %v1852, %v1902
        %v1919 = vmul.f32 %v1903, 0.7978846
        %v1920 = vmul.f32 %v1904, 0.7978846
        %v1921 = vmul.f32 %v1905, 0.7978846
        %v1922 = vmul.f32 %v1906, 0.7978846
        %v1923 = vmul.f32 %v1907, 0.7978846
        %v1924 = vmul.f32 %v1908, 0.7978846
        %v1925 = vmul.f32 %v1909, 0.7978846
        %v1926 = vmul.f32 %v1910, 0.7978846
        %v1927 = vmul.f32 %v1911, 0.7978846
        %v1928 = vmul.f32 %v1912, 0.7978846
        %v1929 = vmul.f32 %v1913, 0.7978846
        %v1930 = vmul.f32 %v1914, 0.7978846
        %v1931 = vmul.f32 %v1915, 0.7978846
        %v1932 = vmul.f32 %v1916, 0.7978846
        %v1933 = vmul.f32 %v1917, 0.7978846
        %v1934 = vmul.f32 %v1918, 0.7978846
        %v1935 = vtanh.pop %v1919
        %v1936 = vtanh.pop %v1920
        %v1937 = vtanh.pop %v1921
        %v1938 = vtanh.pop %v1922
        %v1939 = vtanh.pop %v1923
        %v1940 = vtanh.pop %v1924
        %v1941 = vtanh.pop %v1925
        %v1942 = vtanh.pop %v1926
        %v1943 = vtanh.pop %v1927
        %v1944 = vtanh.pop %v1928
        %v1945 = vtanh.pop %v1929
        %v1946 = vtanh.pop %v1930
        %v1947 = vtanh.pop %v1931
        %v1948 = vtanh.pop %v1932
        %v1949 = vtanh.pop %v1933
        %v1950 = vtanh.pop %v1934
        %v1951 = vadd.f32 %v1935, 1.0
        %v1952 = vadd.f32 %v1936, 1.0
        %v1953 = vadd.f32 %v1937, 1.0
        %v1954 = vadd.f32 %v1938, 1.0
        %v1955 = vadd.f32 %v1939, 1.0
        %v1956 = vadd.f32 %v1940, 1.0
        %v1957 = vadd.f32 %v1941, 1.0
        %v1958 = vadd.f32 %v1942, 1.0
        %v1959 = vadd.f32 %v1943, 1.0
        %v1960 = vadd.f32 %v1944, 1.0
        %v1961 = vadd.f32 %v1945, 1.0
        %v1962 = vadd.f32 %v1946, 1.0
        %v1963 = vadd.f32 %v1947, 1.0
        %v1964 = vadd.f32 %v1948, 1.0
        %v1965 = vadd.f32 %v1949, 1.0
        %v1966 = vadd.f32 %v1950, 1.0
        %v1967 = vmul.f32 %v1951, 0.5
        %v1968 = vmul.f32 %v1952, 0.5
        %v1969 = vmul.f32 %v1953, 0.5
        %v1970 = vmul.f32 %v1954, 0.5
        %v1971 = vmul.f32 %v1955, 0.5
        %v1972 = vmul.f32 %v1956, 0.5
        %v1973 = vmul.f32 %v1957, 0.5
        %v1974 = vmul.f32 %v1958, 0.5
        %v1975 = vmul.f32 %v1959, 0.5
        %v1976 = vmul.f32 %v1960, 0.5
        %v1977 = vmul.f32 %v1961, 0.5
        %v1978 = vmul.f32 %v1962, 0.5
        %v1979 = vmul.f32 %v1963, 0.5
        %v1980 = vmul.f32 %v1964, 0.5
        %v1981 = vmul.f32 %v1965, 0.5
        %v1982 = vmul.f32 %v1966, 0.5
        %v1983 = vmul.f32 %v1793, %v1967
        %v1984 = vmul.f32 %v1796, %v1968
        %v1985 = vmul.f32 %v1801, %v1969
        %v1986 = vmul.f32 %v1804, %v1970
        %v1987 = vmul.f32 %v1809, %v1971
        %v1988 = vmul.f32 %v1812, %v1972
        %v1989 = vmul.f32 %v1817, %v1973
        %v1990 = vmul.f32 %v1820, %v1974
        %v1991 = vmul.f32 %v1825, %v1975
        %v1992 = vmul.f32 %v1828, %v1976
        %v1993 = vmul.f32 %v1833, %v1977
        %v1994 = vmul.f32 %v1836, %v1978
        %v1995 = vmul.f32 %v1841, %v1979
        %v1996 = vmul.f32 %v1844, %v1980
        %v1997 = vmul.f32 %v1849, %v1981
        %v1998 = vmul.f32 %v1852, %v1982
        %v1999 = vpack.c.bf16 %v1984, %v1983
        %v2000 = vpack.c.bf16 %v1986, %v1985
        %v2001 = vpack.c.bf16 %v1988, %v1987
        %v2002 = vpack.c.bf16 %v1990, %v1989
        %v2003 = vpack.c.bf16 %v1992, %v1991
        %v2004 = vpack.c.bf16 %v1994, %v1993
        %v2005 = vpack.c.bf16 %v1996, %v1995
        %v2006 = vpack.c.bf16 %v1998, %v1997
        %v2007 = vld [vmem:[#allocation5] sm:$0xf]
        %v2008 = vld [vmem:[#allocation5 + $0x4] sm:$0xf]
        %v2009 = vld [vmem:[#allocation5 + $0x8] sm:$0xf]
        %v2010 = vld [vmem:[#allocation5 + $0xc] sm:$0xf]
        %v2011 = vld [vmem:[#allocation5 + $0x10] sm:$0xf]
        %v2012 = vld [vmem:[#allocation5 + $0x14] sm:$0xf]
        %v2013 = vld [vmem:[#allocation5 + $0x18] sm:$0xf]
        %v2014 = vld [vmem:[#allocation5 + $0x1c] sm:$0xf]
        %v2015 = vld [vmem:[#allocation5 + $0x20] sm:$0xf]
        %v2016 = vld [vmem:[#allocation5 + $0x24] sm:$0xf]
        %v2017 = vld [vmem:[#allocation5 + $0x28] sm:$0xf]
        %v2018 = vld [vmem:[#allocation5 + $0x2c] sm:$0xf]
        %v2019 = vld [vmem:[#allocation5 + $0x30] sm:$0xf]
        %v2020 = vld [vmem:[#allocation5 + $0x34] sm:$0xf]
        %v2021 = vld [vmem:[#allocation5 + $0x38] sm:$0xf]
        %v2022 = vld [vmem:[#allocation5 + $0x3c] sm:$0xf]
        %v2023 = vld [vmem:[%s10] sm:$0x1]
        %v2025 = vlaneseq
        %v2026 = vshrl.u32 %v2025, 7
        %v2027 = vsub.s32 0, %v2026
        %v2028 = vrot.slane %v2023, %v2027
        %v2046 = vunpack.c.l.b16 %v2007
        %v2047 = vunpack.c.l.b16 %v2008
        %v2048 = vunpack.c.l.b16 %v2009
        %v2049 = vunpack.c.l.b16 %v2010
        %v2050 = vunpack.c.l.b16 %v2011
        %v2051 = vunpack.c.l.b16 %v2012
        %v2052 = vunpack.c.l.b16 %v2013
        %v2053 = vunpack.c.l.b16 %v2014
        %v2054 = vunpack.c.l.b16 %v2015
        %v2055 = vunpack.c.l.b16 %v2016
        %v2056 = vunpack.c.l.b16 %v2017
        %v2057 = vunpack.c.l.b16 %v2018
        %v2058 = vunpack.c.l.b16 %v2019
        %v2059 = vunpack.c.l.b16 %v2020
        %v2060 = vunpack.c.l.b16 %v2021
        %v2061 = vunpack.c.l.b16 %v2022
        %v2062 = vpack.c.b16 %v2047, %v2046
        %v2063 = vpack.c.b16 %v2049, %v2048
        %v2064 = vpack.c.b16 %v2051, %v2050
        %v2065 = vpack.c.b16 %v2053, %v2052
        %v2066 = vpack.c.b16 %v2055, %v2054
        %v2067 = vpack.c.b16 %v2057, %v2056
        %v2068 = vpack.c.b16 %v2059, %v2058
        %v2069 = vpack.c.b16 %v2061, %v2060
        %2078 = vmatprep.subr.bf16.mxu0 0
        %2079 = vmatpush1.bf16.msra.mxu0 %v2069
        %2080 = vmatprep.subr.bf16.mxu0 0
        %2081 = vmatpush1.bf16.msra.mxu0 %v2068
        %2082 = vmatprep.subr.bf16.mxu0 0
        %2083 = vmatpush1.bf16.msra.mxu0 %v2067
        %2084 = vmatprep.subr.bf16.mxu0 0
        %2085 = vmatpush1.bf16.msra.mxu0 %v2066
        %2086 = vmatprep.subr.bf16.mxu0 0
        %2087 = vmatpush1.bf16.msra.mxu0 %v2065
        %2088 = vmatprep.subr.bf16.mxu0 0
        %2089 = vmatpush1.bf16.msra.mxu0 %v2064
        %2090 = vmatprep.subr.bf16.mxu0 0
        %2091 = vmatpush1.bf16.msra.mxu0 %v2063
        %2092 = vmatprep.subr.bf16.mxu0 0
        %2093 = vmatpush1.bf16.msra.mxu0 %v2062
        %2094 = vmatprep.subr.bf16.mxu0 0
        %2095 = vmatpush2.bf16.msra.mxu0 0
        %2096 = vmatprep.subr.bf16.mxu0 0
        %2097 = vmatpush2.bf16.msra.mxu0 0
        %2098 = vmatprep.subr.bf16.mxu0 0
        %2099 = vmatpush2.bf16.msra.mxu0 0
        %2100 = vmatprep.subr.bf16.mxu0 0
        %2101 = vmatpush2.bf16.msra.mxu0 0
        %2102 = vmatprep.subr.bf16.mxu0 0
        %2103 = vmatpush2.bf16.msra.mxu0 0
        %2104 = vmatprep.subr.bf16.mxu0 0
        %2105 = vmatpush2.bf16.msra.mxu0 0
        %2106 = vmatprep.subr.bf16.mxu0 0
        %2107 = vmatpush2.bf16.msra.mxu0 0
        %2108 = vmatprep.subr.bf16.mxu0 0
        %2109 = vmatpush2.bf16.msra.mxu0 0
        %2110 = vmatprep.mubr.bf16.mxu0 0
        %2111 = vmatmul.mubr.bf16.gmra.mxu0 %v1999
        %v2112 = vpop.f32.mrf.mxu0
        %v2113 = vadd.f32 %v2028, %v2112
        %v2114 = vpop.f32.mrf.mxu0
        %v2115 = vpop.f32.mrf.mxu0
        %v2116 = vadd.f32 %v2028, %v2115
        %v2117 = vpop.f32.mrf.mxu0
        %2118 = vmatprep.mubr.bf16.mxu0 0
        %2119 = vmatmul.mubr.bf16.gmra.mxu0 %v2000
        %v2120 = vpop.f32.mrf.mxu0
        %v2121 = vadd.f32 %v2028, %v2120
        %v2122 = vpop.f32.mrf.mxu0
        %v2123 = vpop.f32.mrf.mxu0
        %v2124 = vadd.f32 %v2028, %v2123
        %v2125 = vpop.f32.mrf.mxu0
        %2126 = vmatprep.mubr.bf16.mxu0 0
        %2127 = vmatmul.mubr.bf16.gmra.mxu0 %v2001
        %v2128 = vpop.f32.mrf.mxu0
        %v2129 = vadd.f32 %v2028, %v2128
        %v2130 = vpop.f32.mrf.mxu0
        %v2131 = vpop.f32.mrf.mxu0
        %v2132 = vadd.f32 %v2028, %v2131
        %v2133 = vpop.f32.mrf.mxu0
        %2134 = vmatprep.mubr.bf16.mxu0 0
        %2135 = vmatmul.mubr.bf16.gmra.mxu0 %v2002
        %v2136 = vpop.f32.mrf.mxu0
        %v2137 = vadd.f32 %v2028, %v2136
        %v2138 = vpop.f32.mrf.mxu0
        %v2139 = vpop.f32.mrf.mxu0
        %v2140 = vadd.f32 %v2028, %v2139
        %v2141 = vpop.f32.mrf.mxu0
        %2142 = vmatprep.mubr.bf16.mxu0 0
        %2143 = vmatmul.mubr.bf16.gmra.mxu0 %v2003
        %v2144 = vpop.f32.mrf.mxu0
        %v2145 = vadd.f32 %v2028, %v2144
        %v2146 = vpop.f32.mrf.mxu0
        %v2147 = vpop.f32.mrf.mxu0
        %v2148 = vadd.f32 %v2028, %v2147
        %v2149 = vpop.f32.mrf.mxu0
        %2150 = vmatprep.mubr.bf16.mxu0 0
        %2151 = vmatmul.mubr.bf16.gmra.mxu0 %v2004
        %v2152 = vpop.f32.mrf.mxu0
        %v2153 = vadd.f32 %v2028, %v2152
        %v2154 = vpop.f32.mrf.mxu0
        %v2155 = vpop.f32.mrf.mxu0
        %v2156 = vadd.f32 %v2028, %v2155
        %v2157 = vpop.f32.mrf.mxu0
        %2158 = vmatprep.mubr.bf16.mxu0 0
        %2159 = vmatmul.mubr.bf16.gmra.mxu0 %v2005
        %v2160 = vpop.f32.mrf.mxu0
        %v2161 = vadd.f32 %v2028, %v2160
        %v2162 = vpop.f32.mrf.mxu0
        %v2163 = vpop.f32.mrf.mxu0
        %v2164 = vadd.f32 %v2028, %v2163
        %v2165 = vpop.f32.mrf.mxu0
        %2166 = vmatprep.mubr.bf16.mxu0 0
        %2167 = vmatmul.mubr.bf16.gmra.mxu0 %v2006
        %v2168 = vpop.f32.mrf.mxu0
        %v2169 = vadd.f32 %v2028, %v2168
        %v2170 = vpop.f32.mrf.mxu0
        %v2171 = vpop.f32.mrf.mxu0
        %v2172 = vadd.f32 %v2028, %v2171
        %v2173 = vpop.f32.mrf.mxu0
        %2174 = vdwg.mxu0
        %v2175 = vadd.f32 %v1425, %v2113
        %v2176 = vadd.f32 %v1426, %v2116
        %v2177 = vadd.f32 %v1427, %v2121
        %v2178 = vadd.f32 %v1428, %v2124
        %v2179 = vadd.f32 %v1429, %v2129
        %v2180 = vadd.f32 %v1430, %v2132
        %v2181 = vadd.f32 %v1431, %v2137
        %v2182 = vadd.f32 %v1432, %v2140
        %v2183 = vadd.f32 %v1433, %v2145
        %v2184 = vadd.f32 %v1434, %v2148
        %v2185 = vadd.f32 %v1435, %v2153
        %v2186 = vadd.f32 %v1436, %v2156
        %v2187 = vadd.f32 %v1437, %v2161
        %v2188 = vadd.f32 %v1438, %v2164
        %v2189 = vadd.f32 %v1439, %v2169
        %v2190 = vadd.f32 %v1440, %v2172
        %2191 = vst [vmem:[%s438] sm:$0xff] %v2175
        %2192 = vst [vmem:[%s438 + $0x8] sm:$0xff] %v2176
        %2193 = vst [vmem:[%s438 + $0x10] sm:$0xff] %v2177
        %2194 = vst [vmem:[%s438 + $0x18] sm:$0xff] %v2178
        %2195 = vst [vmem:[%s438 + $0x20] sm:$0xff] %v2179
        %2196 = vst [vmem:[%s438 + $0x28] sm:$0xff] %v2180
        %2197 = vst [vmem:[%s438 + $0x30] sm:$0xff] %v2181
        %2198 = vst [vmem:[%s438 + $0x38] sm:$0xff] %v2182
        %2199 = vst [vmem:[%s438 + $0x40] sm:$0xff] %v2183
        %2200 = vst [vmem:[%s438 + $0x48] sm:$0xff] %v2184
        %2201 = vst [vmem:[%s438 + $0x50] sm:$0xff] %v2185
        %2202 = vst [vmem:[%s438 + $0x58] sm:$0xff] %v2186
        %2203 = vst [vmem:[%s438 + $0x60] sm:$0xff] %v2187
        %2204 = vst [vmem:[%s438 + $0x68] sm:$0xff] %v2188
        %2205 = vst [vmem:[%s438 + $0x70] sm:$0xff] %v2189
        %2206 = vst [vmem:[%s438 + $0x78] sm:$0xff] %v2190
        %s2207 = smul.u32 16, %s29
        %p2208 = scmp.lt.s32.totalorder %s28, 1
        %s2209 = scalar_select %p2208, %s28, 1
        %p2210 = scmp.lt.s32.totalorder %s2207, 15
        %s2211 = scalar_select %p2210, %s2207, 15
        %s2212 = smul.addr %s2209, 16
        %s2213 = sadd.s32 %s2211, %s2212
        %s2214 = smul.addr %s2213, 8
        %s2215 = scalar_lea.vmem %s11, %s2214
        // Predicated region
        $region77: #{fwd.1} parent=63 // pred_check
          %p2216 = pneg %p292
        $region78: #{fwd.1} parent=63 // pred_check_branch
          %2218 = sbr.rel (%p2216) target = $region80
        $region79: #{fwd.1} parent=63 // pred_region
          %s2219 = smul.u32 16, %s29
        $region80: #{fwd.1} parent=63 // pred_fallthru
          _
      $region64: #{fwd.1} parent=5 // pred_fallthru
        _
      %p2220 = scmp.le.s32.totalorder 2, %s19
      // Predicated region
      $region81: #{fwd.1} parent=5 // pred_check
        %p2221 = pneg %p2220
      $region82: #{fwd.1} parent=5 // pred_check_branch
        %2223 = sbr.rel (%p2221) target = $region84
      $region83: #{fwd.1} parent=5 // pred_region
        %s2224 = ssub.s32 %s19, 2
        // Predicated region
        $region85: #{fwd.1} parent=83 // pred_check
          %p2225 = pneg %p298
        $region86: #{fwd.1} parent=83 // pred_check_branch
          %2227 = sbr.rel (%p2225) target = $region88
        $region87: #{fwd.1} parent=83 // pred_region
          %s2228 = smul.u32 16, %s31
          %p2229 = scmp.lt.s32.totalorder %s30, 1
          %s2230 = scalar_select %p2229, %s30, 1
          %p2231 = scmp.lt.s32.totalorder %s2228, 15
          %s2232 = scalar_select %p2231, %s2228, 15
          %s2233 = smul.addr %s2230, 16
          %s2234 = sadd.s32 %s2232, %s2233
          %s2235 = smul.addr %s2234, 8
          %s2236 = scalar_lea.vmem %s11, %s2235
        $region88: #{fwd.1} parent=83 // pred_fallthru
          _
      $region84: #{fwd.1} parent=5 // pred_fallthru
        _
    $region6: #{fwd.1} parent=1 // loop_footer
      %s23 = sadd.s32 1, %s19
    $region7: #{fwd.1} parent=1 // loop_footer_branch
      %18 = sbr.rel target = $region3
    $region8: #{fwd.1} parent=1 // loop_exit
      _
    %2237 = vsyncpa [#allocation4], 1
    %s2238 = scalar_lea.sflag [#allocation4], 1
    %2239 = vsyncpa %s2238, 1
    %2240 = vsyncpa [#allocation6], 1

// kernel: fwd.1
$region0: #{fwd.1}
  #allocation0 [shape = 'u32[]', space=smem, size = 0x4, offset = 0x4, fixed_abs, tag = 'smem constant byte address 0x4 - core index']
  #allocation1 [shape = 'u32[144,128]{1,0:T(1,128)}', space=vmem, size = 0x12000, scoped, tag = 'internal scratch']
  #allocation2 [shape = 'bf16[256,128]{1,0:T(8,128)(2,1)}', space=vmem, size = 0x10000, scoped, tag = 'scratch operand']
  %s0 = inlined_call_operand.vmem [shape: f32[2,128,128], index: 0, kind: input, shape index: {}]
  %s1 = inlined_call_operand.vmem [shape: bf16[128,256], index: 1, kind: input, shape index: {}]
  %s2 = inlined_call_operand.vmem [shape: bf16[128,256], index: 2, kind: input, shape index: {}]
  %s3 = inlined_call_operand.vmem [shape: f32[1,128], index: 3, kind: input, shape index: {}, may-alias: {3,5}]
  %s4 = inlined_call_operand.vmem [shape: f32[1,128], index: 4, kind: input, shape index: {}, may-alias: {4,6}]
  %s5 = inlined_call_operand.vmem [shape: f32[1,128], index: 5, kind: input, shape index: {}, may-alias: {3,5}]
  %s6 = inlined_call_operand.vmem [shape: f32[1,128], index: 6, kind: input, shape index: {}, may-alias: {4,6}]
  %s7 = inlined_call_operand.hbm [shape: bf16[128,128], index: 7, kind: input, shape index: {}]
  %s8 = inlined_call_operand.vmem [shape: f32[1,128], index: 8, kind: input, shape index: {}]
  %s9 = inlined_call_operand.hbm [shape: bf16[128,128], index: 9, kind: input, shape index: {}]
  %s10 = inlined_call_operand.vmem [shape: f32[1,128], index: 10, kind: input, shape index: {}]
  %s11 = inlined_call_operand.vmem [shape: f32[2,128,128], index: 11, kind: output, shape index: {}]
  %s12 = sld [smem:[#allocation0]]
  $region89: #{fwd.1} parent=0
    _
  %s14 = ssub.s32 1, %s12
  %s15 = scalar_select 0, %s14, %s12
  $region1: #{fwd.1} parent=0
    #allocation3 [shape = 'u8[32768]{0}', space=vmem, size = 0x8000, scoped, tag = 'input window, operand 7, single buffered']
    #allocation4 [shape = 's32[2]{0}', space=sflag, size = 0x8, scoped, tag = 'scoped memory for fwd.1']
    #allocation5 [shape = 'u8[32768]{0}', space=vmem, size = 0x8000, scoped, tag = 'input window, operand 9, single buffered']
    #allocation6 [shape = 's32[1]{0}', space=sflag, size = 0x4, scoped, tag = 'scoped memory for fwd.1']
    %16 = vsyncpa [#allocation4], 0
    %17 = vsyncpa [#allocation6], 0
    loop: start=0, step=1, limit=4
    $region2: #{fwd.1} parent=1 // loop_pre_header
      _
    $region3: #{fwd.1} parent=1 // loop_header
      %s19 = sphi 0, %s23
      %p20 = scmp.ge.s32.totalorder %s19, 4
      %s26 = sphi 0, %s38
      %s27 = sphi 0, %s34
      %s28 = sphi 0, %s26
      %s29 = sphi 0, %s27
      %s30 = sphi 0, %s28
      %s31 = sphi 0, %s29
      %s41 = sphi 0, %s43
      %s44 = sphi 0, %s41
      %s45 = sphi 0, %s44
      %s61 = sphi 0, %s45
      %s65 = sphi 0, %s65
      %s67 = sphi 0, %s65
      %s68 = sphi 0, %s67
      %s82 = sphi 0, %s68
      %s86 = sphi 0, %s86
      %s88 = sphi 0, %s86
      %s89 = sphi 0, %s88
      %s103 = sphi 0, %s89
      %s107 = sphi 0, %s107
      %s109 = sphi 0, %s107
      %s110 = sphi 0, %s109
      %s124 = sphi 0, %s110
      %s128 = sphi 0, %s128
      %s130 = sphi 0, %s128
      %s131 = sphi 0, %s130
      %s145 = sphi 0, %s131
      %s149 = sphi 0, %s149
      %s151 = sphi 0, %s149
      %s152 = sphi 0, %s151
      %s166 = sphi 0, %s152
      %s170 = sphi 0, %s170
      %s172 = sphi 0, %s170
      %s173 = sphi 0, %s172
      %s187 = sphi 0, %s173
      %s191 = sphi 0, %s191
      %s193 = sphi 0, %s191
      %s194 = sphi 0, %s193
      %s208 = sphi 0, %s194
      %s212 = sphi 0, %s212
      %s214 = sphi 0, %s212
      %s215 = sphi 0, %s214
      %s229 = sphi 0, %s215
      %s233 = sphi 0, %s233
      %s235 = sphi 0, %s233
      %s236 = sphi 0, %s235
      %s250 = sphi 0, %s236
      %s254 = sphi 0, %s254
      %s256 = sphi 0, %s254
      %s257 = sphi 0, %s256
      %s271 = sphi 0, %s257
      %s279 = sphi 0, %s281
      %s282 = sphi 0, %s279
      %s283 = sphi 0, %s282
      %s299 = sphi 0, %s283
    $region4: #{fwd.1} parent=1 // loop_header_branch
      %22 = sbr.rel (%p20) target = $region8
    $region5: #{fwd.1} parent=1 // loop_body
      %s24 = ssub.s32 %s19, 1
      %s25 = ssub.s32 %s19, 2
      %s32 = sadd.s32 1, %s27
      %p33 = scmp.ge.s32.totalorder %s32, 1
      %s34 = scalar_select %p33, 0, %s32
      %s35 = sadd.s32 1, %s26
      %s36 = scalar_select %p33, %s35, %s26
      %p37 = scmp.ge.s32.totalorder %s36, 2
      %s38 = scalar_select %p37, 0, %s36
      %s39 = ssub.s32 %s26, %s38
      %p40 = scmp.eq.s32.totalorder %s39, 0
      %s42 = sadd.s32 %s41, 1
      %s43 = scalar_select %p40, %s41, %s42
      %p46 = pneg %p40
      %p47 = scmp.eq.s32.totalorder %s19, 1
      %p48 = por %p46, %p47
      %p49 = scmp.ne.s32.totalorder %s41, %s44
      %p50 = scmp.eq.s32.totalorder %s19, 0
      %p51 = por %p49, %p50
      %p52 = scmp.ne.s32.totalorder %s41, %s44
      %p53 = scmp.eq.s32.totalorder %s24, 1
      %p54 = por %p52, %p53
      %p55 = scmp.ne.s32.totalorder %s44, %s45
      %p56 = scmp.eq.s32.totalorder %s24, 0
      %p57 = por %p55, %p56
      %p58 = scmp.ne.s32.totalorder %s44, %s45
      %p59 = scmp.eq.s32.totalorder %s25, 1
      %p60 = por %p58, %p59
      %p62 = scmp.ne.s32.totalorder %s45, %s61
      %p63 = scmp.eq.s32.totalorder %s25, 0
      %p64 = por %p62, %p63
      %s66 = sadd.s32 %s65, 1
      %p69 = scmp.eq.s32.totalorder %s19, 1
      %p70 = scmp.ne.s32.totalorder %s65, %s67
      %p71 = scmp.eq.s32.totalorder %s19, 0
      %p72 = por %p70, %p71
      %p73 = scmp.ne.s32.totalorder %s65, %s67
      %p74 = scmp.eq.s32.totalorder %s24, 1
      %p75 = por %p73, %p74
      %p76 = scmp.ne.s32.totalorder %s67, %s68
      %p77 = scmp.eq.s32.totalorder %s24, 0
      %p78 = por %p76, %p77
      %p79 = scmp.ne.s32.totalorder %s67, %s68
      %p80 = scmp.eq.s32.totalorder %s25, 1
      %p81 = por %p79, %p80
      %p83 = scmp.ne.s32.totalorder %s68, %s82
      %p84 = scmp.eq.s32.totalorder %s25, 0
      %p85 = por %p83, %p84
      %s87 = sadd.s32 %s86, 1
      %p90 = scmp.eq.s32.totalorder %s19, 1
      %p91 = scmp.ne.s32.totalorder %s86, %s88
      %p92 = scmp.eq.s32.totalorder %s19, 0
      %p93 = por %p91, %p92
      %p94 = scmp.ne.s32.totalorder %s86, %s88
      %p95 = scmp.eq.s32.totalorder %s24, 1
      %p96 = por %p94, %p95
      %p97 = scmp.ne.s32.totalorder %s88, %s89
      %p98 = scmp.eq.s32.totalorder %s24, 0
      %p99 = por %p97, %p98
      %p100 = scmp.ne.s32.totalorder %s88, %s89
      %p101 = scmp.eq.s32.totalorder %s25, 1
      %p102 = por %p100, %p101
      %p104 = scmp.ne.s32.totalorder %s89, %s103
      %p105 = scmp.eq.s32.totalorder %s25, 0
      %p106 = por %p104, %p105
      %s108 = sadd.s32 %s107, 1
      %p111 = scmp.eq.s32.totalorder %s19, 1
      %p112 = scmp.ne.s32.totalorder %s107, %s109
      %p113 = scmp.eq.s32.totalorder %s19, 0
      %p114 = por %p112, %p113
      %p115 = scmp.ne.s32.totalorder %s107, %s109
      %p116 = scmp.eq.s32.totalorder %s24, 1
      %p117 = por %p115, %p116
      %p118 = scmp.ne.s32.totalorder %s109, %s110
      %p119 = scmp.eq.s32.totalorder %s24, 0
      %p120 = por %p118, %p119
      %p121 = scmp.ne.s32.totalorder %s109, %s110
      %p122 = scmp.eq.s32.totalorder %s25, 1
      %p123 = por %p121, %p122
      %p125 = scmp.ne.s32.totalorder %s110, %s124
      %p126 = scmp.eq.s32.totalorder %s25, 0
      %p127 = por %p125, %p126
      %s129 = sadd.s32 %s128, 1
      %p132 = scmp.eq.s32.totalorder %s19, 1
      %p133 = scmp.ne.s32.totalorder %s128, %s130
      %p134 = scmp.eq.s32.totalorder %s19, 0
      %p135 = por %p133, %p134
      %p136 = scmp.ne.s32.totalorder %s128, %s130
      %p137 = scmp.eq.s32.totalorder %s24, 1
      %p138 = por %p136, %p137
      %p139 = scmp.ne.s32.totalorder %s130, %s131
      %p140 = scmp.eq.s32.totalorder %s24, 0
      %p141 = por %p139, %p140
      %p142 = scmp.ne.s32.totalorder %s130, %s131
      %p143 = scmp.eq.s32.totalorder %s25, 1
      %p144 = por %p142, %p143
      %p146 = scmp.ne.s32.totalorder %s131, %s145
      %p147 = scmp.eq.s32.totalorder %s25, 0
      %p148 = por %p146, %p147
      %s150 = sadd.s32 %s149, 1
      %p153 = scmp.eq.s32.totalorder %s19, 1
      %p154 = scmp.ne.s32.totalorder %s149, %s151
      %p155 = scmp.eq.s32.totalorder %s19, 0
      %p156 = por %p154, %p155
      %p157 = scmp.ne.s32.totalorder %s149, %s151
      %p158 = scmp.eq.s32.totalorder %s24, 1
      %p159 = por %p157, %p158
      %p160 = scmp.ne.s32.totalorder %s151, %s152
      %p161 = scmp.eq.s32.totalorder %s24, 0
      %p162 = por %p160, %p161
      %p163 = scmp.ne.s32.totalorder %s151, %s152
      %p164 = scmp.eq.s32.totalorder %s25, 1
      %p165 = por %p163, %p164
      %p167 = scmp.ne.s32.totalorder %s152, %s166
      %p168 = scmp.eq.s32.totalorder %s25, 0
      %p169 = por %p167, %p168
      %s171 = sadd.s32 %s170, 1
      %p174 = scmp.eq.s32.totalorder %s19, 1
      %p175 = scmp.ne.s32.totalorder %s170, %s172
      %p176 = scmp.eq.s32.totalorder %s19, 0
      %p177 = por %p175, %p176
      %p178 = scmp.ne.s32.totalorder %s170, %s172
      %p179 = scmp.eq.s32.totalorder %s24, 1
      %p180 = por %p178, %p179
      %p181 = scmp.ne.s32.totalorder %s172, %s173
      %p182 = scmp.eq.s32.totalorder %s24, 0
      %p183 = por %p181, %p182
      %p184 = scmp.ne.s32.totalorder %s172, %s173
      %p185 = scmp.eq.s32.totalorder %s25, 1
      %p186 = por %p184, %p185
      %p188 = scmp.ne.s32.totalorder %s173, %s187
      %p189 = scmp.eq.s32.totalorder %s25, 0
      %p190 = por %p188, %p189
      %s192 = sadd.s32 %s191, 1
      %p195 = scmp.eq.s32.totalorder %s19, 1
      %p196 = scmp.ne.s32.totalorder %s191, %s193
      %p197 = scmp.eq.s32.totalorder %s19, 0
      %p198 = por %p196, %p197
      %p199 = scmp.ne.s32.totalorder %s191, %s193
      %p200 = scmp.eq.s32.totalorder %s24, 1
      %p201 = por %p199, %p200
      %p202 = scmp.ne.s32.totalorder %s193, %s194
      %p203 = scmp.eq.s32.totalorder %s24, 0
      %p204 = por %p202, %p203
      %p205 = scmp.ne.s32.totalorder %s193, %s194
      %p206 = scmp.eq.s32.totalorder %s25, 1
      %p207 = por %p205, %p206
      %p209 = scmp.ne.s32.totalorder %s194, %s208
      %p210 = scmp.eq.s32.totalorder %s25, 0
      %p211 = por %p209, %p210
      %s213 = sadd.s32 %s212, 1
      %p216 = scmp.eq.s32.totalorder %s19, 1
      %p217 = scmp.ne.s32.totalorder %s212, %s214
      %p218 = scmp.eq.s32.totalorder %s19, 0
      %p219 = por %p217, %p218
      %p220 = scmp.ne.s32.totalorder %s212, %s214
      %p221 = scmp.eq.s32.totalorder %s24, 1
      %p222 = por %p220, %p221
      %p223 = scmp.ne.s32.totalorder %s214, %s215
      %p224 = scmp.eq.s32.totalorder %s24, 0
      %p225 = por %p223, %p224
      %p226 = scmp.ne.s32.totalorder %s214, %s215
      %p227 = scmp.eq.s32.totalorder %s25, 1
      %p228 = por %p226, %p227
      %p230 = scmp.ne.s32.totalorder %s215, %s229
      %p231 = scmp.eq.s32.totalorder %s25, 0
      %p232 = por %p230, %p231
      %s234 = sadd.s32 %s233, 1
      %p237 = scmp.eq.s32.totalorder %s19, 1
      %p238 = scmp.ne.s32.totalorder %s233, %s235
      %p239 = scmp.eq.s32.totalorder %s19, 0
      %p240 = por %p238, %p239
      %p241 = scmp.ne.s32.totalorder %s233, %s235
      %p242 = scmp.eq.s32.totalorder %s24, 1
      %p243 = por %p241, %p242
      %p244 = scmp.ne.s32.totalorder %s235, %s236
      %p245 = scmp.eq.s32.totalorder %s24, 0
      %p246 = por %p244, %p245
      %p247 = scmp.ne.s32.totalorder %s235, %s236
      %p248 = scmp.eq.s32.totalorder %s25, 1
      %p249 = por %p247, %p248
      %p251 = scmp.ne.s32.totalorder %s236, %s250
      %p252 = scmp.eq.s32.totalorder %s25, 0
      %p253 = por %p251, %p252
      %s255 = sadd.s32 %s254, 1
      %p258 = scmp.eq.s32.totalorder %s19, 1
      %p259 = scmp.ne.s32.totalorder %s254, %s256
      %p260 = scmp.eq.s32.totalorder %s19, 0
      %p261 = por %p259, %p260
      %p262 = scmp.ne.s32.totalorder %s254, %s256
      %p263 = scmp.eq.s32.totalorder %s24, 1
      %p264 = por %p262, %p263
      %p265 = scmp.ne.s32.totalorder %s256, %s257
      %p266 = scmp.eq.s32.totalorder %s24, 0
      %p267 = por %p265, %p266
      %p268 = scmp.ne.s32.totalorder %s256, %s257
      %p269 = scmp.eq.s32.totalorder %s25, 1
      %p270 = por %p268, %p269
      %p272 = scmp.ne.s32.totalorder %s257, %s271
      %p273 = scmp.eq.s32.totalorder %s25, 0
      %p274 = por %p272, %p273
      %s275 = ssub.s32 %s26, %s38
      %s276 = ssub.s32 %s27, %s34
      %s277 = sor.u32 %s275, %s276
      %p278 = scmp.eq.s32.totalorder %s277, 0
      %s280 = sadd.s32 %s279, 1
      %s281 = scalar_select %p278, %s279, %s280
      %p284 = pneg %p278
      %p285 = scmp.eq.s32.totalorder %s19, 1
      %p286 = por %p284, %p285
      %p287 = scmp.ne.s32.totalorder %s279, %s282
      %p288 = scmp.eq.s32.totalorder %s19, 0
      %p289 = por %p287, %p288
      %p290 = scmp.ne.s32.totalorder %s279, %s282
      %p291 = scmp.eq.s32.totalorder %s24, 1
      %p292 = por %p290, %p291
      %p293 = scmp.ne.s32.totalorder %s282, %s283
      %p294 = scmp.eq.s32.totalorder %s24, 0
      %p295 = por %p293, %p294
      %p296 = scmp.ne.s32.totalorder %s282, %s283
      %p297 = scmp.eq.s32.totalorder %s25, 1
      %p298 = por %p296, %p297
      %p300 = scmp.ne.s32.totalorder %s283, %s299
      %p301 = scmp.eq.s32.totalorder %s25, 0
      %p302 = por %p300, %p301
      %p303 = scmp.le.s32.totalorder 1, %s19
      %p304 = scmp.lt.s32.totalorder %s19, 3
      %p305 = pnand %p303, %p304
      %p306 = pneg %p305
      // Predicated region
      $region9: #{fwd.1} parent=5 // pred_check
        _
      $region10: #{fwd.1} parent=5 // pred_check_branch
        %308 = sbr.rel (%p305) target = $region12
      $region11: #{fwd.1} parent=5 // pred_region
        %s309 = ssub.s32 %s19, 1
        // Predicated region
        $region13: #{fwd.1} parent=11 // pred_check
          %p310 = pneg %p78
        $region14: #{fwd.1} parent=11 // pred_check_branch
          %312 = sbr.rel (%p310) target = $region16
        $region15: #{fwd.1} parent=11 // pred_region
          _
        $region16: #{fwd.1} parent=11 // pred_fallthru
          _
        // Predicated region
        $region17: #{fwd.1} parent=11 // pred_check
          %p313 = pneg %p99
        $region18: #{fwd.1} parent=11 // pred_check_branch
          %315 = sbr.rel (%p313) target = $region20
        $region19: #{fwd.1} parent=11 // pred_region
          _
        $region20: #{fwd.1} parent=11 // pred_fallthru
          _
        // Predicated region
        $region21: #{fwd.1} parent=11 // pred_check
          %p316 = pneg %p120
        $region22: #{fwd.1} parent=11 // pred_check_branch
          %318 = sbr.rel (%p316) target = $region24
        $region23: #{fwd.1} parent=11 // pred_region
          _
        $region24: #{fwd.1} parent=11 // pred_fallthru
          _
        // Predicated region
        $region25: #{fwd.1} parent=11 // pred_check
          %p319 = pneg %p141
        $region26: #{fwd.1} parent=11 // pred_check_branch
          %321 = sbr.rel (%p319) target = $region28
        $region27: #{fwd.1} parent=11 // pred_region
          _
        $region28: #{fwd.1} parent=11 // pred_fallthru
          _
        // Predicated region
        $region29: #{fwd.1} parent=11 // pred_check
          %p322 = pneg %p162
        $region30: #{fwd.1} parent=11 // pred_check_branch
          %324 = sbr.rel (%p322) target = $region32
        $region31: #{fwd.1} parent=11 // pred_region
          _
        $region32: #{fwd.1} parent=11 // pred_fallthru
          _
        // Predicated region
        $region33: #{fwd.1} parent=11 // pred_check
          %p325 = pneg %p183
        $region34: #{fwd.1} parent=11 // pred_check_branch
          %327 = sbr.rel (%p325) target = $region36
        $region35: #{fwd.1} parent=11 // pred_region
          _
        $region36: #{fwd.1} parent=11 // pred_fallthru
          _
        // Predicated region
        $region37: #{fwd.1} parent=11 // pred_check
          %p328 = pneg %p204
        $region38: #{fwd.1} parent=11 // pred_check_branch
          %330 = sbr.rel (%p328) target = $region40
        $region39: #{fwd.1} parent=11 // pred_region
          %s332 = ssub.s32 1024, 1024
          %333 = vsyncadd [#allocation4], %s332
          %s334 = sshll.u32 [#allocation3], 4
          %s335 = int_to_ptr.vmem [resolvable:$true] %s334
          %340 = dma.hbm_to_vmem [thread:$0]  %s7, 1024, %s335, [#allocation4], 64, 64, 4
        $region40: #{fwd.1} parent=11 // pred_fallthru
          _
        // Predicated region
        $region41: #{fwd.1} parent=11 // pred_check
          %p341 = pneg %p225
        $region42: #{fwd.1} parent=11 // pred_check_branch
          %343 = sbr.rel (%p341) target = $region44
        $region43: #{fwd.1} parent=11 // pred_region
          _
        $region44: #{fwd.1} parent=11 // pred_fallthru
          _
        // Predicated region
        $region45: #{fwd.1} parent=11 // pred_check
          %p344 = pneg %p246
        $region46: #{fwd.1} parent=11 // pred_check_branch
          %346 = sbr.rel (%p344) target = $region48
        $region47: #{fwd.1} parent=11 // pred_region
          %s348 = ssub.s32 1024, 1024
          %349 = vsyncadd [#allocation6], %s348
          %s350 = sshll.u32 [#allocation5], 4
          %s351 = int_to_ptr.vmem [resolvable:$true] %s350
          %356 = dma.hbm_to_vmem [thread:$0]  %s9, 1024, %s351, [#allocation6], 64, 64, 4
        $region48: #{fwd.1} parent=11 // pred_fallthru
          _
        // Predicated region
        $region49: #{fwd.1} parent=11 // pred_check
          %p357 = pneg %p267
        $region50: #{fwd.1} parent=11 // pred_check_branch
          %359 = sbr.rel (%p357) target = $region52
        $region51: #{fwd.1} parent=11 // pred_region
          _
        $region52: #{fwd.1} parent=11 // pred_fallthru
          _
      $region12: #{fwd.1} parent=5 // pred_fallthru
        _
      %p360 = scmp.lt.s32.totalorder %s19, 2
      // Predicated region
      $region53: #{fwd.1} parent=5 // pred_check
        %p361 = pneg %p360
      $region54: #{fwd.1} parent=5 // pred_check_branch
        %363 = sbr.rel (%p361) target = $region56
      $region55: #{fwd.1} parent=5 // pred_region
        // Predicated region
        $region57: #{fwd.1} parent=55 // pred_check
          %p364 = pneg %p51
        $region58: #{fwd.1} parent=55 // pred_check_branch
          %366 = sbr.rel (%p364) target = $region60
        $region59: #{fwd.1} parent=55 // pred_region
          %p367 = scmp.lt.s32.totalorder %s26, 1
          %s368 = scalar_select %p367, %s26, 1
          %s369 = smul.addr %s368, 16
          %s370 = smul.addr %s369, 8
          %s371 = scalar_lea.vmem %s0, %s370
        $region60: #{fwd.1} parent=55 // pred_fallthru
          _
      $region56: #{fwd.1} parent=5 // pred_fallthru
        _
      %p372 = scmp.le.s32.totalorder 1, %s19
      %p373 = scmp.lt.s32.totalorder %s19, 3
      %p374 = pnand %p372, %p373
      %p375 = pneg %p374
      // Predicated region
      $region61: #{fwd.1} parent=5 // pred_check
        _
      $region62: #{fwd.1} parent=5 // pred_check_branch
        %377 = sbr.rel (%p374) target = $region64
      $region63: #{fwd.1} parent=5 // pred_region
        %s378 = ssub.s32 %s19, 1
        // Predicated region
        $region65: #{fwd.1} parent=63 // pred_check
          %p379 = pneg %p204
        $region66: #{fwd.1} parent=63 // pred_check_branch
          %381 = sbr.rel (%p379) target = $region68
        $region67: #{fwd.1} parent=63 // pred_region
          %382 = dma.done [#allocation4], 1024
        $region68: #{fwd.1} parent=63 // pred_fallthru
          _
        // Predicated region
        $region69: #{fwd.1} parent=63 // pred_check
          %p383 = pneg %p246
        $region70: #{fwd.1} parent=63 // pred_check_branch
          %385 = sbr.rel (%p383) target = $region72
        $region71: #{fwd.1} parent=63 // pred_region
          %386 = dma.done [#allocation6], 1024
        $region72: #{fwd.1} parent=63 // pred_fallthru
          _
        %p387 = scmp.lt.s32.totalorder %s28, 1
        %s388 = scalar_select %p387, %s28, 1
        %s389 = smul.addr %s388, 16
        %s390 = smul.addr %s389, 8
        %s391 = scalar_lea.vmem %s0, %s390
        %p392 = pneg %p57
        %p393 = pneg %p54
        %p394 = pneg %p78
        %p395 = pneg %p75
        %p396 = pneg %p99
        %p397 = pneg %p96
        %p398 = pneg %p120
        %p399 = pneg %p117
        %p400 = pneg %p141
        %p401 = pneg %p138
        %p402 = pneg %p162
        %p403 = pneg %p159
        %p404 = pneg %p183
        %p405 = pneg %p180
        %p406 = pneg %p204
        %p407 = pneg %p201
        %p408 = pneg %p225
        %p409 = pneg %p222
        %p410 = pneg %p246
        %p411 = pneg %p243
        %p412 = pneg %p267
        %p413 = pneg %p264
        %p414 = pneg %p295
        %p415 = pneg %p292
        %s416 = smul.u32 16, %s29
        %p417 = scmp.lt.s32.totalorder %s28, 1
        %s418 = scalar_select %p417, %s28, 1
        %p419 = scmp.lt.s32.totalorder %s416, 15
        %s420 = scalar_select %p419, %s416, 15
        %s421 = smul.addr %s418, 16
        %s422 = sadd.s32 %s420, %s421
        %s423 = smul.addr %s422, 8
        %s424 = scalar_lea.vmem %s11, %s423
        %p425 = scmp.lt.s32.totalorder %s28, 1
        %s426 = scalar_select %p425, %s28, 1
        %s427 = smul.addr %s426, 16
        %s428 = smul.addr %s427, 8
        %s429 = scalar_lea.vmem %s0, %s428
        %s430 = smul.u32 16, %s29
        %p431 = scmp.lt.s32.totalorder %s28, 1
        %s432 = scalar_select %p431, %s28, 1
        %p433 = scmp.lt.s32.totalorder %s430, 15
        %s434 = scalar_select %p433, %s430, 15
        %s435 = smul.addr %s432, 16
        %s436 = sadd.s32 %s434, %s435
        %s437 = smul.addr %s436, 8
        %s438 = scalar_lea.vmem %s11, %s437
        %s439 = smul.u32 16, %s29
        %v441 = vlaneseq
        %v442 = vand.u32 %v441, 127
        %vm443 = vcmp.lt.s32.totalorder %v442, 32
        %v444 = vsel %vm443, 1, 0
        %v445 = vcvt.s32.f32 %v444
        %p446 = scmp.eq.s32.totalorder %s29, 0
        // Predicated region
        $region73: #{fwd.1} parent=63 // pred_check
          %p447 = pneg %p446
        $region74: #{fwd.1} parent=63 // pred_check_branch
          %449 = sbr.rel (%p447) target = $region76
        $region75: #{fwd.1} parent=63 // pred_region
          %v450 = vld [vmem:[%s429] sm:$0xff]
          %v451 = vld [vmem:[%s429 + $0x8] sm:$0xff]
          %v452 = vld [vmem:[%s429 + $0x10] sm:$0xff]
          %v453 = vld [vmem:[%s429 + $0x18] sm:$0xff]
          %v454 = vld [vmem:[%s429 + $0x20] sm:$0xff]
          %v455 = vld [vmem:[%s429 + $0x28] sm:$0xff]
          %v456 = vld [vmem:[%s429 + $0x30] sm:$0xff]
          %v457 = vld [vmem:[%s429 + $0x38] sm:$0xff]
          %v458 = vld [vmem:[%s429 + $0x40] sm:$0xff]
          %v459 = vld [vmem:[%s429 + $0x48] sm:$0xff]
          %v460 = vld [vmem:[%s429 + $0x50] sm:$0xff]
          %v461 = vld [vmem:[%s429 + $0x58] sm:$0xff]
          %v462 = vld [vmem:[%s429 + $0x60] sm:$0xff]
          %v463 = vld [vmem:[%s429 + $0x68] sm:$0xff]
          %v464 = vld [vmem:[%s429 + $0x70] sm:$0xff]
          %v465 = vld [vmem:[%s429 + $0x78] sm:$0xff]
          %v466 = vld [vmem:[%s3] sm:$0x1]
          %v467 = vld [vmem:[%s4] sm:$0x1]
          %468 = vadd.xlane.f32.xlu0 %v450
          %v469 = vpop.xlane.xlu0 %468
          %470 = vadd.xlane.f32.xlu0 %v451
          %v471 = vpop.xlane.xlu0 %470
          %472 = vadd.xlane.f32.xlu0 %v452
          %v473 = vpop.xlane.xlu0 %472
          %474 = vadd.xlane.f32.xlu0 %v453
          %v475 = vpop.xlane.xlu0 %474
          %476 = vadd.xlane.f32.xlu0 %v454
          %v477 = vpop.xlane.xlu0 %476
          %478 = vadd.xlane.f32.xlu0 %v455
          %v479 = vpop.xlane.xlu0 %478
          %480 = vadd.xlane.f32.xlu0 %v456
          %v481 = vpop.xlane.xlu0 %480
          %482 = vadd.xlane.f32.xlu0 %v457
          %v483 = vpop.xlane.xlu0 %482
          %484 = vadd.xlane.f32.xlu0 %v458
          %v485 = vpop.xlane.xlu0 %484
          %486 = vadd.xlane.f32.xlu0 %v459
          %v487 = vpop.xlane.xlu0 %486
          %488 = vadd.xlane.f32.xlu0 %v460
          %v489 = vpop.xlane.xlu0 %488
          %490 = vadd.xlane.f32.xlu0 %v461
          %v491 = vpop.xlane.xlu0 %490
          %492 = vadd.xlane.f32.xlu0 %v462
          %v493 = vpop.xlane.xlu0 %492
          %494 = vadd.xlane.f32.xlu0 %v463
          %v495 = vpop.xlane.xlu0 %494
          %496 = vadd.xlane.f32.xlu0 %v464
          %v497 = vpop.xlane.xlu0 %496
          %498 = vadd.xlane.f32.xlu0 %v465
          %v499 = vpop.xlane.xlu0 %498
          %v500 = vmul.f32 %v469, 0.03125
          %v501 = vmul.f32 %v471, 0.03125
          %v502 = vmul.f32 %v473, 0.03125
          %v503 = vmul.f32 %v475, 0.03125
          %v504 = vmul.f32 %v477, 0.03125
          %v505 = vmul.f32 %v479, 0.03125
          %v506 = vmul.f32 %v481, 0.03125
          %v507 = vmul.f32 %v483, 0.03125
          %v508 = vmul.f32 %v485, 0.03125
          %v509 = vmul.f32 %v487, 0.03125
          %v510 = vmul.f32 %v489, 0.03125
          %v511 = vmul.f32 %v491, 0.03125
          %v512 = vmul.f32 %v493, 0.03125
          %v513 = vmul.f32 %v495, 0.03125
          %v514 = vmul.f32 %v497, 0.03125
          %v515 = vmul.f32 %v499, 0.03125
          %v516 = vsub.f32 %v450, %v500
          %v517 = vsub.f32 %v451, %v501
          %v518 = vsub.f32 %v452, %v502
          %v519 = vsub.f32 %v453, %v503
          %v520 = vsub.f32 %v454, %v504
          %v521 = vsub.f32 %v455, %v505
          %v522 = vsub.f32 %v456, %v506
          %v523 = vsub.f32 %v457, %v507
          %v524 = vsub.f32 %v458, %v508
          %v525 = vsub.f32 %v459, %v509
          %v526 = vsub.f32 %v460, %v510
          %v527 = vsub.f32 %v461, %v511
          %v528 = vsub.f32 %v462, %v512
          %v529 = vsub.f32 %v463, %v513
          %v530 = vsub.f32 %v464, %v514
          %v531 = vsub.f32 %v465, %v515
          %v532 = vmul.f32 %v516, %v445
          %v533 = vmul.f32 %v517, %v445
          %v534 = vmul.f32 %v518, %v445
          %v535 = vmul.f32 %v519, %v445
          %v536 = vmul.f32 %v520, %v445
          %v537 = vmul.f32 %v521, %v445
          %v538 = vmul.f32 %v522, %v445
          %v539 = vmul.f32 %v523, %v445
          %v540 = vmul.f32 %v524, %v445
          %v541 = vmul.f32 %v525, %v445
          %v542 = vmul.f32 %v526, %v445
          %v543 = vmul.f32 %v527, %v445
          %v544 = vmul.f32 %v528, %v445
          %v545 = vmul.f32 %v529, %v445
          %v546 = vmul.f32 %v530, %v445
          %v547 = vmul.f32 %v531, %v445
          %v548 = vmul.f32 %v532, %v532
          %v549 = vmul.f32 %v533, %v533
          %v550 = vmul.f32 %v534, %v534
          %v551 = vmul.f32 %v535, %v535
          %v552 = vmul.f32 %v536, %v536
          %v553 = vmul.f32 %v537, %v537
          %v554 = vmul.f32 %v538, %v538
          %v555 = vmul.f32 %v539, %v539
          %v556 = vmul.f32 %v540, %v540
          %v557 = vmul.f32 %v541, %v541
          %v558 = vmul.f32 %v542, %v542
          %v559 = vmul.f32 %v543, %v543
          %v560 = vmul.f32 %v544, %v544
          %v561 = vmul.f32 %v545, %v545
          %v562 = vmul.f32 %v546, %v546
          %v563 = vmul.f32 %v547, %v547
          %564 = vadd.xlane.f32.xlu0 %v548
          %v565 = vpop.xlane.xlu0 %564
          %566 = vadd.xlane.f32.xlu0 %v549
          %v567 = vpop.xlane.xlu0 %566
          %568 = vadd.xlane.f32.xlu0 %v550
          %v569 = vpop.xlane.xlu0 %568
          %570 = vadd.xlane.f32.xlu0 %v551
          %v571 = vpop.xlane.xlu0 %570
          %572 = vadd.xlane.f32.xlu0 %v552
          %v573 = vpop.xlane.xlu0 %572
          %574 = vadd.xlane.f32.xlu0 %v553
          %v575 = vpop.xlane.xlu0 %574
          %576 = vadd.xlane.f32.xlu0 %v554
          %v577 = vpop.xlane.xlu0 %576
          %578 = vadd.xlane.f32.xlu0 %v555
          %v579 = vpop.xlane.xlu0 %578
          %580 = vadd.xlane.f32.xlu0 %v556
          %v581 = vpop.xlane.xlu0 %580
          %582 = vadd.xlane.f32.xlu0 %v557
          %v583 = vpop.xlane.xlu0 %582
          %584 = vadd.xlane.f32.xlu0 %v558
          %v585 = vpop.xlane.xlu0 %584
          %586 = vadd.xlane.f32.xlu0 %v559
          %v587 = vpop.xlane.xlu0 %586
          %588 = vadd.xlane.f32.xlu0 %v560
          %v589 = vpop.xlane.xlu0 %588
          %590 = vadd.xlane.f32.xlu0 %v561
          %v591 = vpop.xlane.xlu0 %590
          %592 = vadd.xlane.f32.xlu0 %v562
          %v593 = vpop.xlane.xlu0 %592
          %594 = vadd.xlane.f32.xlu0 %v563
          %v595 = vpop.xlane.xlu0 %594
          %v596 = vmul.f32 %v565, 0.03125
          %v597 = vmul.f32 %v567, 0.03125
          %v598 = vmul.f32 %v569, 0.03125
          %v599 = vmul.f32 %v571, 0.03125
          %v600 = vmul.f32 %v573, 0.03125
          %v601 = vmul.f32 %v575, 0.03125
          %v602 = vmul.f32 %v577, 0.03125
          %v603 = vmul.f32 %v579, 0.03125
          %v604 = vmul.f32 %v581, 0.03125
          %v605 = vmul.f32 %v583, 0.03125
          %v606 = vmul.f32 %v585, 0.03125
          %v607 = vmul.f32 %v587, 0.03125
          %v608 = vmul.f32 %v589, 0.03125
          %v609 = vmul.f32 %v591, 0.03125
          %v610 = vmul.f32 %v593, 0.03125
          %v611 = vmul.f32 %v595, 0.03125
          %v612 = vadd.f32 %v596, 1e-05
          %v613 = vadd.f32 %v597, 1e-05
          %v614 = vadd.f32 %v598, 1e-05
          %v615 = vadd.f32 %v599, 1e-05
          %v616 = vadd.f32 %v600, 1e-05
          %v617 = vadd.f32 %v601, 1e-05
          %v618 = vadd.f32 %v602, 1e-05
          %v619 = vadd.f32 %v603, 1e-05
          %v620 = vadd.f32 %v604, 1e-05
          %v621 = vadd.f32 %v605, 1e-05
          %v622 = vadd.f32 %v606, 1e-05
          %v623 = vadd.f32 %v607, 1e-05
          %v624 = vadd.f32 %v608, 1e-05
          %v625 = vadd.f32 %v609, 1e-05
          %v626 = vadd.f32 %v610, 1e-05
          %v627 = vadd.f32 %v611, 1e-05
          %v628 = vrsqrt.pop %v612
          %v629 = vrsqrt.pop %v613
          %v630 = vrsqrt.pop %v614
          %v631 = vrsqrt.pop %v615
          %v632 = vrsqrt.pop %v616
          %v633 = vrsqrt.pop %v617
          %v634 = vrsqrt.pop %v618
          %v635 = vrsqrt.pop %v619
          %v636 = vrsqrt.pop %v620
          %v637 = vrsqrt.pop %v621
          %v638 = vrsqrt.pop %v622
          %v639 = vrsqrt.pop %v623
          %v640 = vrsqrt.pop %v624
          %v641 = vrsqrt.pop %v625
          %v642 = vrsqrt.pop %v626
          %v643 = vrsqrt.pop %v627
          %v644 = vmul.f32 %v532, %v628
          %v645 = vmul.f32 %v533, %v629
          %v646 = vmul.f32 %v534, %v630
          %v647 = vmul.f32 %v535, %v631
          %v648 = vmul.f32 %v536, %v632
          %v649 = vmul.f32 %v537, %v633
          %v650 = vmul.f32 %v538, %v634
          %v651 = vmul.f32 %v539, %v635
          %v652 = vmul.f32 %v540, %v636
          %v653 = vmul.f32 %v541, %v637
          %v654 = vmul.f32 %v542, %v638
          %v655 = vmul.f32 %v543, %v639
          %v656 = vmul.f32 %v544, %v640
          %v657 = vmul.f32 %v545, %v641
          %v658 = vmul.f32 %v546, %v642
          %v659 = vmul.f32 %v547, %v643
          %v661 = vlaneseq
          %v662 = vshrl.u32 %v661, 7
          %v663 = vsub.s32 0, %v662
          %v664 = vrot.slane %v466, %v663
          %v666 = vmul.f32 %v644, %v664
          %v667 = vmul.f32 %v645, %v664
          %v668 = vmul.f32 %v646, %v664
          %v669 = vmul.f32 %v647, %v664
          %v670 = vmul.f32 %v648, %v664
          %v671 = vmul.f32 %v649, %v664
          %v672 = vmul.f32 %v650, %v664
          %v673 = vmul.f32 %v651, %v664
          %v674 = vmul.f32 %v652, %v664
          %v675 = vmul.f32 %v653, %v664
          %v676 = vmul.f32 %v654, %v664
          %v677 = vmul.f32 %v655, %v664
          %v678 = vmul.f32 %v656, %v664
          %v679 = vmul.f32 %v657, %v664
          %v680 = vmul.f32 %v658, %v664
          %v681 = vmul.f32 %v659, %v664
          %v683 = vlaneseq
          %v684 = vshrl.u32 %v683, 7
          %v685 = vsub.s32 0, %v684
          %v686 = vrot.slane %v467, %v685
          %v688 = vadd.f32 %v666, %v686
          %v689 = vadd.f32 %v667, %v686
          %v690 = vadd.f32 %v668, %v686
          %v691 = vadd.f32 %v669, %v686
          %v692 = vadd.f32 %v670, %v686
          %v693 = vadd.f32 %v671, %v686
          %v694 = vadd.f32 %v672, %v686
          %v695 = vadd.f32 %v673, %v686
          %v696 = vadd.f32 %v674, %v686
          %v697 = vadd.f32 %v675, %v686
          %v698 = vadd.f32 %v676, %v686
          %v699 = vadd.f32 %v677, %v686
          %v700 = vadd.f32 %v678, %v686
          %v701 = vadd.f32 %v679, %v686
          %v702 = vadd.f32 %v680, %v686
          %v703 = vadd.f32 %v681, %v686
          %v704 = vpack.c.bf16 %v689, %v688
          %v705 = vpack.c.bf16 %v691, %v690
          %v706 = vpack.c.bf16 %v693, %v692
          %v707 = vpack.c.bf16 %v695, %v694
          %v708 = vpack.c.bf16 %v697, %v696
          %v709 = vpack.c.bf16 %v699, %v698
          %v710 = vpack.c.bf16 %v701, %v700
          %v711 = vpack.c.bf16 %v703, %v702
          %v712 = vld [vmem:[%s1] sm:$0xff]
          %v713 = vld [vmem:[%s1 + $0x8] sm:$0xff]
          %v714 = vld [vmem:[%s1 + $0x10] sm:$0xff]
          %v715 = vld [vmem:[%s1 + $0x18] sm:$0xff]
          %v716 = vld [vmem:[%s1 + $0x20] sm:$0xff]
          %v717 = vld [vmem:[%s1 + $0x28] sm:$0xff]
          %v718 = vld [vmem:[%s1 + $0x30] sm:$0xff]
          %v719 = vld [vmem:[%s1 + $0x38] sm:$0xff]
          %v720 = vld [vmem:[%s1 + $0x40] sm:$0xff]
          %v721 = vld [vmem:[%s1 + $0x48] sm:$0xff]
          %v722 = vld [vmem:[%s1 + $0x50] sm:$0xff]
          %v723 = vld [vmem:[%s1 + $0x58] sm:$0xff]
          %v724 = vld [vmem:[%s1 + $0x60] sm:$0xff]
          %v725 = vld [vmem:[%s1 + $0x68] sm:$0xff]
          %v726 = vld [vmem:[%s1 + $0x70] sm:$0xff]
          %v727 = vld [vmem:[%s1 + $0x78] sm:$0xff]
          %v744 = vunpack.c.l.b16 %v712
          %v745 = vunpack.c.h.b16 %v712
          %v746 = vunpack.c.l.b16 %v713
          %v747 = vunpack.c.h.b16 %v713
          %v748 = vunpack.c.l.b16 %v714
          %v749 = vunpack.c.h.b16 %v714
          %v750 = vunpack.c.l.b16 %v715
          %v751 = vunpack.c.h.b16 %v715
          %v752 = vunpack.c.l.b16 %v716
          %v753 = vunpack.c.h.b16 %v716
          %v754 = vunpack.c.l.b16 %v717
          %v755 = vunpack.c.h.b16 %v717
          %v756 = vunpack.c.l.b16 %v718
          %v757 = vunpack.c.h.b16 %v718
          %v758 = vunpack.c.l.b16 %v719
          %v759 = vunpack.c.h.b16 %v719
          %v760 = vunpack.c.l.b16 %v720
          %v761 = vunpack.c.h.b16 %v720
          %v762 = vunpack.c.l.b16 %v721
          %v763 = vunpack.c.h.b16 %v721
          %v764 = vunpack.c.l.b16 %v722
          %v765 = vunpack.c.h.b16 %v722
          %v766 = vunpack.c.l.b16 %v723
          %v767 = vunpack.c.h.b16 %v723
          %v768 = vunpack.c.l.b16 %v724
          %v769 = vunpack.c.h.b16 %v724
          %v770 = vunpack.c.l.b16 %v725
          %v771 = vunpack.c.h.b16 %v725
          %v772 = vunpack.c.l.b16 %v726
          %v773 = vunpack.c.h.b16 %v726
          %v774 = vunpack.c.l.b16 %v727
          %v775 = vunpack.c.h.b16 %v727
          %v776 = vpack.c.b16 %v746, %v744
          %v777 = vpack.c.b16 %v747, %v745
          %v778 = vpack.c.b16 %v750, %v748
          %v779 = vpack.c.b16 %v751, %v749
          %v780 = vpack.c.b16 %v754, %v752
          %v781 = vpack.c.b16 %v755, %v753
          %v782 = vpack.c.b16 %v758, %v756
          %v783 = vpack.c.b16 %v759, %v757
          %v784 = vpack.c.b16 %v762, %v760
          %v785 = vpack.c.b16 %v763, %v761
          %v786 = vpack.c.b16 %v766, %v764
          %v787 = vpack.c.b16 %v767, %v765
          %v788 = vpack.c.b16 %v770, %v768
          %v789 = vpack.c.b16 %v771, %v769
          %v790 = vpack.c.b16 %v774, %v772
          %v791 = vpack.c.b16 %v775, %v773
          %808 = vmatprep.subr.bf16.mxu0 %v791
          %809 = vmatpush1.bf16.msra.mxu0 %v790
          %810 = vmatprep.subr.bf16.mxu0 %v789
          %811 = vmatpush1.bf16.msra.mxu0 %v788
          %812 = vmatprep.subr.bf16.mxu0 %v787
          %813 = vmatpush1.bf16.msra.mxu0 %v786
          %814 = vmatprep.subr.bf16.mxu0 %v785
          %815 = vmatpush1.bf16.msra.mxu0 %v784
          %816 = vmatprep.subr.bf16.mxu0 %v783
          %817 = vmatpush1.bf16.msra.mxu0 %v782
          %818 = vmatprep.subr.bf16.mxu0 %v781
          %819 = vmatpush1.bf16.msra.mxu0 %v780
          %820 = vmatprep.subr.bf16.mxu0 %v779
          %821 = vmatpush1.bf16.msra.mxu0 %v778
          %822 = vmatprep.subr.bf16.mxu0 %v777
          %823 = vmatpush1.bf16.msra.mxu0 %v776
          %824 = vmatprep.subr.bf16.mxu0 0
          %825 = vmatpush2.bf16.msra.mxu0 0
          %826 = vmatprep.subr.bf16.mxu0 0
          %827 = vmatpush2.bf16.msra.mxu0 0
          %828 = vmatprep.subr.bf16.mxu0 0
          %829 = vmatpush2.bf16.msra.mxu0 0
          %830 = vmatprep.subr.bf16.mxu0 0
          %831 = vmatpush2.bf16.msra.mxu0 0
          %832 = vmatprep.subr.bf16.mxu0 0
          %833 = vmatpush2.bf16.msra.mxu0 0
          %834 = vmatprep.subr.bf16.mxu0 0
          %835 = vmatpush2.bf16.msra.mxu0 0
          %836 = vmatprep.subr.bf16.mxu0 0
          %837 = vmatpush2.bf16.msra.mxu0 0
          %838 = vmatprep.subr.bf16.mxu0 0
          %839 = vmatpush2.bf16.msra.mxu0 0
          %840 = vmatprep.mubr.bf16.mxu0 0
          %841 = vmatmul.mubr.bf16.gmra.mxu0 %v704
          %v842 = vpop.f32.mrf.mxu0
          %v843 = vadd.f32 0.0, %v842
          %v844 = vpop.f32.mrf.mxu0
          %v845 = vadd.f32 0.0, %v844
          %v846 = vpop.f32.mrf.mxu0
          %v847 = vadd.f32 0.0, %v846
          %v848 = vpop.f32.mrf.mxu0
          %v849 = vadd.f32 0.0, %v848
          %850 = vmatprep.mubr.bf16.mxu0 0
          %851 = vmatmul.mubr.bf16.gmra.mxu0 %v705
          %v852 = vpop.f32.mrf.mxu0
          %v853 = vadd.f32 0.0, %v852
          %v854 = vpop.f32.mrf.mxu0
          %v855 = vadd.f32 0.0, %v854
          %v856 = vpop.f32.mrf.mxu0
          %v857 = vadd.f32 0.0, %v856
          %v858 = vpop.f32.mrf.mxu0
          %v859 = vadd.f32 0.0, %v858
          %860 = vmatprep.mubr.bf16.mxu0 0
          %861 = vmatmul.mubr.bf16.gmra.mxu0 %v706
          %v862 = vpop.f32.mrf.mxu0
          %v863 = vadd.f32 0.0, %v862
          %v864 = vpop.f32.mrf.mxu0
          %v865 = vadd.f32 0.0, %v864
          %v866 = vpop.f32.mrf.mxu0
          %v867 = vadd.f32 0.0, %v866
          %v868 = vpop.f32.mrf.mxu0
          %v869 = vadd.f32 0.0, %v868
          %870 = vmatprep.mubr.bf16.mxu0 0
          %871 = vmatmul.mubr.bf16.gmra.mxu0 %v707
          %v872 = vpop.f32.mrf.mxu0
          %v873 = vadd.f32 0.0, %v872
          %v874 = vpop.f32.mrf.mxu0
          %v875 = vadd.f32 0.0, %v874
          %v876 = vpop.f32.mrf.mxu0
          %v877 = vadd.f32 0.0, %v876
          %v878 = vpop.f32.mrf.mxu0
          %v879 = vadd.f32 0.0, %v878
          %880 = vmatprep.mubr.bf16.mxu0 0
          %881 = vmatmul.mubr.bf16.gmra.mxu0 %v708
          %v882 = vpop.f32.mrf.mxu0
          %v883 = vadd.f32 0.0, %v882
          %v884 = vpop.f32.mrf.mxu0
          %v885 = vadd.f32 0.0, %v884
          %v886 = vpop.f32.mrf.mxu0
          %v887 = vadd.f32 0.0, %v886
          %v888 = vpop.f32.mrf.mxu0
          %v889 = vadd.f32 0.0, %v888
          %890 = vmatprep.mubr.bf16.mxu0 0
          %891 = vmatmul.mubr.bf16.gmra.mxu0 %v709
          %v892 = vpop.f32.mrf.mxu0
          %v893 = vadd.f32 0.0, %v892
          %v894 = vpop.f32.mrf.mxu0
          %v895 = vadd.f32 0.0, %v894
          %v896 = vpop.f32.mrf.mxu0
          %v897 = vadd.f32 0.0, %v896
          %v898 = vpop.f32.mrf.mxu0
          %v899 = vadd.f32 0.0, %v898
          %900 = vmatprep.mubr.bf16.mxu0 0
          %901 = vmatmul.mubr.bf16.gmra.mxu0 %v710
          %v902 = vpop.f32.mrf.mxu0
          %v903 = vadd.f32 0.0, %v902
          %v904 = vpop.f32.mrf.mxu0
          %v905 = vadd.f32 0.0, %v904
          %v906 = vpop.f32.mrf.mxu0
          %v907 = vadd.f32 0.0, %v906
          %v908 = vpop.f32.mrf.mxu0
          %v909 = vadd.f32 0.0, %v908
          %910 = vmatprep.mubr.bf16.mxu0 0
          %911 = vmatmul.mubr.bf16.gmra.mxu0 %v711
          %v912 = vpop.f32.mrf.mxu0
          %v913 = vadd.f32 0.0, %v912
          %v914 = vpop.f32.mrf.mxu0
          %v915 = vadd.f32 0.0, %v914
          %v916 = vpop.f32.mrf.mxu0
          %v917 = vadd.f32 0.0, %v916
          %v918 = vpop.f32.mrf.mxu0
          %v919 = vadd.f32 0.0, %v918
          %920 = vdwg.mxu0
          %v921 = vpack.c.bf16 %v847, %v843
          %v922 = vpack.c.bf16 %v849, %v845
          %v923 = vpack.c.bf16 %v857, %v853
          %v924 = vpack.c.bf16 %v859, %v855
          %v925 = vpack.c.bf16 %v867, %v863
          %v926 = vpack.c.bf16 %v869, %v865
          %v927 = vpack.c.bf16 %v877, %v873
          %v928 = vpack.c.bf16 %v879, %v875
          %v929 = vpack.c.bf16 %v887, %v883
          %v930 = vpack.c.bf16 %v889, %v885
          %v931 = vpack.c.bf16 %v897, %v893
          %v932 = vpack.c.bf16 %v899, %v895
          %v933 = vpack.c.bf16 %v907, %v903
          %v934 = vpack.c.bf16 %v909, %v905
          %v935 = vpack.c.bf16 %v917, %v913
          %v936 = vpack.c.bf16 %v919, %v915
          %v945 = vunpack.c.l.b16 %v921
          %v946 = vunpack.c.h.b16 %v921
          %v947 = vunpack.c.l.b16 %v923
          %v948 = vunpack.c.h.b16 %v923
          %v949 = vunpack.c.l.b16 %v925
          %v950 = vunpack.c.h.b16 %v925
          %v951 = vunpack.c.l.b16 %v927
          %v952 = vunpack.c.h.b16 %v927
          %v953 = vunpack.c.l.b16 %v929
          %v954 = vunpack.c.h.b16 %v929
          %v955 = vunpack.c.l.b16 %v931
          %v956 = vunpack.c.h.b16 %v931
          %v957 = vunpack.c.l.b16 %v933
          %v958 = vunpack.c.h.b16 %v933
          %v959 = vunpack.c.l.b16 %v935
          %v960 = vunpack.c.h.b16 %v935
          %v961 = vpack.c.b16 %v945, %v945
          %v962 = vpack.c.b16 %v946, %v946
          %v963 = vpack.c.b16 %v947, %v947
          %v964 = vpack.c.b16 %v948, %v948
          %v965 = vpack.c.b16 %v949, %v949
          %v966 = vpack.c.b16 %v950, %v950
          %v967 = vpack.c.b16 %v951, %v951
          %v968 = vpack.c.b16 %v952, %v952
          %v969 = vpack.c.b16 %v953, %v953
          %v970 = vpack.c.b16 %v954, %v954
          %v971 = vpack.c.b16 %v955, %v955
          %v972 = vpack.c.b16 %v956, %v956
          %v973 = vpack.c.b16 %v957, %v957
          %v974 = vpack.c.b16 %v958, %v958
          %v975 = vpack.c.b16 %v959, %v959
          %v976 = vpack.c.b16 %v960, %v960
          %993 = vst [vmem:[#allocation2] sm:$0xf] %v961
          %994 = vst [vmem:[#allocation2 + $0x4] sm:$0xf] %v962
          %995 = vst [vmem:[#allocation2 + $0x8] sm:$0xf] %v963
          %996 = vst [vmem:[#allocation2 + $0xc] sm:$0xf] %v964
          %997 = vst [vmem:[#allocation2 + $0x10] sm:$0xf] %v965
          %998 = vst [vmem:[#allocation2 + $0x14] sm:$0xf] %v966
          %999 = vst [vmem:[#allocation2 + $0x18] sm:$0xf] %v967
          %1000 = vst [vmem:[#allocation2 + $0x1c] sm:$0xf] %v968
          %1001 = vst [vmem:[#allocation2 + $0x20] sm:$0xf] %v969
          %1002 = vst [vmem:[#allocation2 + $0x24] sm:$0xf] %v970
          %1003 = vst [vmem:[#allocation2 + $0x28] sm:$0xf] %v971
          %1004 = vst [vmem:[#allocation2 + $0x2c] sm:$0xf] %v972
          %1005 = vst [vmem:[#allocation2 + $0x30] sm:$0xf] %v973
          %1006 = vst [vmem:[#allocation2 + $0x34] sm:$0xf] %v974
          %1007 = vst [vmem:[#allocation2 + $0x38] sm:$0xf] %v975
          %1008 = vst [vmem:[#allocation2 + $0x3c] sm:$0xf] %v976
          %v1017 = vunpack.c.l.b16 %v922
          %v1018 = vunpack.c.h.b16 %v922
          %v1019 = vunpack.c.l.b16 %v924
          %v1020 = vunpack.c.h.b16 %v924
          %v1021 = vunpack.c.l.b16 %v926
          %v1022 = vunpack.c.h.b16 %v926
          %v1023 = vunpack.c.l.b16 %v928
          %v1024 = vunpack.c.h.b16 %v928
          %v1025 = vunpack.c.l.b16 %v930
          %v1026 = vunpack.c.h.b16 %v930
          %v1027 = vunpack.c.l.b16 %v932
          %v1028 = vunpack.c.h.b16 %v932
          %v1029 = vunpack.c.l.b16 %v934
          %v1030 = vunpack.c.h.b16 %v934
          %v1031 = vunpack.c.l.b16 %v936
          %v1032 = vunpack.c.h.b16 %v936
          %v1033 = vpack.c.b16 %v1017, %v1017
          %v1034 = vpack.c.b16 %v1018, %v1018
          %v1035 = vpack.c.b16 %v1019, %v1019
          %v1036 = vpack.c.b16 %v1020, %v1020
          %v1037 = vpack.c.b16 %v1021, %v1021
          %v1038 = vpack.c.b16 %v1022, %v1022
          %v1039 = vpack.c.b16 %v1023, %v1023
          %v1040 = vpack.c.b16 %v1024, %v1024
          %v1041 = vpack.c.b16 %v1025, %v1025
          %v1042 = vpack.c.b16 %v1026, %v1026
          %v1043 = vpack.c.b16 %v1027, %v1027
          %v1044 = vpack.c.b16 %v1028, %v1028
          %v1045 = vpack.c.b16 %v1029, %v1029
          %v1046 = vpack.c.b16 %v1030, %v1030
          %v1047 = vpack.c.b16 %v1031, %v1031
          %v1048 = vpack.c.b16 %v1032, %v1032
          %1065 = vst [vmem:[#allocation2 + $0x40] sm:$0xf] %v1033
          %1066 = vst [vmem:[#allocation2 + $0x44] sm:$0xf] %v1034
          %1067 = vst [vmem:[#allocation2 + $0x48] sm:$0xf] %v1035
          %1068 = vst [vmem:[#allocation2 + $0x4c] sm:$0xf] %v1036
          %1069 = vst [vmem:[#allocation2 + $0x50] sm:$0xf] %v1037
          %1070 = vst [vmem:[#allocation2 + $0x54] sm:$0xf] %v1038
          %1071 = vst [vmem:[#allocation2 + $0x58] sm:$0xf] %v1039
          %1072 = vst [vmem:[#allocation2 + $0x5c] sm:$0xf] %v1040
          %1073 = vst [vmem:[#allocation2 + $0x60] sm:$0xf] %v1041
          %1074 = vst [vmem:[#allocation2 + $0x64] sm:$0xf] %v1042
          %1075 = vst [vmem:[#allocation2 + $0x68] sm:$0xf] %v1043
          %1076 = vst [vmem:[#allocation2 + $0x6c] sm:$0xf] %v1044
          %1077 = vst [vmem:[#allocation2 + $0x70] sm:$0xf] %v1045
          %1078 = vst [vmem:[#allocation2 + $0x74] sm:$0xf] %v1046
          %1079 = vst [vmem:[#allocation2 + $0x78] sm:$0xf] %v1047
          %1080 = vst [vmem:[#allocation2 + $0x7c] sm:$0xf] %v1048
        $region76: #{fwd.1} parent=63 // pred_fallthru
          _
        %s1081 = smul.u32 %s29, 128
        %s1082 = scalar_lea.vmem %s429, %s1081
        %v1083 = vld [vmem:[%s1082] sm:$0xff]
        %v1084 = vld [vmem:[%s1082 + $0x8] sm:$0xff]
        %v1085 = vld [vmem:[%s1082 + $0x10] sm:$0xff]
        %v1086 = vld [vmem:[%s1082 + $0x18] sm:$0xff]
        %v1087 = vld [vmem:[%s1082 + $0x20] sm:$0xff]
        %v1088 = vld [vmem:[%s1082 + $0x28] sm:$0xff]
        %v1089 = vld [vmem:[%s1082 + $0x30] sm:$0xff]
        %v1090 = vld [vmem:[%s1082 + $0x38] sm:$0xff]
        %v1091 = vld [vmem:[%s1082 + $0x40] sm:$0xff]
        %v1092 = vld [vmem:[%s1082 + $0x48] sm:$0xff]
        %v1093 = vld [vmem:[%s1082 + $0x50] sm:$0xff]
        %v1094 = vld [vmem:[%s1082 + $0x58] sm:$0xff]
        %v1095 = vld [vmem:[%s1082 + $0x60] sm:$0xff]
        %v1096 = vld [vmem:[%s1082 + $0x68] sm:$0xff]
        %v1097 = vld [vmem:[%s1082 + $0x70] sm:$0xff]
        %v1098 = vld [vmem:[%s1082 + $0x78] sm:$0xff]
        %s1099 = sshra.s32 %s1081, 3
        %s1100 = sand.u32 %s1081, 7
        %s1101 = smul.u32 %s1099, 2
        %s1102 = smul.addr %s1101, 4
        %s1103 = scalar_lea.vmem %s2, %s1102
        %v1104 = vld [vmem:[%s1103] sm:$0xff]
        %v1105 = vld [vmem:[%s1103 + $0x8] sm:$0xff]
        %v1106 = vld [vmem:[%s1103 + $0x10] sm:$0xff]
        %v1107 = vld [vmem:[%s1103 + $0x18] sm:$0xff]
        %v1108 = vld [vmem:[%s1103 + $0x20] sm:$0xff]
        %v1109 = vld [vmem:[%s1103 + $0x28] sm:$0xff]
        %v1110 = vld [vmem:[%s1103 + $0x30] sm:$0xff]
        %v1111 = vld [vmem:[%s1103 + $0x38] sm:$0xff]
        %v1112 = vld [vmem:[%s1103 + $0x40] sm:$0xff]
        %v1113 = vld [vmem:[%s1103 + $0x48] sm:$0xff]
        %v1114 = vld [vmem:[%s1103 + $0x50] sm:$0xff]
        %v1115 = vld [vmem:[%s1103 + $0x58] sm:$0xff]
        %v1116 = vld [vmem:[%s1103 + $0x60] sm:$0xff]
        %v1117 = vld [vmem:[%s1103 + $0x68] sm:$0xff]
        %v1118 = vld [vmem:[%s1103 + $0x70] sm:$0xff]
        %v1119 = vld [vmem:[%s1103 + $0x78] sm:$0xff]
        %v1120 = vld [vmem:[#allocation2] sm:$0xf]
        %v1121 = vld [vmem:[#allocation2 + $0x4] sm:$0xf]
        %v1122 = vld [vmem:[#allocation2 + $0x8] sm:$0xf]
        %v1123 = vld [vmem:[#allocation2 + $0xc] sm:$0xf]
        %v1124 = vld [vmem:[#allocation2 + $0x10] sm:$0xf]
        %v1125 = vld [vmem:[#allocation2 + $0x14] sm:$0xf]
        %v1126 = vld [vmem:[#allocation2 + $0x18] sm:$0xf]
        %v1127 = vld [vmem:[#allocation2 + $0x1c] sm:$0xf]
        %v1128 = vld [vmem:[#allocation2 + $0x20] sm:$0xf]
        %v1129 = vld [vmem:[#allocation2 + $0x24] sm:$0xf]
        %v1130 = vld [vmem:[#allocation2 + $0x28] sm:$0xf]
        %v1131 = vld [vmem:[#allocation2 + $0x2c] sm:$0xf]
        %v1132 = vld [vmem:[#allocation2 + $0x30] sm:$0xf]
        %v1133 = vld [vmem:[#allocation2 + $0x34] sm:$0xf]
        %v1134 = vld [vmem:[#allocation2 + $0x38] sm:$0xf]
        %v1135 = vld [vmem:[#allocation2 + $0x3c] sm:$0xf]
        %v1136 = vld [vmem:[#allocation2 + $0x40] sm:$0xf]
        %v1137 = vld [vmem:[#allocation2 + $0x44] sm:$0xf]
        %v1138 = vld [vmem:[#allocation2 + $0x48] sm:$0xf]
        %v1139 = vld [vmem:[#allocation2 + $0x4c] sm:$0xf]
        %v1140 = vld [vmem:[#allocation2 + $0x50] sm:$0xf]
        %v1141 = vld [vmem:[#allocation2 + $0x54] sm:$0xf]
        %v1142 = vld [vmem:[#allocation2 + $0x58] sm:$0xf]
        %v1143 = vld [vmem:[#allocation2 + $0x5c] sm:$0xf]
        %v1144 = vld [vmem:[#allocation2 + $0x60] sm:$0xf]
        %v1145 = vld [vmem:[#allocation2 + $0x64] sm:$0xf]
        %v1146 = vld [vmem:[#allocation2 + $0x68] sm:$0xf]
        %v1147 = vld [vmem:[#allocation2 + $0x6c] sm:$0xf]
        %v1148 = vld [vmem:[#allocation2 + $0x70] sm:$0xf]
        %v1149 = vld [vmem:[#allocation2 + $0x74] sm:$0xf]
        %v1150 = vld [vmem:[#allocation2 + $0x78] sm:$0xf]
        %v1151 = vld [vmem:[#allocation2 + $0x7c] sm:$0xf]
        %v1168 = vunpack.c.l.b16 %v1104
        %v1169 = vunpack.c.h.b16 %v1104
        %v1170 = vunpack.c.l.b16 %v1105
        %v1171 = vunpack.c.h.b16 %v1105
        %v1172 = vunpack.c.l.b16 %v1106
        %v1173 = vunpack.c.h.b16 %v1106
        %v1174 = vunpack.c.l.b16 %v1107
        %v1175 = vunpack.c.h.b16 %v1107
        %v1176 = vunpack.c.l.b16 %v1108
        %v1177 = vunpack.c.h.b16 %v1108
        %v1178 = vunpack.c.l.b16 %v1109
        %v1179 = vunpack.c.h.b16 %v1109
        %v1180 = vunpack.c.l.b16 %v1110
        %v1181 = vunpack.c.h.b16 %v1110
        %v1182 = vunpack.c.l.b16 %v1111
        %v1183 = vunpack.c.h.b16 %v1111
        %v1184 = vunpack.c.l.b16 %v1112
        %v1185 = vunpack.c.h.b16 %v1112
        %v1186 = vunpack.c.l.b16 %v1113
        %v1187 = vunpack.c.h.b16 %v1113
        %v1188 = vunpack.c.l.b16 %v1114
        %v1189 = vunpack.c.h.b16 %v1114
        %v1190 = vunpack.c.l.b16 %v1115
        %v1191 = vunpack.c.h.b16 %v1115
        %v1192 = vunpack.c.l.b16 %v1116
        %v1193 = vunpack.c.h.b16 %v1116
        %v1194 = vunpack.c.l.b16 %v1117
        %v1195 = vunpack.c.h.b16 %v1117
        %v1196 = vunpack.c.l.b16 %v1118
        %v1197 = vunpack.c.h.b16 %v1118
        %v1198 = vunpack.c.l.b16 %v1119
        %v1199 = vunpack.c.h.b16 %v1119
        %v1200 = vpack.c.b16 %v1170, %v1168
        %v1201 = vpack.c.b16 %v1171, %v1169
        %v1202 = vpack.c.b16 %v1174, %v1172
        %v1203 = vpack.c.b16 %v1175, %v1173
        %v1204 = vpack.c.b16 %v1178, %v1176
        %v1205 = vpack.c.b16 %v1179, %v1177
        %v1206 = vpack.c.b16 %v1182, %v1180
        %v1207 = vpack.c.b16 %v1183, %v1181
        %v1208 = vpack.c.b16 %v1186, %v1184
        %v1209 = vpack.c.b16 %v1187, %v1185
        %v1210 = vpack.c.b16 %v1190, %v1188
        %v1211 = vpack.c.b16 %v1191, %v1189
        %v1212 = vpack.c.b16 %v1194, %v1192
        %v1213 = vpack.c.b16 %v1195, %v1193
        %v1214 = vpack.c.b16 %v1198, %v1196
        %v1215 = vpack.c.b16 %v1199, %v1197
        %v1264 = vunpack.c.l.b16 %v1120
        %v1265 = vunpack.c.l.b16 %v1121
        %v1266 = vunpack.c.l.b16 %v1122
        %v1267 = vunpack.c.l.b16 %v1123
        %v1268 = vunpack.c.l.b16 %v1124
        %v1269 = vunpack.c.l.b16 %v1125
        %v1270 = vunpack.c.l.b16 %v1126
        %v1271 = vunpack.c.l.b16 %v1127
        %v1272 = vunpack.c.l.b16 %v1128
        %v1273 = vunpack.c.l.b16 %v1129
        %v1274 = vunpack.c.l.b16 %v1130
        %v1275 = vunpack.c.l.b16 %v1131
        %v1276 = vunpack.c.l.b16 %v1132
        %v1277 = vunpack.c.l.b16 %v1133
        %v1278 = vunpack.c.l.b16 %v1134
        %v1279 = vunpack.c.l.b16 %v1135
        %v1280 = vunpack.c.l.b16 %v1136
        %v1281 = vunpack.c.l.b16 %v1137
        %v1282 = vunpack.c.l.b16 %v1138
        %v1283 = vunpack.c.l.b16 %v1139
        %v1284 = vunpack.c.l.b16 %v1140
        %v1285 = vunpack.c.l.b16 %v1141
        %v1286 = vunpack.c.l.b16 %v1142
        %v1287 = vunpack.c.l.b16 %v1143
        %v1288 = vunpack.c.l.b16 %v1144
        %v1289 = vunpack.c.l.b16 %v1145
        %v1290 = vunpack.c.l.b16 %v1146
        %v1291 = vunpack.c.l.b16 %v1147
        %v1292 = vunpack.c.l.b16 %v1148
        %v1293 = vunpack.c.l.b16 %v1149
        %v1294 = vunpack.c.l.b16 %v1150
        %v1295 = vunpack.c.l.b16 %v1151
        %v1296 = vpack.c.b16 %v1265, %v1264
        %v1297 = vpack.c.b16 %v1267, %v1266
        %v1298 = vpack.c.b16 %v1269, %v1268
        %v1299 = vpack.c.b16 %v1271, %v1270
        %v1300 = vpack.c.b16 %v1273, %v1272
        %v1301 = vpack.c.b16 %v1275, %v1274
        %v1302 = vpack.c.b16 %v1277, %v1276
        %v1303 = vpack.c.b16 %v1279, %v1278
        %v1304 = vpack.c.b16 %v1281, %v1280
        %v1305 = vpack.c.b16 %v1283, %v1282
        %v1306 = vpack.c.b16 %v1285, %v1284
        %v1307 = vpack.c.b16 %v1287, %v1286
        %v1308 = vpack.c.b16 %v1289, %v1288
        %v1309 = vpack.c.b16 %v1291, %v1290
        %v1310 = vpack.c.b16 %v1293, %v1292
        %v1311 = vpack.c.b16 %v1295, %v1294
        %1328 = vmatprep.subr.bf16.mxu0 0
        %1329 = vmatpush1.bf16.msra.mxu0 %v1303
        %1330 = vmatprep.subr.bf16.mxu0 0
        %1331 = vmatpush1.bf16.msra.mxu0 %v1302
        %1332 = vmatprep.subr.bf16.mxu0 0
        %1333 = vmatpush1.bf16.msra.mxu0 %v1301
        %1334 = vmatprep.subr.bf16.mxu0 0
        %1335 = vmatpush1.bf16.msra.mxu0 %v1300
        %1336 = vmatprep.subr.bf16.mxu0 0
        %1337 = vmatpush1.bf16.msra.mxu0 %v1299
        %1338 = vmatprep.subr.bf16.mxu0 0
        %1339 = vmatpush1.bf16.msra.mxu0 %v1298
        %1340 = vmatprep.subr.bf16.mxu0 0
        %1341 = vmatpush1.bf16.msra.mxu0 %v1297
        %1342 = vmatprep.subr.bf16.mxu0 0
        %1343 = vmatpush1.bf16.msra.mxu0 %v1296
        %1344 = vmatprep.subr.bf16.mxu0 0
        %1345 = vmatpush2.bf16.msra.mxu0 %v1311
        %1346 = vmatprep.subr.bf16.mxu0 0
        %1347 = vmatpush2.bf16.msra.mxu0 %v1310
        %1348 = vmatprep.subr.bf16.mxu0 0
        %1349 = vmatpush2.bf16.msra.mxu0 %v1309
        %1350 = vmatprep.subr.bf16.mxu0 0
        %1351 = vmatpush2.bf16.msra.mxu0 %v1308
        %1352 = vmatprep.subr.bf16.mxu0 0
        %1353 = vmatpush2.bf16.msra.mxu0 %v1307
        %1354 = vmatprep.subr.bf16.mxu0 0
        %1355 = vmatpush2.bf16.msra.mxu0 %v1306
        %1356 = vmatprep.subr.bf16.mxu0 0
        %1357 = vmatpush2.bf16.msra.mxu0 %v1305
        %1358 = vmatprep.subr.bf16.mxu0 0
        %1359 = vmatpush2.bf16.msra.mxu0 %v1304
        %1360 = vmatprep.mubr.bf16.mxu0 %v1201
        %1361 = vmatmul.mubr.bf16.gmra.mxu0 %v1200
        %v1362 = vpop.f32.mrf.mxu0
        %v1363 = vadd.f32 0.0, %v1362
        %v1364 = vpop.f32.mrf.mxu0
        %v1365 = vpop.f32.mrf.mxu0
        %v1366 = vadd.f32 0.0, %v1365
        %v1367 = vpop.f32.mrf.mxu0
        %1368 = vmatprep.mubr.bf16.mxu0 %v1203
        %1369 = vmatmul.mubr.bf16.gmra.mxu0 %v1202
        %v1370 = vpop.f32.mrf.mxu0
        %v1371 = vadd.f32 0.0, %v1370
        %v1372 = vpop.f32.mrf.mxu0
        %v1373 = vpop.f32.mrf.mxu0
        %v1374 = vadd.f32 0.0, %v1373
        %v1375 = vpop.f32.mrf.mxu0
        %1376 = vmatprep.mubr.bf16.mxu0 %v1205
        %1377 = vmatmul.mubr.bf16.gmra.mxu0 %v1204
        %v1378 = vpop.f32.mrf.mxu0
        %v1379 = vadd.f32 0.0, %v1378
        %v1380 = vpop.f32.mrf.mxu0
        %v1381 = vpop.f32.mrf.mxu0
        %v1382 = vadd.f32 0.0, %v1381
        %v1383 = vpop.f32.mrf.mxu0
        %1384 = vmatprep.mubr.bf16.mxu0 %v1207
        %1385 = vmatmul.mubr.bf16.gmra.mxu0 %v1206
        %v1386 = vpop.f32.mrf.mxu0
        %v1387 = vadd.f32 0.0, %v1386
        %v1388 = vpop.f32.mrf.mxu0
        %v1389 = vpop.f32.mrf.mxu0
        %v1390 = vadd.f32 0.0, %v1389
        %v1391 = vpop.f32.mrf.mxu0
        %1392 = vmatprep.mubr.bf16.mxu0 %v1209
        %1393 = vmatmul.mubr.bf16.gmra.mxu0 %v1208
        %v1394 = vpop.f32.mrf.mxu0
        %v1395 = vadd.f32 0.0, %v1394
        %v1396 = vpop.f32.mrf.mxu0
        %v1397 = vpop.f32.mrf.mxu0
        %v1398 = vadd.f32 0.0, %v1397
        %v1399 = vpop.f32.mrf.mxu0
        %1400 = vmatprep.mubr.bf16.mxu0 %v1211
        %1401 = vmatmul.mubr.bf16.gmra.mxu0 %v1210
        %v1402 = vpop.f32.mrf.mxu0
        %v1403 = vadd.f32 0.0, %v1402
        %v1404 = vpop.f32.mrf.mxu0
        %v1405 = vpop.f32.mrf.mxu0
        %v1406 = vadd.f32 0.0, %v1405
        %v1407 = vpop.f32.mrf.mxu0
        %1408 = vmatprep.mubr.bf16.mxu0 %v1213
        %1409 = vmatmul.mubr.bf16.gmra.mxu0 %v1212
        %v1410 = vpop.f32.mrf.mxu0
        %v1411 = vadd.f32 0.0, %v1410
        %v1412 = vpop.f32.mrf.mxu0
        %v1413 = vpop.f32.mrf.mxu0
        %v1414 = vadd.f32 0.0, %v1413
        %v1415 = vpop.f32.mrf.mxu0
        %1416 = vmatprep.mubr.bf16.mxu0 %v1215
        %1417 = vmatmul.mubr.bf16.gmra.mxu0 %v1214
        %v1418 = vpop.f32.mrf.mxu0
        %v1419 = vadd.f32 0.0, %v1418
        %v1420 = vpop.f32.mrf.mxu0
        %v1421 = vpop.f32.mrf.mxu0
        %v1422 = vadd.f32 0.0, %v1421
        %v1423 = vpop.f32.mrf.mxu0
        %1424 = vdwg.mxu0
        %v1425 = vadd.f32 %v1083, %v1363
        %v1426 = vadd.f32 %v1084, %v1366
        %v1427 = vadd.f32 %v1085, %v1371
        %v1428 = vadd.f32 %v1086, %v1374
        %v1429 = vadd.f32 %v1087, %v1379
        %v1430 = vadd.f32 %v1088, %v1382
        %v1431 = vadd.f32 %v1089, %v1387
        %v1432 = vadd.f32 %v1090, %v1390
        %v1433 = vadd.f32 %v1091, %v1395
        %v1434 = vadd.f32 %v1092, %v1398
        %v1435 = vadd.f32 %v1093, %v1403
        %v1436 = vadd.f32 %v1094, %v1406
        %v1437 = vadd.f32 %v1095, %v1411
        %v1438 = vadd.f32 %v1096, %v1414
        %v1439 = vadd.f32 %v1097, %v1419
        %v1440 = vadd.f32 %v1098, %v1422
        %v1441 = vld [vmem:[%s5] sm:$0x1]
        %v1442 = vld [vmem:[%s6] sm:$0x1]
        %1443 = vadd.xlane.f32.xlu0 %v1425
        %v1444 = vpop.xlane.xlu0 %1443
        %1445 = vadd.xlane.f32.xlu0 %v1426
        %v1446 = vpop.xlane.xlu0 %1445
        %1447 = vadd.xlane.f32.xlu0 %v1427
        %v1448 = vpop.xlane.xlu0 %1447
        %1449 = vadd.xlane.f32.xlu0 %v1428
        %v1450 = vpop.xlane.xlu0 %1449
        %1451 = vadd.xlane.f32.xlu0 %v1429
        %v1452 = vpop.xlane.xlu0 %1451
        %1453 = vadd.xlane.f32.xlu0 %v1430
        %v1454 = vpop.xlane.xlu0 %1453
        %1455 = vadd.xlane.f32.xlu0 %v1431
        %v1456 = vpop.xlane.xlu0 %1455
        %1457 = vadd.xlane.f32.xlu0 %v1432
        %v1458 = vpop.xlane.xlu0 %1457
        %1459 = vadd.xlane.f32.xlu0 %v1433
        %v1460 = vpop.xlane.xlu0 %1459
        %1461 = vadd.xlane.f32.xlu0 %v1434
        %v1462 = vpop.xlane.xlu0 %1461
        %1463 = vadd.xlane.f32.xlu0 %v1435
        %v1464 = vpop.xlane.xlu0 %1463
        %1465 = vadd.xlane.f32.xlu0 %v1436
        %v1466 = vpop.xlane.xlu0 %1465
        %1467 = vadd.xlane.f32.xlu0 %v1437
        %v1468 = vpop.xlane.xlu0 %1467
        %1469 = vadd.xlane.f32.xlu0 %v1438
        %v1470 = vpop.xlane.xlu0 %1469
        %1471 = vadd.xlane.f32.xlu0 %v1439
        %v1472 = vpop.xlane.xlu0 %1471
        %1473 = vadd.xlane.f32.xlu0 %v1440
        %v1474 = vpop.xlane.xlu0 %1473
        %v1475 = vmul.f32 %v1444, 0.03125
        %v1476 = vmul.f32 %v1446, 0.03125
        %v1477 = vmul.f32 %v1448, 0.03125
        %v1478 = vmul.f32 %v1450, 0.03125
        %v1479 = vmul.f32 %v1452, 0.03125
        %v1480 = vmul.f32 %v1454, 0.03125
        %v1481 = vmul.f32 %v1456, 0.03125
        %v1482 = vmul.f32 %v1458, 0.03125
        %v1483 = vmul.f32 %v1460, 0.03125
        %v1484 = vmul.f32 %v1462, 0.03125
        %v1485 = vmul.f32 %v1464, 0.03125
        %v1486 = vmul.f32 %v1466, 0.03125
        %v1487 = vmul.f32 %v1468, 0.03125
        %v1488 = vmul.f32 %v1470, 0.03125
        %v1489 = vmul.f32 %v1472, 0.03125
        %v1490 = vmul.f32 %v1474, 0.03125
        %v1491 = vsub.f32 %v1425, %v1475
        %v1492 = vsub.f32 %v1426, %v1476
        %v1493 = vsub.f32 %v1427, %v1477
        %v1494 = vsub.f32 %v1428, %v1478
        %v1495 = vsub.f32 %v1429, %v1479
        %v1496 = vsub.f32 %v1430, %v1480
        %v1497 = vsub.f32 %v1431, %v1481
        %v1498 = vsub.f32 %v1432, %v1482
        %v1499 = vsub.f32 %v1433, %v1483
        %v1500 = vsub.f32 %v1434, %v1484
        %v1501 = vsub.f32 %v1435, %v1485
        %v1502 = vsub.f32 %v1436, %v1486
        %v1503 = vsub.f32 %v1437, %v1487
        %v1504 = vsub.f32 %v1438, %v1488
        %v1505 = vsub.f32 %v1439, %v1489
        %v1506 = vsub.f32 %v1440, %v1490
        %v1507 = vmul.f32 %v1491, %v445
        %v1508 = vmul.f32 %v1492, %v445
        %v1509 = vmul.f32 %v1493, %v445
        %v1510 = vmul.f32 %v1494, %v445
        %v1511 = vmul.f32 %v1495, %v445
        %v1512 = vmul.f32 %v1496, %v445
        %v1513 = vmul.f32 %v1497, %v445
        %v1514 = vmul.f32 %v1498, %v445
        %v1515 = vmul.f32 %v1499, %v445
        %v1516 = vmul.f32 %v1500, %v445
        %v1517 = vmul.f32 %v1501, %v445
        %v1518 = vmul.f32 %v1502, %v445
        %v1519 = vmul.f32 %v1503, %v445
        %v1520 = vmul.f32 %v1504, %v445
        %v1521 = vmul.f32 %v1505, %v445
        %v1522 = vmul.f32 %v1506, %v445
        %v1523 = vmul.f32 %v1507, %v1507
        %v1524 = vmul.f32 %v1508, %v1508
        %v1525 = vmul.f32 %v1509, %v1509
        %v1526 = vmul.f32 %v1510, %v1510
        %v1527 = vmul.f32 %v1511, %v1511
        %v1528 = vmul.f32 %v1512, %v1512
        %v1529 = vmul.f32 %v1513, %v1513
        %v1530 = vmul.f32 %v1514, %v1514
        %v1531 = vmul.f32 %v1515, %v1515
        %v1532 = vmul.f32 %v1516, %v1516
        %v1533 = vmul.f32 %v1517, %v1517
        %v1534 = vmul.f32 %v1518, %v1518
        %v1535 = vmul.f32 %v1519, %v1519
        %v1536 = vmul.f32 %v1520, %v1520
        %v1537 = vmul.f32 %v1521, %v1521
        %v1538 = vmul.f32 %v1522, %v1522
        %1539 = vadd.xlane.f32.xlu0 %v1523
        %v1540 = vpop.xlane.xlu0 %1539
        %1541 = vadd.xlane.f32.xlu0 %v1524
        %v1542 = vpop.xlane.xlu0 %1541
        %1543 = vadd.xlane.f32.xlu0 %v1525
        %v1544 = vpop.xlane.xlu0 %1543
        %1545 = vadd.xlane.f32.xlu0 %v1526
        %v1546 = vpop.xlane.xlu0 %1545
        %1547 = vadd.xlane.f32.xlu0 %v1527
        %v1548 = vpop.xlane.xlu0 %1547
        %1549 = vadd.xlane.f32.xlu0 %v1528
        %v1550 = vpop.xlane.xlu0 %1549
        %1551 = vadd.xlane.f32.xlu0 %v1529
        %v1552 = vpop.xlane.xlu0 %1551
        %1553 = vadd.xlane.f32.xlu0 %v1530
        %v1554 = vpop.xlane.xlu0 %1553
        %1555 = vadd.xlane.f32.xlu0 %v1531
        %v1556 = vpop.xlane.xlu0 %1555
        %1557 = vadd.xlane.f32.xlu0 %v1532
        %v1558 = vpop.xlane.xlu0 %1557
        %1559 = vadd.xlane.f32.xlu0 %v1533
        %v1560 = vpop.xlane.xlu0 %1559
        %1561 = vadd.xlane.f32.xlu0 %v1534
        %v1562 = vpop.xlane.xlu0 %1561
        %1563 = vadd.xlane.f32.xlu0 %v1535
        %v1564 = vpop.xlane.xlu0 %1563
        %1565 = vadd.xlane.f32.xlu0 %v1536
        %v1566 = vpop.xlane.xlu0 %1565
        %1567 = vadd.xlane.f32.xlu0 %v1537
        %v1568 = vpop.xlane.xlu0 %1567
        %1569 = vadd.xlane.f32.xlu0 %v1538
        %v1570 = vpop.xlane.xlu0 %1569
        %v1571 = vmul.f32 %v1540, 0.03125
        %v1572 = vmul.f32 %v1542, 0.03125
        %v1573 = vmul.f32 %v1544, 0.03125
        %v1574 = vmul.f32 %v1546, 0.03125
        %v1575 = vmul.f32 %v1548, 0.03125
        %v1576 = vmul.f32 %v1550, 0.03125
        %v1577 = vmul.f32 %v1552, 0.03125
        %v1578 = vmul.f32 %v1554, 0.03125
        %v1579 = vmul.f32 %v1556, 0.03125
        %v1580 = vmul.f32 %v1558, 0.03125
        %v1581 = vmul.f32 %v1560, 0.03125
        %v1582 = vmul.f32 %v1562, 0.03125
        %v1583 = vmul.f32 %v1564, 0.03125
        %v1584 = vmul.f32 %v1566, 0.03125
        %v1585 = vmul.f32 %v1568, 0.03125
        %v1586 = vmul.f32 %v1570, 0.03125
        %v1587 = vadd.f32 %v1571, 1e-05
        %v1588 = vadd.f32 %v1572, 1e-05
        %v1589 = vadd.f32 %v1573, 1e-05
        %v1590 = vadd.f32 %v1574, 1e-05
        %v1591 = vadd.f32 %v1575, 1e-05
        %v1592 = vadd.f32 %v1576, 1e-05
        %v1593 = vadd.f32 %v1577, 1e-05
        %v1594 = vadd.f32 %v1578, 1e-05
        %v1595 = vadd.f32 %v1579, 1e-05
        %v1596 = vadd.f32 %v1580, 1e-05
        %v1597 = vadd.f32 %v1581, 1e-05
        %v1598 = vadd.f32 %v1582, 1e-05
        %v1599 = vadd.f32 %v1583, 1e-05
        %v1600 = vadd.f32 %v1584, 1e-05
        %v1601 = vadd.f32 %v1585, 1e-05
        %v1602 = vadd.f32 %v1586, 1e-05
        %v1603 = vrsqrt.pop %v1587
        %v1604 = vrsqrt.pop %v1588
        %v1605 = vrsqrt.pop %v1589
        %v1606 = vrsqrt.pop %v1590
        %v1607 = vrsqrt.pop %v1591
        %v1608 = vrsqrt.pop %v1592
        %v1609 = vrsqrt.pop %v1593
        %v1610 = vrsqrt.pop %v1594
        %v1611 = vrsqrt.pop %v1595
        %v1612 = vrsqrt.pop %v1596
        %v1613 = vrsqrt.pop %v1597
        %v1614 = vrsqrt.pop %v1598
        %v1615 = vrsqrt.pop %v1599
        %v1616 = vrsqrt.pop %v1600
        %v1617 = vrsqrt.pop %v1601
        %v1618 = vrsqrt.pop %v1602
        %v1619 = vmul.f32 %v1507, %v1603
        %v1620 = vmul.f32 %v1508, %v1604
        %v1621 = vmul.f32 %v1509, %v1605
        %v1622 = vmul.f32 %v1510, %v1606
        %v1623 = vmul.f32 %v1511, %v1607
        %v1624 = vmul.f32 %v1512, %v1608
        %v1625 = vmul.f32 %v1513, %v1609
        %v1626 = vmul.f32 %v1514, %v1610
        %v1627 = vmul.f32 %v1515, %v1611
        %v1628 = vmul.f32 %v1516, %v1612
        %v1629 = vmul.f32 %v1517, %v1613
        %v1630 = vmul.f32 %v1518, %v1614
        %v1631 = vmul.f32 %v1519, %v1615
        %v1632 = vmul.f32 %v1520, %v1616
        %v1633 = vmul.f32 %v1521, %v1617
        %v1634 = vmul.f32 %v1522, %v1618
        %v1636 = vlaneseq
        %v1637 = vshrl.u32 %v1636, 7
        %v1638 = vsub.s32 0, %v1637
        %v1639 = vrot.slane %v1441, %v1638
        %v1641 = vmul.f32 %v1619, %v1639
        %v1642 = vmul.f32 %v1620, %v1639
        %v1643 = vmul.f32 %v1621, %v1639
        %v1644 = vmul.f32 %v1622, %v1639
        %v1645 = vmul.f32 %v1623, %v1639
        %v1646 = vmul.f32 %v1624, %v1639
        %v1647 = vmul.f32 %v1625, %v1639
        %v1648 = vmul.f32 %v1626, %v1639
        %v1649 = vmul.f32 %v1627, %v1639
        %v1650 = vmul.f32 %v1628, %v1639
        %v1651 = vmul.f32 %v1629, %v1639
        %v1652 = vmul.f32 %v1630, %v1639
        %v1653 = vmul.f32 %v1631, %v1639
        %v1654 = vmul.f32 %v1632, %v1639
        %v1655 = vmul.f32 %v1633, %v1639
        %v1656 = vmul.f32 %v1634, %v1639
        %v1658 = vlaneseq
        %v1659 = vshrl.u32 %v1658, 7
        %v1660 = vsub.s32 0, %v1659
        %v1661 = vrot.slane %v1442, %v1660
        %v1663 = vadd.f32 %v1641, %v1661
        %v1664 = vadd.f32 %v1642, %v1661
        %v1665 = vadd.f32 %v1643, %v1661
        %v1666 = vadd.f32 %v1644, %v1661
        %v1667 = vadd.f32 %v1645, %v1661
        %v1668 = vadd.f32 %v1646, %v1661
        %v1669 = vadd.f32 %v1647, %v1661
        %v1670 = vadd.f32 %v1648, %v1661
        %v1671 = vadd.f32 %v1649, %v1661
        %v1672 = vadd.f32 %v1650, %v1661
        %v1673 = vadd.f32 %v1651, %v1661
        %v1674 = vadd.f32 %v1652, %v1661
        %v1675 = vadd.f32 %v1653, %v1661
        %v1676 = vadd.f32 %v1654, %v1661
        %v1677 = vadd.f32 %v1655, %v1661
        %v1678 = vadd.f32 %v1656, %v1661
        %v1679 = vpack.c.bf16 %v1664, %v1663
        %v1680 = vpack.c.bf16 %v1666, %v1665
        %v1681 = vpack.c.bf16 %v1668, %v1667
        %v1682 = vpack.c.bf16 %v1670, %v1669
        %v1683 = vpack.c.bf16 %v1672, %v1671
        %v1684 = vpack.c.bf16 %v1674, %v1673
        %v1685 = vpack.c.bf16 %v1676, %v1675
        %v1686 = vpack.c.bf16 %v1678, %v1677
        %v1687 = vld [vmem:[#allocation3] sm:$0xf]
        %v1688 = vld [vmem:[#allocation3 + $0x4] sm:$0xf]
        %v1689 = vld [vmem:[#allocation3 + $0x8] sm:$0xf]
        %v1690 = vld [vmem:[#allocation3 + $0xc] sm:$0xf]
        %v1691 = vld [vmem:[#allocation3 + $0x10] sm:$0xf]
        %v1692 = vld [vmem:[#allocation3 + $0x14] sm:$0xf]
        %v1693 = vld [vmem:[#allocation3 + $0x18] sm:$0xf]
        %v1694 = vld [vmem:[#allocation3 + $0x1c] sm:$0xf]
        %v1695 = vld [vmem:[#allocation3 + $0x20] sm:$0xf]
        %v1696 = vld [vmem:[#allocation3 + $0x24] sm:$0xf]
        %v1697 = vld [vmem:[#allocation3 + $0x28] sm:$0xf]
        %v1698 = vld [vmem:[#allocation3 + $0x2c] sm:$0xf]
        %v1699 = vld [vmem:[#allocation3 + $0x30] sm:$0xf]
        %v1700 = vld [vmem:[#allocation3 + $0x34] sm:$0xf]
        %v1701 = vld [vmem:[#allocation3 + $0x38] sm:$0xf]
        %v1702 = vld [vmem:[#allocation3 + $0x3c] sm:$0xf]
        %v1703 = vld [vmem:[%s8] sm:$0x1]
        %v1705 = vlaneseq
        %v1706 = vshrl.u32 %v1705, 7
        %v1707 = vsub.s32 0, %v1706
        %v1708 = vrot.slane %v1703, %v1707
        %v1726 = vunpack.c.l.b16 %v1687
        %v1727 = vunpack.c.l.b16 %v1688
        %v1728 = vunpack.c.l.b16 %v1689
        %v1729 = vunpack.c.l.b16 %v1690
        %v1730 = vunpack.c.l.b16 %v1691
        %v1731 = vunpack.c.l.b16 %v1692
        %v1732 = vunpack.c.l.b16 %v1693
        %v1733 = vunpack.c.l.b16 %v1694
        %v1734 = vunpack.c.l.b16 %v1695
        %v1735 = vunpack.c.l.b16 %v1696
        %v1736 = vunpack.c.l.b16 %v1697
        %v1737 = vunpack.c.l.b16 %v1698
        %v1738 = vunpack.c.l.b16 %v1699
        %v1739 = vunpack.c.l.b16 %v1700
        %v1740 = vunpack.c.l.b16 %v1701
        %v1741 = vunpack.c.l.b16 %v1702
        %v1742 = vpack.c.b16 %v1727, %v1726
        %v1743 = vpack.c.b16 %v1729, %v1728
        %v1744 = vpack.c.b16 %v1731, %v1730
        %v1745 = vpack.c.b16 %v1733, %v1732
        %v1746 = vpack.c.b16 %v1735, %v1734
        %v1747 = vpack.c.b16 %v1737, %v1736
        %v1748 = vpack.c.b16 %v1739, %v1738
        %v1749 = vpack.c.b16 %v1741, %v1740
        %1758 = vmatprep.subr.bf16.mxu0 0
        %1759 = vmatpush1.bf16.msra.mxu0 %v1749
        %1760 = vmatprep.subr.bf16.mxu0 0
        %1761 = vmatpush1.bf16.msra.mxu0 %v1748
        %1762 = vmatprep.subr.bf16.mxu0 0
        %1763 = vmatpush1.bf16.msra.mxu0 %v1747
        %1764 = vmatprep.subr.bf16.mxu0 0
        %1765 = vmatpush1.bf16.msra.mxu0 %v1746
        %1766 = vmatprep.subr.bf16.mxu0 0
        %1767 = vmatpush1.bf16.msra.mxu0 %v1745
        %1768 = vmatprep.subr.bf16.mxu0 0
        %1769 = vmatpush1.bf16.msra.mxu0 %v1744
        %1770 = vmatprep.subr.bf16.mxu0 0
        %1771 = vmatpush1.bf16.msra.mxu0 %v1743
        %1772 = vmatprep.subr.bf16.mxu0 0
        %1773 = vmatpush1.bf16.msra.mxu0 %v1742
        %1774 = vmatprep.subr.bf16.mxu0 0
        %1775 = vmatpush2.bf16.msra.mxu0 0
        %1776 = vmatprep.subr.bf16.mxu0 0
        %1777 = vmatpush2.bf16.msra.mxu0 0
        %1778 = vmatprep.subr.bf16.mxu0 0
        %1779 = vmatpush2.bf16.msra.mxu0 0
        %1780 = vmatprep.subr.bf16.mxu0 0
        %1781 = vmatpush2.bf16.msra.mxu0 0
        %1782 = vmatprep.subr.bf16.mxu0 0
        %1783 = vmatpush2.bf16.msra.mxu0 0
        %1784 = vmatprep.subr.bf16.mxu0 0
        %1785 = vmatpush2.bf16.msra.mxu0 0
        %1786 = vmatprep.subr.bf16.mxu0 0
        %1787 = vmatpush2.bf16.msra.mxu0 0
        %1788 = vmatprep.subr.bf16.mxu0 0
        %1789 = vmatpush2.bf16.msra.mxu0 0
        %1790 = vmatprep.mubr.bf16.mxu0 0
        %1791 = vmatmul.mubr.bf16.gmra.mxu0 %v1679
        %v1792 = vpop.f32.mrf.mxu0
        %v1793 = vadd.f32 %v1708, %v1792
        %v1794 = vpop.f32.mrf.mxu0
        %v1795 = vpop.f32.mrf.mxu0
        %v1796 = vadd.f32 %v1708, %v1795
        %v1797 = vpop.f32.mrf.mxu0
        %1798 = vmatprep.mubr.bf16.mxu0 0
        %1799 = vmatmul.mubr.bf16.gmra.mxu0 %v1680
        %v1800 = vpop.f32.mrf.mxu0
        %v1801 = vadd.f32 %v1708, %v1800
        %v1802 = vpop.f32.mrf.mxu0
        %v1803 = vpop.f32.mrf.mxu0
        %v1804 = vadd.f32 %v1708, %v1803
        %v1805 = vpop.f32.mrf.mxu0
        %1806 = vmatprep.mubr.bf16.mxu0 0
        %1807 = vmatmul.mubr.bf16.gmra.mxu0 %v1681
        %v1808 = vpop.f32.mrf.mxu0
        %v1809 = vadd.f32 %v1708, %v1808
        %v1810 = vpop.f32.mrf.mxu0
        %v1811 = vpop.f32.mrf.mxu0
        %v1812 = vadd.f32 %v1708, %v1811
        %v1813 = vpop.f32.mrf.mxu0
        %1814 = vmatprep.mubr.bf16.mxu0 0
        %1815 = vmatmul.mubr.bf16.gmra.mxu0 %v1682
        %v1816 = vpop.f32.mrf.mxu0
        %v1817 = vadd.f32 %v1708, %v1816
        %v1818 = vpop.f32.mrf.mxu0
        %v1819 = vpop.f32.mrf.mxu0
        %v1820 = vadd.f32 %v1708, %v1819
        %v1821 = vpop.f32.mrf.mxu0
        %1822 = vmatprep.mubr.bf16.mxu0 0
        %1823 = vmatmul.mubr.bf16.gmra.mxu0 %v1683
        %v1824 = vpop.f32.mrf.mxu0
        %v1825 = vadd.f32 %v1708, %v1824
        %v1826 = vpop.f32.mrf.mxu0
        %v1827 = vpop.f32.mrf.mxu0
        %v1828 = vadd.f32 %v1708, %v1827
        %v1829 = vpop.f32.mrf.mxu0
        %1830 = vmatprep.mubr.bf16.mxu0 0
        %1831 = vmatmul.mubr.bf16.gmra.mxu0 %v1684
        %v1832 = vpop.f32.mrf.mxu0
        %v1833 = vadd.f32 %v1708, %v1832
        %v1834 = vpop.f32.mrf.mxu0
        %v1835 = vpop.f32.mrf.mxu0
        %v1836 = vadd.f32 %v1708, %v1835
        %v1837 = vpop.f32.mrf.mxu0
        %1838 = vmatprep.mubr.bf16.mxu0 0
        %1839 = vmatmul.mubr.bf16.gmra.mxu0 %v1685
        %v1840 = vpop.f32.mrf.mxu0
        %v1841 = vadd.f32 %v1708, %v1840
        %v1842 = vpop.f32.mrf.mxu0
        %v1843 = vpop.f32.mrf.mxu0
        %v1844 = vadd.f32 %v1708, %v1843
        %v1845 = vpop.f32.mrf.mxu0
        %1846 = vmatprep.mubr.bf16.mxu0 0
        %1847 = vmatmul.mubr.bf16.gmra.mxu0 %v1686
        %v1848 = vpop.f32.mrf.mxu0
        %v1849 = vadd.f32 %v1708, %v1848
        %v1850 = vpop.f32.mrf.mxu0
        %v1851 = vpop.f32.mrf.mxu0
        %v1852 = vadd.f32 %v1708, %v1851
        %v1853 = vpop.f32.mrf.mxu0
        %1854 = vdwg.mxu0
        %v1855 = vmul.f32 %v1793, %v1793
        %v1856 = vmul.f32 %v1796, %v1796
        %v1857 = vmul.f32 %v1801, %v1801
        %v1858 = vmul.f32 %v1804, %v1804
        %v1859 = vmul.f32 %v1809, %v1809
        %v1860 = vmul.f32 %v1812, %v1812
        %v1861 = vmul.f32 %v1817, %v1817
        %v1862 = vmul.f32 %v1820, %v1820
        %v1863 = vmul.f32 %v1825, %v1825
        %v1864 = vmul.f32 %v1828, %v1828
        %v1865 = vmul.f32 %v1833, %v1833
        %v1866 = vmul.f32 %v1836, %v1836
        %v1867 = vmul.f32 %v1841, %v1841
        %v1868 = vmul.f32 %v1844, %v1844
        %v1869 = vmul.f32 %v1849, %v1849
        %v1870 = vmul.f32 %v1852, %v1852
        %v1871 = vmul.f32 %v1793, %v1855
        %v1872 = vmul.f32 %v1796, %v1856
        %v1873 = vmul.f32 %v1801, %v1857
        %v1874 = vmul.f32 %v1804, %v1858
        %v1875 = vmul.f32 %v1809, %v1859
        %v1876 = vmul.f32 %v1812, %v1860
        %v1877 = vmul.f32 %v1817, %v1861
        %v1878 = vmul.f32 %v1820, %v1862
        %v1879 = vmul.f32 %v1825, %v1863
        %v1880 = vmul.f32 %v1828, %v1864
        %v1881 = vmul.f32 %v1833, %v1865
        %v1882 = vmul.f32 %v1836, %v1866
        %v1883 = vmul.f32 %v1841, %v1867
        %v1884 = vmul.f32 %v1844, %v1868
        %v1885 = vmul.f32 %v1849, %v1869
        %v1886 = vmul.f32 %v1852, %v1870
        %v1887 = vmul.f32 %v1871, 0.044715
        %v1888 = vmul.f32 %v1872, 0.044715
        %v1889 = vmul.f32 %v1873, 0.044715
        %v1890 = vmul.f32 %v1874, 0.044715
        %v1891 = vmul.f32 %v1875, 0.044715
        %v1892 = vmul.f32 %v1876, 0.044715
        %v1893 = vmul.f32 %v1877, 0.044715
        %v1894 = vmul.f32 %v1878, 0.044715
        %v1895 = vmul.f32 %v1879, 0.044715
        %v1896 = vmul.f32 %v1880, 0.044715
        %v1897 = vmul.f32 %v1881, 0.044715
        %v1898 = vmul.f32 %v1882, 0.044715
        %v1899 = vmul.f32 %v1883, 0.044715
        %v1900 = vmul.f32 %v1884, 0.044715
        %v1901 = vmul.f32 %v1885, 0.044715
        %v1902 = vmul.f32 %v1886, 0.044715
        %v1903 = vadd.f32 %v1793, %v1887
        %v1904 = vadd.f32 %v1796, %v1888
        %v1905 = vadd.f32 %v1801, %v1889
        %v1906 = vadd.f32 %v1804, %v1890
        %v1907 = vadd.f32 %v1809, %v1891
        %v1908 = vadd.f32 %v1812, %v1892
        %v1909 = vadd.f32 %v1817, %v1893
        %v1910 = vadd.f32 %v1820, %v1894
        %v1911 = vadd.f32 %v1825, %v1895
        %v1912 = vadd.f32 %v1828, %v1896
        %v1913 = vadd.f32 %v1833, %v1897
        %v1914 = vadd.f32 %v1836, %v1898
        %v1915 = vadd.f32 %v1841, %v1899
        %v1916 = vadd.f32 %v1844, %v1900
        %v1917 = vadd.f32 %v1849, %v1901
        %v1918 = vadd.f32 %v1852, %v1902
        %v1919 = vmul.f32 %v1903, 0.7978846
        %v1920 = vmul.f32 %v1904, 0.7978846
        %v1921 = vmul.f32 %v1905, 0.7978846
        %v1922 = vmul.f32 %v1906, 0.7978846
        %v1923 = vmul.f32 %v1907, 0.7978846
        %v1924 = vmul.f32 %v1908, 0.7978846
        %v1925 = vmul.f32 %v1909, 0.7978846
        %v1926 = vmul.f32 %v1910, 0.7978846
        %v1927 = vmul.f32 %v1911, 0.7978846
        %v1928 = vmul.f32 %v1912, 0.7978846
        %v1929 = vmul.f32 %v1913, 0.7978846
        %v1930 = vmul.f32 %v1914, 0.7978846
        %v1931 = vmul.f32 %v1915, 0.7978846
        %v1932 = vmul.f32 %v1916, 0.7978846
        %v1933 = vmul.f32 %v1917, 0.7978846
        %v1934 = vmul.f32 %v1918, 0.7978846
        %v1935 = vtanh.pop %v1919
        %v1936 = vtanh.pop %v1920
        %v1937 = vtanh.pop %v1921
        %v1938 = vtanh.pop %v1922
        %v1939 = vtanh.pop %v1923
        %v1940 = vtanh.pop %v1924
        %v1941 = vtanh.pop %v1925
        %v1942 = vtanh.pop %v1926
        %v1943 = vtanh.pop %v1927
        %v1944 = vtanh.pop %v1928
        %v1945 = vtanh.pop %v1929
        %v1946 = vtanh.pop %v1930
        %v1947 = vtanh.pop %v1931
        %v1948 = vtanh.pop %v1932
        %v1949 = vtanh.pop %v1933
        %v1950 = vtanh.pop %v1934
        %v1951 = vadd.f32 %v1935, 1.0
        %v1952 = vadd.f32 %v1936, 1.0
        %v1953 = vadd.f32 %v1937, 1.0
        %v1954 = vadd.f32 %v1938, 1.0
        %v1955 = vadd.f32 %v1939, 1.0
        %v1956 = vadd.f32 %v1940, 1.0
        %v1957 = vadd.f32 %v1941, 1.0
        %v1958 = vadd.f32 %v1942, 1.0
        %v1959 = vadd.f32 %v1943, 1.0
        %v1960 = vadd.f32 %v1944, 1.0
        %v1961 = vadd.f32 %v1945, 1.0
        %v1962 = vadd.f32 %v1946, 1.0
        %v1963 = vadd.f32 %v1947, 1.0
        %v1964 = vadd.f32 %v1948, 1.0
        %v1965 = vadd.f32 %v1949, 1.0
        %v1966 = vadd.f32 %v1950, 1.0
        %v1967 = vmul.f32 %v1951, 0.5
        %v1968 = vmul.f32 %v1952, 0.5
        %v1969 = vmul.f32 %v1953, 0.5
        %v1970 = vmul.f32 %v1954, 0.5
        %v1971 = vmul.f32 %v1955, 0.5
        %v1972 = vmul.f32 %v1956, 0.5
        %v1973 = vmul.f32 %v1957, 0.5
        %v1974 = vmul.f32 %v1958, 0.5
        %v1975 = vmul.f32 %v1959, 0.5
        %v1976 = vmul.f32 %v1960, 0.5
        %v1977 = vmul.f32 %v1961, 0.5
        %v1978 = vmul.f32 %v1962, 0.5
        %v1979 = vmul.f32 %v1963, 0.5
        %v1980 = vmul.f32 %v1964, 0.5
        %v1981 = vmul.f32 %v1965, 0.5
        %v1982 = vmul.f32 %v1966, 0.5
        %v1983 = vmul.f32 %v1793, %v1967
        %v1984 = vmul.f32 %v1796, %v1968
        %v1985 = vmul.f32 %v1801, %v1969
        %v1986 = vmul.f32 %v1804, %v1970
        %v1987 = vmul.f32 %v1809, %v1971
        %v1988 = vmul.f32 %v1812, %v1972
        %v1989 = vmul.f32 %v1817, %v1973
        %v1990 = vmul.f32 %v1820, %v1974
        %v1991 = vmul.f32 %v1825, %v1975
        %v1992 = vmul.f32 %v1828, %v1976
        %v1993 = vmul.f32 %v1833, %v1977
        %v1994 = vmul.f32 %v1836, %v1978
        %v1995 = vmul.f32 %v1841, %v1979
        %v1996 = vmul.f32 %v1844, %v1980
        %v1997 = vmul.f32 %v1849, %v1981
        %v1998 = vmul.f32 %v1852, %v1982
        %v1999 = vpack.c.bf16 %v1984, %v1983
        %v2000 = vpack.c.bf16 %v1986, %v1985
        %v2001 = vpack.c.bf16 %v1988, %v1987
        %v2002 = vpack.c.bf16 %v1990, %v1989
        %v2003 = vpack.c.bf16 %v1992, %v1991
        %v2004 = vpack.c.bf16 %v1994, %v1993
        %v2005 = vpack.c.bf16 %v1996, %v1995
        %v2006 = vpack.c.bf16 %v1998, %v1997
        %v2007 = vld [vmem:[#allocation5] sm:$0xf]
        %v2008 = vld [vmem:[#allocation5 + $0x4] sm:$0xf]
        %v2009 = vld [vmem:[#allocation5 + $0x8] sm:$0xf]
        %v2010 = vld [vmem:[#allocation5 + $0xc] sm:$0xf]
        %v2011 = vld [vmem:[#allocation5 + $0x10] sm:$0xf]
        %v2012 = vld [vmem:[#allocation5 + $0x14] sm:$0xf]
        %v2013 = vld [vmem:[#allocation5 + $0x18] sm:$0xf]
        %v2014 = vld [vmem:[#allocation5 + $0x1c] sm:$0xf]
        %v2015 = vld [vmem:[#allocation5 + $0x20] sm:$0xf]
        %v2016 = vld [vmem:[#allocation5 + $0x24] sm:$0xf]
        %v2017 = vld [vmem:[#allocation5 + $0x28] sm:$0xf]
        %v2018 = vld [vmem:[#allocation5 + $0x2c] sm:$0xf]
        %v2019 = vld [vmem:[#allocation5 + $0x30] sm:$0xf]
        %v2020 = vld [vmem:[#allocation5 + $0x34] sm:$0xf]
        %v2021 = vld [vmem:[#allocation5 + $0x38] sm:$0xf]
        %v2022 = vld [vmem:[#allocation5 + $0x3c] sm:$0xf]
        %v2023 = vld [vmem:[%s10] sm:$0x1]
        %v2025 = vlaneseq
        %v2026 = vshrl.u32 %v2025, 7
        %v2027 = vsub.s32 0, %v2026
        %v2028 = vrot.slane %v2023, %v2027
        %v2046 = vunpack.c.l.b16 %v2007
        %v2047 = vunpack.c.l.b16 %v2008
        %v2048 = vunpack.c.l.b16 %v2009
        %v2049 = vunpack.c.l.b16 %v2010
        %v2050 = vunpack.c.l.b16 %v2011
        %v2051 = vunpack.c.l.b16 %v2012
        %v2052 = vunpack.c.l.b16 %v2013
        %v2053 = vunpack.c.l.b16 %v2014
        %v2054 = vunpack.c.l.b16 %v2015
        %v2055 = vunpack.c.l.b16 %v2016
        %v2056 = vunpack.c.l.b16 %v2017
        %v2057 = vunpack.c.l.b16 %v2018
        %v2058 = vunpack.c.l.b16 %v2019
        %v2059 = vunpack.c.l.b16 %v2020
        %v2060 = vunpack.c.l.b16 %v2021
        %v2061 = vunpack.c.l.b16 %v2022
        %v2062 = vpack.c.b16 %v2047, %v2046
        %v2063 = vpack.c.b16 %v2049, %v2048
        %v2064 = vpack.c.b16 %v2051, %v2050
        %v2065 = vpack.c.b16 %v2053, %v2052
        %v2066 = vpack.c.b16 %v2055, %v2054
        %v2067 = vpack.c.b16 %v2057, %v2056
        %v2068 = vpack.c.b16 %v2059, %v2058
        %v2069 = vpack.c.b16 %v2061, %v2060
        %2078 = vmatprep.subr.bf16.mxu0 0
        %2079 = vmatpush1.bf16.msra.mxu0 %v2069
        %2080 = vmatprep.subr.bf16.mxu0 0
        %2081 = vmatpush1.bf16.msra.mxu0 %v2068
        %2082 = vmatprep.subr.bf16.mxu0 0
        %2083 = vmatpush1.bf16.msra.mxu0 %v2067
        %2084 = vmatprep.subr.bf16.mxu0 0
        %2085 = vmatpush1.bf16.msra.mxu0 %v2066
        %2086 = vmatprep.subr.bf16.mxu0 0
        %2087 = vmatpush1.bf16.msra.mxu0 %v2065
        %2088 = vmatprep.subr.bf16.mxu0 0
        %2089 = vmatpush1.bf16.msra.mxu0 %v2064
        %2090 = vmatprep.subr.bf16.mxu0 0
        %2091 = vmatpush1.bf16.msra.mxu0 %v2063
        %2092 = vmatprep.subr.bf16.mxu0 0
        %2093 = vmatpush1.bf16.msra.mxu0 %v2062
        %2094 = vmatprep.subr.bf16.mxu0 0
        %2095 = vmatpush2.bf16.msra.mxu0 0
        %2096 = vmatprep.subr.bf16.mxu0 0
        %2097 = vmatpush2.bf16.msra.mxu0 0
        %2098 = vmatprep.subr.bf16.mxu0 0
        %2099 = vmatpush2.bf16.msra.mxu0 0
        %2100 = vmatprep.subr.bf16.mxu0 0
        %2101 = vmatpush2.bf16.msra.mxu0 0
        %2102 = vmatprep.subr.bf16.mxu0 0
        %2103 = vmatpush2.bf16.msra.mxu0 0
        %2104 = vmatprep.subr.bf16.mxu0 0
        %2105 = vmatpush2.bf16.msra.mxu0 0
        %2106 = vmatprep.subr.bf16.mxu0 0
        %2107 = vmatpush2.bf16.msra.mxu0 0
        %2108 = vmatprep.subr.bf16.mxu0 0
        %2109 = vmatpush2.bf16.msra.mxu0 0
        %2110 = vmatprep.mubr.bf16.mxu0 0
        %2111 = vmatmul.mubr.bf16.gmra.mxu0 %v1999
        %v2112 = vpop.f32.mrf.mxu0
        %v2113 = vadd.f32 %v2028, %v2112
        %v2114 = vpop.f32.mrf.mxu0
        %v2115 = vpop.f32.mrf.mxu0
        %v2116 = vadd.f32 %v2028, %v2115
        %v2117 = vpop.f32.mrf.mxu0
        %2118 = vmatprep.mubr.bf16.mxu0 0
        %2119 = vmatmul.mubr.bf16.gmra.mxu0 %v2000
        %v2120 = vpop.f32.mrf.mxu0
        %v2121 = vadd.f32 %v2028, %v2120
        %v2122 = vpop.f32.mrf.mxu0
        %v2123 = vpop.f32.mrf.mxu0
        %v2124 = vadd.f32 %v2028, %v2123
        %v2125 = vpop.f32.mrf.mxu0
        %2126 = vmatprep.mubr.bf16.mxu0 0
        %2127 = vmatmul.mubr.bf16.gmra.mxu0 %v2001
        %v2128 = vpop.f32.mrf.mxu0
        %v2129 = vadd.f32 %v2028, %v2128
        %v2130 = vpop.f32.mrf.mxu0
        %v2131 = vpop.f32.mrf.mxu0
        %v2132 = vadd.f32 %v2028, %v2131
        %v2133 = vpop.f32.mrf.mxu0
        %2134 = vmatprep.mubr.bf16.mxu0 0
        %2135 = vmatmul.mubr.bf16.gmra.mxu0 %v2002
        %v2136 = vpop.f32.mrf.mxu0
        %v2137 = vadd.f32 %v2028, %v2136
        %v2138 = vpop.f32.mrf.mxu0
        %v2139 = vpop.f32.mrf.mxu0
        %v2140 = vadd.f32 %v2028, %v2139
        %v2141 = vpop.f32.mrf.mxu0
        %2142 = vmatprep.mubr.bf16.mxu0 0
        %2143 = vmatmul.mubr.bf16.gmra.mxu0 %v2003
        %v2144 = vpop.f32.mrf.mxu0
        %v2145 = vadd.f32 %v2028, %v2144
        %v2146 = vpop.f32.mrf.mxu0
        %v2147 = vpop.f32.mrf.mxu0
        %v2148 = vadd.f32 %v2028, %v2147
        %v2149 = vpop.f32.mrf.mxu0
        %2150 = vmatprep.mubr.bf16.mxu0 0
        %2151 = vmatmul.mubr.bf16.gmra.mxu0 %v2004
        %v2152 = vpop.f32.mrf.mxu0
        %v2153 = vadd.f32 %v2028, %v2152
        %v2154 = vpop.f32.mrf.mxu0
        %v2155 = vpop.f32.mrf.mxu0
        %v2156 = vadd.f32 %v2028, %v2155
        %v2157 = vpop.f32.mrf.mxu0
        %2158 = vmatprep.mubr.bf16.mxu0 0
        %2159 = vmatmul.mubr.bf16.gmra.mxu0 %v2005
        %v2160 = vpop.f32.mrf.mxu0
        %v2161 = vadd.f32 %v2028, %v2160
        %v2162 = vpop.f32.mrf.mxu0
        %v2163 = vpop.f32.mrf.mxu0
        %v2164 = vadd.f32 %v2028, %v2163
        %v2165 = vpop.f32.mrf.mxu0
        %2166 = vmatprep.mubr.bf16.mxu0 0
        %2167 = vmatmul.mubr.bf16.gmra.mxu0 %v2006
        %v2168 = vpop.f32.mrf.mxu0
        %v2169 = vadd.f32 %v2028, %v2168
        %v2170 = vpop.f32.mrf.mxu0
        %v2171 = vpop.f32.mrf.mxu0
        %v2172 = vadd.f32 %v2028, %v2171
        %v2173 = vpop.f32.mrf.mxu0
        %2174 = vdwg.mxu0
        %v2175 = vadd.f32 %v1425, %v2113
        %v2176 = vadd.f32 %v1426, %v2116
        %v2177 = vadd.f32 %v1427, %v2121
        %v2178 = vadd.f32 %v1428, %v2124
        %v2179 = vadd.f32 %v1429, %v2129
        %v2180 = vadd.f32 %v1430, %v2132
        %v2181 = vadd.f32 %v1431, %v2137
        %v2182 = vadd.f32 %v1432, %v2140
        %v2183 = vadd.f32 %v1433, %v2145
        %v2184 = vadd.f32 %v1434, %v2148
        %v2185 = vadd.f32 %v1435, %v2153
        %v2186 = vadd.f32 %v1436, %v2156
        %v2187 = vadd.f32 %v1437, %v2161
        %v2188 = vadd.f32 %v1438, %v2164
        %v2189 = vadd.f32 %v1439, %v2169
        %v2190 = vadd.f32 %v1440, %v2172
        %2191 = vst [vmem:[%s438] sm:$0xff] %v2175
        %2192 = vst [vmem:[%s438 + $0x8] sm:$0xff] %v2176
        %2193 = vst [vmem:[%s438 + $0x10] sm:$0xff] %v2177
        %2194 = vst [vmem:[%s438 + $0x18] sm:$0xff] %v2178
        %2195 = vst [vmem:[%s438 + $0x20] sm:$0xff] %v2179
        %2196 = vst [vmem:[%s438 + $0x28] sm:$0xff] %v2180
        %2197 = vst [vmem:[%s438 + $0x30] sm:$0xff] %v2181
        %2198 = vst [vmem:[%s438 + $0x38] sm:$0xff] %v2182
        %2199 = vst [vmem:[%s438 + $0x40] sm:$0xff] %v2183
        %2200 = vst [vmem:[%s438 + $0x48] sm:$0xff] %v2184
        %2201 = vst [vmem:[%s438 + $0x50] sm:$0xff] %v2185
        %2202 = vst [vmem:[%s438 + $0x58] sm:$0xff] %v2186
        %2203 = vst [vmem:[%s438 + $0x60] sm:$0xff] %v2187
        %2204 = vst [vmem:[%s438 + $0x68] sm:$0xff] %v2188
        %2205 = vst [vmem:[%s438 + $0x70] sm:$0xff] %v2189
        %2206 = vst [vmem:[%s438 + $0x78] sm:$0xff] %v2190
        %s2207 = smul.u32 16, %s29
        %p2208 = scmp.lt.s32.totalorder %s28, 1
        %s2209 = scalar_select %p2208, %s28, 1
        %p2210 = scmp.lt.s32.totalorder %s2207, 15
        %s2211 = scalar_select %p2210, %s2207, 15
        %s2212 = smul.addr %s2209, 16
        %s2213 = sadd.s32 %s2211, %s2212
        %s2214 = smul.addr %s2213, 8
        %s2215 = scalar_lea.vmem %s11, %s2214
        // Predicated region
        $region77: #{fwd.1} parent=63 // pred_check
          %p2216 = pneg %p292
        $region78: #{fwd.1} parent=63 // pred_check_branch
          %2218 = sbr.rel (%p2216) target = $region80
        $region79: #{fwd.1} parent=63 // pred_region
          %s2219 = smul.u32 16, %s29
        $region80: #{fwd.1} parent=63 // pred_fallthru
          _
      $region64: #{fwd.1} parent=5 // pred_fallthru
        _
      %p2220 = scmp.le.s32.totalorder 2, %s19
      // Predicated region
      $region81: #{fwd.1} parent=5 // pred_check
        %p2221 = pneg %p2220
      $region82: #{fwd.1} parent=5 // pred_check_branch
        %2223 = sbr.rel (%p2221) target = $region84
      $region83: #{fwd.1} parent=5 // pred_region
        %s2224 = ssub.s32 %s19, 2
        // Predicated region
        $region85: #{fwd.1} parent=83 // pred_check
          %p2225 = pneg %p298
        $region86: #{fwd.1} parent=83 // pred_check_branch
          %2227 = sbr.rel (%p2225) target = $region88
        $region87: #{fwd.1} parent=83 // pred_region
          %s2228 = smul.u32 16, %s31
          %p2229 = scmp.lt.s32.totalorder %s30, 1
          %s2230 = scalar_select %p2229, %s30, 1
          %p2231 = scmp.lt.s32.totalorder %s2228, 15
          %s2232 = scalar_select %p2231, %s2228, 15
          %s2233 = smul.addr %s2230, 16
          %s2234 = sadd.s32 %s2232, %s2233
          %s2235 = smul.addr %s2234, 8
          %s2236 = scalar_lea.vmem %s11, %s2235
        $region88: #{fwd.1} parent=83 // pred_fallthru
          _
      $region84: #{fwd.1} parent=5 // pred_fallthru
        _
    $region6: #{fwd.1} parent=1 // loop_footer
      %s23 = sadd.s32 1, %s19
    $region7: #{fwd.1} parent=1 // loop_footer_branch
      %18 = sbr.rel target = $region3
    $region8: #{fwd.1} parent=1 // loop_exit
      _
    %2237 = vsyncpa [#allocation4], 1
    %s2238 = scalar_lea.sflag [#allocation4], 1
    %2239 = vsyncpa %s2238, 1
    %2240 = vsyncpa [#allocation6], 1

</llo_original>
